<compile_context>
chip_gen: v7x
topology: tpu7x:2x2x1
jax: 0.10.0
libtpu: 0.0.40
codegen_flags: <defaults>
</compile_context>

<pallas_src>
import functools

import jax
import jax.numpy as jnp
from jax import lax
from jax.experimental import pallas as pl
from jax.experimental.pallas import tpu as pltpu


_VMEM_BUDGET = 10 * 1024 * 1024  # stay well inside v5e's 16 MiB default scoped VMEM


# --------------------------------- kernels ----------------------------------


def _fused_lightconv_kernel(x_ref, w1_ref, b1_ref, wd_ref, b2_ref, o_ref, scr_ref,
                            *, k, p):
    """Fused 1x1 conv + BN  ->  kxk depthwise conv + BN + ReLU, one image x C-tile.

    x_ref : (1, H, W, C1)        input block (channels-last)
    w1_ref: (C1, tc)             folded 1x1 weights for this channel tile
    b1_ref: (1, tc)              folded BN1 bias
    wd_ref: (k*k, tc)            folded depthwise weights
    b2_ref: (1, tc)              folded BN2 bias
    o_ref : (1, H, W, tc)        output block
    scr_ref:(H+2p, W+2p, tc) f32 VMEM scratch holding the padded intermediate
    """
    _, H, W, C1 = x_ref.shape
    _, _, _, tc = o_ref.shape

    # ---- stage 1: 1x1 conv as a single MXU matmul over all H*W pixels ----
    x = x_ref[...].reshape(H * W, C1).astype(jnp.float32)
    w1 = w1_ref[...].astype(jnp.float32)
    y = jnp.dot(x, w1, preferred_element_type=jnp.float32,
                precision=lax.Precision.HIGHEST)
    y = y + b1_ref[...].astype(jnp.float32)

    # 'same'-padding halo of the intermediate exists only in VMEM (never in HBM).
    if p > 0:
        zrow = jnp.zeros((p, W + 2 * p, tc), jnp.float32)
        zcol = jnp.zeros((H, p, tc), jnp.float32)
        scr_ref[0:p, :, :] = zrow
        scr_ref[p + H:p + H + p, :, :] = zrow
        scr_ref[p:p + H, 0:p, :] = zcol
        scr_ref[p:p + H, p + W:p + W + p, :] = zcol
    scr_ref[p:p + H, p:p + W, :] = y.reshape(H, W, tc)

    # ---- stage 2: depthwise kxk conv + BN + ReLU (static shifted taps) ----
    yp = scr_ref[...]                                     # (H+2p, W+2p, tc)
    wd = wd_ref[...].astype(jnp.float32)                  # (k*k, tc)
    acc = jnp.zeros((1, H, W, tc), jnp.float32) + b2_ref[...].astype(jnp.float32)
    for i in range(k):
        for j in range(k):
            tap = lax.slice(yp, (i, j, 0), (i + H, j + W, tc))
            acc = acc + tap * wd[i * k + j, :]            # per-channel weight broadcast
    o_ref[...] = jnp.maximum(acc, 0.0).astype(o_ref.dtype)


def _pw_bn_kernel(x_ref, w_ref, b_ref, o_ref):
    """(fallback) 1x1 conv (MXU matmul) + folded BN bias. Block: (tr, C1) -> (tr, C2)."""
    x = x_ref[...].astype(jnp.float32)
    w = w_ref[...].astype(jnp.float32)
    y = jnp.dot(x, w, preferred_element_type=jnp.float32,
                precision=lax.Precision.HIGHEST)
    o_ref[...] = (y + b_ref[...].astype(jnp.float32)).astype(o_ref.dtype)


def _dw_bn_relu_kernel(yp_ref, wd_ref, b_ref, o_ref, *, k):
    """(fallback) depthwise kxk + folded BN + ReLU on one padded image x C-tile."""
    _, H, W, C = o_ref.shape
    yp = yp_ref[...].astype(jnp.float32)                  # (1, Hp, Wp, C)
    wd = wd_ref[...].astype(jnp.float32)                  # (k*k, C)
    acc = jnp.zeros((1, H, W, C), jnp.float32) + b_ref[...].astype(jnp.float32)
    for i in range(k):
        for j in range(k):
            tap = lax.slice(yp, (0, i, j, 0), (1, i + H, j + W, C))
            acc = acc + tap * wd[i * k + j, :]
    o_ref[...] = jnp.maximum(acc, 0.0).astype(o_ref.dtype)


# ------------------------------ tiling helpers -------------------------------


def _fold_bn(gamma, beta, mean, var, eps):
    scale = gamma / jnp.sqrt(var + eps)
    return scale, beta - mean * scale


def _fused_step_bytes(H, W, p, C1, tc, k):
    """Rough per-grid-step VMEM use of the fused kernel (double-buffered I/O + scratch
    + in-kernel live values)."""
    Hp, Wp = H + 2 * p, W + 2 * p
    blocks = 2 * H * W * C1 + 2 * H * W * tc + 2 * (C1 + k * k + 2) * tc
    scratch = Hp * Wp * tc
    temps = H * W * C1 + 2 * H * W * tc + Hp * Wp * tc
    return 4 * (blocks + scratch + temps)


def _pick_channel_tile(C2, fits):
    """Largest channel tile (full C2 preferred, else a multiple of 128) that fits."""
    if fits(C2):
        return C2
    c = (min(C2, 512) // 128) * 128
    while c >= 128:
        if fits(c):
            return c
        c -= 128
    return None


# --------------------------------- wrapper ----------------------------------


def _two_stage_lightconv(x_nhwc, w1_eff, b1_2d, wd_eff, b2_2d, *, k, p):
    """Previously validated two-stage path (only used if the fused per-image blocks
    would not fit the VMEM budget, e.g. extremely large H*W)."""
    N, H, W, C1 = x_nhwc.shape
    C2 = w1_eff.shape[1]
    M = N * H * W

    x2d = x_nhwc.reshape(M, C1)
    bytes_per_row = 4 * (C1 + C2)
    cap = max(8, (2 * 1024 * 1024 // bytes_per_row) // 8 * 8)
    tr = M if M <= cap else cap

    y2d = pl.pallas_call(
        _pw_bn_kernel,
        out_shape=jax.ShapeDtypeStruct((M, C2), jnp.float32),
        grid_spec=pltpu.PrefetchScalarGridSpec(
            num_scalar_prefetch=0,
            grid=(pl.cdiv(M, tr),),
            in_specs=[pl.BlockSpec((tr, C1), lambda i: (i, 0)),
                      pl.BlockSpec((C1, C2), lambda i: (0, 0)),
                      pl.BlockSpec((1, C2), lambda i: (0, 0))],
            out_specs=pl.BlockSpec((tr, C2), lambda i: (i, 0)),
        ),
        compiler_params=pltpu.CompilerParams(dimension_semantics=("parallel",)),
        cost_estimate=pl.CostEstimate(
            flops=2 * M * C1 * C2 + M * C2, transcendentals=0,
            bytes_accessed=4 * (M * (C1 + C2) + C1 * C2 + C2)),
    )(x2d, w1_eff, b1_2d)

    y_nhwc = y2d.reshape(N, H, W, C2)
    if p > 0:
        y_nhwc = jnp.pad(y_nhwc, ((0, 0), (p, p), (p, p), (0, 0)))
    Hp, Wp = H + 2 * p, W + 2 * p

    def dw_fits(tc):
        return 4 * (3 * Hp * Wp * tc + 4 * H * W * tc + 2 * (k * k + 1) * tc) <= _VMEM_BUDGET

    # TODO(synk): spatial (row) tiling of the depthwise stage for extremely large H*W.
    tcd = _pick_channel_tile(C2, dw_fits) or min(128, C2)
    tcd = min(tcd, C2)

    return pl.pallas_call(
        functools.partial(_dw_bn_relu_kernel, k=k),
        out_shape=jax.ShapeDtypeStruct((N, H, W, C2), jnp.float32),
        grid_spec=pltpu.PrefetchScalarGridSpec(
            num_scalar_prefetch=0,
            grid=(N, pl.cdiv(C2, tcd)),
            in_specs=[pl.BlockSpec((1, Hp, Wp, tcd), lambda n, c: (n, 0, 0, c)),
                      pl.BlockSpec((k * k, tcd), lambda n, c: (0, c)),
                      pl.BlockSpec((1, tcd), lambda n, c: (0, c))],
            out_specs=pl.BlockSpec((1, H, W, tcd), lambda n, c: (n, 0, 0, c)),
        ),
        compiler_params=pltpu.CompilerParams(
            dimension_semantics=("parallel", "parallel")),
        cost_estimate=pl.CostEstimate(
            flops=N * H * W * C2 * (2 * k * k + 2), transcendentals=0,
            bytes_accessed=4 * (N * Hp * Wp * C2 + N * H * W * C2 + k * k * C2 + C2)),
    )(y_nhwc, wd_eff, b2_2d)


@functools.partial(jax.jit, static_argnames=("k",))
def light_conv(x, w1, bn1, wd, bn2, *, k):
    """LightConv forward (inference-mode BN).

    x  : (N, C1, H, W) float32  (NCHW, PyTorch layout)
    w1 : (C2, C1, 1, 1)         conv1 1x1 weight (no bias)
    wd : (C2, 1, k, k)          conv2 depthwise weight (groups=C2, no bias)
    bn1, bn2: tuples (gamma, beta, running_mean, running_var), each (C2,)
    returns (N, C2, H, W) float32
    """
    eps = 1e-5
    N, C1, H, W = x.shape
    C2 = w1.shape[0]
    p = k // 2

    # Fold BatchNorm (inference running stats) into the conv weights / biases.
    # TODO(synk): training-mode batch-statistics BatchNorm2d is not implemented.
    s1, b1 = _fold_bn(*bn1, eps)
    s2, b2 = _fold_bn(*bn2, eps)
    w1_eff = (w1.reshape(C2, C1).T * s1[None, :]).astype(jnp.float32)          # (C1, C2)
    wd_eff = (jnp.transpose(wd.reshape(C2, k, k), (1, 2, 0)) * s2)             # (k, k, C2)
    wd_eff = wd_eff.reshape(k * k, C2).astype(jnp.float32)                     # (k*k, C2)
    b1_2d = b1.reshape(1, C2).astype(jnp.float32)
    b2_2d = b2.reshape(1, C2).astype(jnp.float32)

    # Channels-last internally: C in the 128-lane axis, 1x1 conv is a plain matmul.
    x_nhwc = jnp.transpose(x, (0, 2, 3, 1))

    tc = _pick_channel_tile(
        C2, lambda c: _fused_step_bytes(H, W, p, C1, c, k) <= _VMEM_BUDGET)

    if tc is None:
        out_nhwc = _two_stage_lightconv(x_nhwc, w1_eff, b1_2d, wd_eff, b2_2d, k=k, p=p)
    else:
        nC = pl.cdiv(C2, tc)
        out_nhwc = pl.pallas_call(
            functools.partial(_fused_lightconv_kernel, k=k, p=p),
            out_shape=jax.ShapeDtypeStruct((N, H, W, C2), jnp.float32),
            grid_spec=pltpu.PrefetchScalarGridSpec(
                num_scalar_prefetch=0,
                grid=(N, nC),                      # channel axis innermost -> x block reused
                in_specs=[
                    pl.BlockSpec((1, H, W, C1), lambda n, c: (n, 0, 0, 0)),
                    pl.BlockSpec((C1, tc), lambda n, c: (0, c)),
                    pl.BlockSpec((1, tc), lambda n, c: (0, c)),
                    pl.BlockSpec((k * k, tc), lambda n, c: (0, c)),
                    pl.BlockSpec((1, tc), lambda n, c: (0, c)),
                ],
                out_specs=pl.BlockSpec((1, H, W, tc), lambda n, c: (n, 0, 0, c)),
                scratch_shapes=[pltpu.VMEM((H + 2 * p, W + 2 * p, tc), jnp.float32)],
            ),
            compiler_params=pltpu.CompilerParams(
                dimension_semantics=("parallel", "parallel")),
            cost_estimate=pl.CostEstimate(
                flops=2 * N * H * W * C1 * C2 + N * H * W * C2 * (2 * k * k + 2),
                transcendentals=0,
                bytes_accessed=4 * (N * H * W * C1 + N * H * W * C2
                                    + C1 * C2 + k * k * C2 + 2 * C2),
            ),
        )(x_nhwc, w1_eff, b1_2d, wd_eff, b2_2d)

    return jnp.transpose(out_nhwc, (0, 3, 1, 2))


# -------------------------------- reference ---------------------------------


def _lightconv_ref(x, w1, bn1, wd, bn2, k, eps=1e-5):
    g1, be1, m1, v1 = bn1
    g2, be2, m2, v2 = bn2
    y = lax.conv_general_dilated(
        x, w1, window_strides=(1, 1), padding="VALID",
        dimension_numbers=("NCHW", "OIHW", "NCHW"),
        precision=lax.Precision.HIGHEST)
    y = (y - m1[None, :, None, None]) * (g1 / jnp.sqrt(v1 + eps))[None, :, None, None] \
        + be1[None, :, None, None]
    p = k // 2
    z = lax.conv_general_dilated(
        y, wd, window_strides=(1, 1), padding=((p, p), (p, p)),
        dimension_numbers=("NCHW", "OIHW", "NCHW"),
        feature_group_count=wd.shape[0],
        precision=lax.Precision.HIGHEST)
    z = (z - m2[None, :, None, None]) * (g2 / jnp.sqrt(v2 + eps))[None, :, None, None] \
        + be2[None, :, None, None]
    return jnp.maximum(z, 0.0)


if __name__ == "__main__":
    key = jax.random.PRNGKey(0)
    N, C1, C2, H, W, k = 2, 4, 8, 16, 16, 3
    keys = jax.random.split(key, 11)

    x = jax.random.normal(keys[0], (N, C1, H, W), dtype=jnp.float32)
    w1 = jax.random.normal(keys[1], (C2, C1, 1, 1), dtype=jnp.float32) * 0.5
    wd = jax.random.normal(keys[2], (C2, 1, k, k), dtype=jnp.float32) * 0.5
    bn1 = (jax.random.uniform(keys[3], (C2,), minval=0.5, maxval=1.5),
           0.1 * jax.random.normal(keys[4], (C2,)),
           0.1 * jax.random.normal(keys[5], (C2,)),
           jax.random.uniform(keys[6], (C2,), minval=0.5, maxval=1.5))
    bn2 = (jax.random.uniform(keys[7], (C2,), minval=0.5, maxval=1.5),
           0.1 * jax.random.normal(keys[8], (C2,)),
           0.1 * jax.random.normal(keys[9], (C2,)),
           jax.random.uniform(keys[10], (C2,), minval=0.5, maxval=1.5))

    out = light_conv(x, w1, bn1, wd, bn2, k=k)
    out = jax.block_until_ready(out)

    ref = _lightconv_ref(x, w1, bn1, wd, bn2, k)
    assert out.shape == (N, C2, H, W) and out.dtype == jnp.float32
    err = float(jnp.max(jnp.abs(out - ref)))
    assert err < 1e-3, f"max abs error {err}"
    print("KERNEL_OK")
</pallas_src>

<mosaic_0001>
module attributes {stable_mosaic.version = 11 : i64} {
  func.func @_fused_lightconv_kernel(%arg0: i32, %arg1: i32, %arg2: memref<1x16x16x4xf32, #tpu.memory_space<vmem>>, %arg3: memref<4x8xf32, #tpu.memory_space<vmem>>, %arg4: memref<1x8xf32, #tpu.memory_space<vmem>>, %arg5: memref<9x8xf32, #tpu.memory_space<vmem>>, %arg6: memref<1x8xf32, #tpu.memory_space<vmem>>, %arg7: memref<1x16x16x8xf32, #tpu.memory_space<vmem>>, %arg8: memref<18x18x8xf32, #tpu.memory_space<vmem>>) attributes {dimension_semantics = [#tpu.dimension_semantics<parallel>, #tpu.dimension_semantics<parallel>], iteration_bounds = array<i64: 2, 1>, scalar_prefetch = 0 : i64, scratch_operands = 1 : i64, tpu.core_type = #tpu.core_type<tc>, window_params = [{transform_indices = @transform_0, window_bounds = array<i64: 1, 16, 16, 4>}, {transform_indices = @transform_1, window_bounds = array<i64: 4, 8>}, {transform_indices = @transform_2, window_bounds = array<i64: 1, 8>}, {transform_indices = @transform_3, window_bounds = array<i64: 9, 8>}, {transform_indices = @transform_4, window_bounds = array<i64: 1, 8>}, {transform_indices = @transform_5, window_bounds = array<i64: 1, 16, 16, 8>}]} {
    %c0 = arith.constant 0 : index
    %c0_0 = arith.constant 0 : index
    %c0_1 = arith.constant 0 : index
    %c0_2 = arith.constant 0 : index
    %0 = vector.load %arg2[%c0, %c0_0, %c0_1, %c0_2] : memref<1x16x16x4xf32, #tpu.memory_space<vmem>>, vector<1x16x16x4xf32>
    %1 = vector.shape_cast %0 : vector<1x16x16x4xf32> to vector<256x4xf32>
    %c0_3 = arith.constant 0 : index
    %c0_4 = arith.constant 0 : index
    %2 = vector.load %arg3[%c0_3, %c0_4] : memref<4x8xf32, #tpu.memory_space<vmem>>, vector<4x8xf32>
    %cst = arith.constant dense<0.000000e+00> : vector<256x8xf32>
    %3 = tpu.matmul %1, %2, %cst {dimension_numbers = #tpu.dot_dimension_numbers<[1], [0], [0], [1], [0, 0, 1, 1], [], []>, precision = #tpu.contract_precision<fp32>} : vector<256x4xf32>, vector<4x8xf32>, vector<256x8xf32> -> vector<256x8xf32>
    %c0_5 = arith.constant 0 : index
    %c0_6 = arith.constant 0 : index
    %4 = vector.load %arg4[%c0_5, %c0_6] : memref<1x8xf32, #tpu.memory_space<vmem>>, vector<1x8xf32>
    %5 = vector.broadcast %4 : vector<1x8xf32> to vector<256x8xf32>
    %6 = arith.addf %3, %5 : vector<256x8xf32>
    %cst_7 = arith.constant 0.000000e+00 : f32
    %7 = vector.broadcast %cst_7 : f32 to vector<1x18x8xf32>
    %cst_8 = arith.constant 0.000000e+00 : f32
    %8 = vector.broadcast %cst_8 : f32 to vector<16x1x8xf32>
    %c0_9 = arith.constant 0 : index
    %c0_10 = arith.constant 0 : index
    %c0_11 = arith.constant 0 : index
    %9 = vector.load %arg8[%c0_9, %c0_10, %c0_11] : memref<18x18x8xf32, #tpu.memory_space<vmem>>, vector<1x18x8xf32>
    tpu.vector_store %arg8[%c0_9, %c0_10, %c0_11], %7 {strides = array<i32>} : memref<18x18x8xf32, #tpu.memory_space<vmem>>, vector<1x18x8xf32>,
    %c17 = arith.constant 17 : index
    %c0_12 = arith.constant 0 : index
    %c0_13 = arith.constant 0 : index
    %10 = vector.load %arg8[%c17, %c0_12, %c0_13] : memref<18x18x8xf32, #tpu.memory_space<vmem>>, vector<1x18x8xf32>
    tpu.vector_store %arg8[%c17, %c0_12, %c0_13], %7 {strides = array<i32>} : memref<18x18x8xf32, #tpu.memory_space<vmem>>, vector<1x18x8xf32>,
    %c1 = arith.constant 1 : index
    %c0_14 = arith.constant 0 : index
    %c0_15 = arith.constant 0 : index
    %11 = vector.load %arg8[%c1, %c0_14, %c0_15] : memref<18x18x8xf32, #tpu.memory_space<vmem>>, vector<16x1x8xf32>
    tpu.vector_store %arg8[%c1, %c0_14, %c0_15], %8 {strides = array<i32>} : memref<18x18x8xf32, #tpu.memory_space<vmem>>, vector<16x1x8xf32>,
    %c1_16 = arith.constant 1 : index
    %c17_17 = arith.constant 17 : index
    %c0_18 = arith.constant 0 : index
    %12 = vector.load %arg8[%c1_16, %c17_17, %c0_18] : memref<18x18x8xf32, #tpu.memory_space<vmem>>, vector<16x1x8xf32>
    tpu.vector_store %arg8[%c1_16, %c17_17, %c0_18], %8 {strides = array<i32>} : memref<18x18x8xf32, #tpu.memory_space<vmem>>, vector<16x1x8xf32>,
    %13 = vector.shape_cast %6 : vector<256x8xf32> to vector<16x16x8xf32>
    %c1_19 = arith.constant 1 : index
    %c1_20 = arith.constant 1 : index
    %c0_21 = arith.constant 0 : index
    %14 = vector.load %arg8[%c1_19, %c1_20, %c0_21] : memref<18x18x8xf32, #tpu.memory_space<vmem>>, vector<16x16x8xf32>
    tpu.vector_store %arg8[%c1_19, %c1_20, %c0_21], %13 {strides = array<i32>} : memref<18x18x8xf32, #tpu.memory_space<vmem>>, vector<16x16x8xf32>,
    %c0_22 = arith.constant 0 : index
    %c0_23 = arith.constant 0 : index
    %c0_24 = arith.constant 0 : index
    %15 = vector.load %arg8[%c0_22, %c0_23, %c0_24] : memref<18x18x8xf32, #tpu.memory_space<vmem>>, vector<18x18x8xf32>
    %c0_25 = arith.constant 0 : index
    %c0_26 = arith.constant 0 : index
    %16 = vector.load %arg5[%c0_25, %c0_26] : memref<9x8xf32, #tpu.memory_space<vmem>>, vector<9x8xf32>
    %cst_27 = arith.constant 0.000000e+00 : f32
    %17 = vector.broadcast %cst_27 : f32 to vector<1x16x16x8xf32>
    %c0_28 = arith.constant 0 : index
    %c0_29 = arith.constant 0 : index
    %18 = vector.load %arg6[%c0_28, %c0_29] : memref<1x8xf32, #tpu.memory_space<vmem>>, vector<1x8xf32>
    %19 = vector.shape_cast %18 : vector<1x8xf32> to vector<1x1x1x8xf32>
    %20 = vector.broadcast %19 : vector<1x1x1x8xf32> to vector<1x16x16x8xf32>
    %21 = arith.addf %17, %20 : vector<1x16x16x8xf32>
    %22 = vector.extract_strided_slice %15 {offsets = [0, 0, 0], sizes = [16, 16, 8], strides = [1, 1, 1]} : vector<18x18x8xf32> to vector<16x16x8xf32>
    %23 = vector.extract_strided_slice %16 {offsets = [0, 0], sizes = [1, 8], strides = [1, 1]} : vector<9x8xf32> to vector<1x8xf32>
    %24 = vector.shape_cast %23 : vector<1x8xf32> to vector<8xf32>
    %25 = vector.shape_cast %24 : vector<8xf32> to vector<1x1x8xf32>
    %26 = vector.broadcast %25 : vector<1x1x8xf32> to vector<16x16x8xf32>
    %27 = arith.mulf %22, %26 : vector<16x16x8xf32>
    %28 = vector.shape_cast %27 : vector<16x16x8xf32> to vector<1x16x16x8xf32>
    %29 = arith.addf %21, %28 : vector<1x16x16x8xf32>
    %30 = vector.extract_strided_slice %15 {offsets = [0, 1, 0], sizes = [16, 16, 8], strides = [1, 1, 1]} : vector<18x18x8xf32> to vector<16x16x8xf32>
    %31 = vector.extract_strided_slice %16 {offsets = [1, 0], sizes = [1, 8], strides = [1, 1]} : vector<9x8xf32> to vector<1x8xf32>
    %32 = vector.shape_cast %31 : vector<1x8xf32> to vector<8xf32>
    %33 = vector.shape_cast %32 : vector<8xf32> to vector<1x1x8xf32>
    %34 = vector.broadcast %33 : vector<1x1x8xf32> to vector<16x16x8xf32>
    %35 = arith.mulf %30, %34 : vector<16x16x8xf32>
    %36 = vector.shape_cast %35 : vector<16x16x8xf32> to vector<1x16x16x8xf32>
    %37 = arith.addf %29, %36 : vector<1x16x16x8xf32>
    %38 = vector.extract_strided_slice %15 {offsets = [0, 2, 0], sizes = [16, 16, 8], strides = [1, 1, 1]} : vector<18x18x8xf32> to vector<16x16x8xf32>
    %39 = vector.extract_strided_slice %16 {offsets = [2, 0], sizes = [1, 8], strides = [1, 1]} : vector<9x8xf32> to vector<1x8xf32>
    %40 = vector.shape_cast %39 : vector<1x8xf32> to vector<8xf32>
    %41 = vector.shape_cast %40 : vector<8xf32> to vector<1x1x8xf32>
    %42 = vector.broadcast %41 : vector<1x1x8xf32> to vector<16x16x8xf32>
    %43 = arith.mulf %38, %42 : vector<16x16x8xf32>
    %44 = vector.shape_cast %43 : vector<16x16x8xf32> to vector<1x16x16x8xf32>
    %45 = arith.addf %37, %44 : vector<1x16x16x8xf32>
    %46 = vector.extract_strided_slice %15 {offsets = [1, 0, 0], sizes = [16, 16, 8], strides = [1, 1, 1]} : vector<18x18x8xf32> to vector<16x16x8xf32>
    %47 = vector.extract_strided_slice %16 {offsets = [3, 0], sizes = [1, 8], strides = [1, 1]} : vector<9x8xf32> to vector<1x8xf32>
    %48 = vector.shape_cast %47 : vector<1x8xf32> to vector<8xf32>
    %49 = vector.shape_cast %48 : vector<8xf32> to vector<1x1x8xf32>
    %50 = vector.broadcast %49 : vector<1x1x8xf32> to vector<16x16x8xf32>
    %51 = arith.mulf %46, %50 : vector<16x16x8xf32>
    %52 = vector.shape_cast %51 : vector<16x16x8xf32> to vector<1x16x16x8xf32>
    %53 = arith.addf %45, %52 : vector<1x16x16x8xf32>
    %54 = vector.extract_strided_slice %15 {offsets = [1, 1, 0], sizes = [16, 16, 8], strides = [1, 1, 1]} : vector<18x18x8xf32> to vector<16x16x8xf32>
    %55 = vector.extract_strided_slice %16 {offsets = [4, 0], sizes = [1, 8], strides = [1, 1]} : vector<9x8xf32> to vector<1x8xf32>
    %56 = vector.shape_cast %55 : vector<1x8xf32> to vector<8xf32>
    %57 = vector.shape_cast %56 : vector<8xf32> to vector<1x1x8xf32>
    %58 = vector.broadcast %57 : vector<1x1x8xf32> to vector<16x16x8xf32>
    %59 = arith.mulf %54, %58 : vector<16x16x8xf32>
    %60 = vector.shape_cast %59 : vector<16x16x8xf32> to vector<1x16x16x8xf32>
    %61 = arith.addf %53, %60 : vector<1x16x16x8xf32>
    %62 = vector.extract_strided_slice %15 {offsets = [1, 2, 0], sizes = [16, 16, 8], strides = [1, 1, 1]} : vector<18x18x8xf32> to vector<16x16x8xf32>
    %63 = vector.extract_strided_slice %16 {offsets = [5, 0], sizes = [1, 8], strides = [1, 1]} : vector<9x8xf32> to vector<1x8xf32>
    %64 = vector.shape_cast %63 : vector<1x8xf32> to vector<8xf32>
    %65 = vector.shape_cast %64 : vector<8xf32> to vector<1x1x8xf32>
    %66 = vector.broadcast %65 : vector<1x1x8xf32> to vector<16x16x8xf32>
    %67 = arith.mulf %62, %66 : vector<16x16x8xf32>
    %68 = vector.shape_cast %67 : vector<16x16x8xf32> to vector<1x16x16x8xf32>
    %69 = arith.addf %61, %68 : vector<1x16x16x8xf32>
    %70 = vector.extract_strided_slice %15 {offsets = [2, 0, 0], sizes = [16, 16, 8], strides = [1, 1, 1]} : vector<18x18x8xf32> to vector<16x16x8xf32>
    %71 = vector.extract_strided_slice %16 {offsets = [6, 0], sizes = [1, 8], strides = [1, 1]} : vector<9x8xf32> to vector<1x8xf32>
    %72 = vector.shape_cast %71 : vector<1x8xf32> to vector<8xf32>
    %73 = vector.shape_cast %72 : vector<8xf32> to vector<1x1x8xf32>
    %74 = vector.broadcast %73 : vector<1x1x8xf32> to vector<16x16x8xf32>
    %75 = arith.mulf %70, %74 : vector<16x16x8xf32>
    %76 = vector.shape_cast %75 : vector<16x16x8xf32> to vector<1x16x16x8xf32>
    %77 = arith.addf %69, %76 : vector<1x16x16x8xf32>
    %78 = vector.extract_strided_slice %15 {offsets = [2, 1, 0], sizes = [16, 16, 8], strides = [1, 1, 1]} : vector<18x18x8xf32> to vector<16x16x8xf32>
    %79 = vector.extract_strided_slice %16 {offsets = [7, 0], sizes = [1, 8], strides = [1, 1]} : vector<9x8xf32> to vector<1x8xf32>
    %80 = vector.shape_cast %79 : vector<1x8xf32> to vector<8xf32>
    %81 = vector.shape_cast %80 : vector<8xf32> to vector<1x1x8xf32>
    %82 = vector.broadcast %81 : vector<1x1x8xf32> to vector<16x16x8xf32>
    %83 = arith.mulf %78, %82 : vector<16x16x8xf32>
    %84 = vector.shape_cast %83 : vector<16x16x8xf32> to vector<1x16x16x8xf32>
    %85 = arith.addf %77, %84 : vector<1x16x16x8xf32>
    %86 = vector.extract_strided_slice %15 {offsets = [2, 2, 0], sizes = [16, 16, 8], strides = [1, 1, 1]} : vector<18x18x8xf32> to vector<16x16x8xf32>
    %87 = vector.extract_strided_slice %16 {offsets = [8, 0], sizes = [1, 8], strides = [1, 1]} : vector<9x8xf32> to vector<1x8xf32>
    %88 = vector.shape_cast %87 : vector<1x8xf32> to vector<8xf32>
    %89 = vector.shape_cast %88 : vector<8xf32> to vector<1x1x8xf32>
    %90 = vector.broadcast %89 : vector<1x1x8xf32> to vector<16x16x8xf32>
    %91 = arith.mulf %86, %90 : vector<16x16x8xf32>
    %92 = vector.shape_cast %91 : vector<16x16x8xf32> to vector<1x16x16x8xf32>
    %93 = arith.addf %85, %92 : vector<1x16x16x8xf32>
    %cst_30 = arith.constant 0.000000e+00 : f32
    %94 = vector.broadcast %cst_30 : f32 to vector<1x16x16x8xf32>
    %95 = arith.maximumf %93, %94 : vector<1x16x16x8xf32>
    %c0_31 = arith.constant 0 : index
    %c0_32 = arith.constant 0 : index
    %c0_33 = arith.constant 0 : index
    %c0_34 = arith.constant 0 : index
    %96 = vector.load %arg7[%c0_31, %c0_32, %c0_33, %c0_34] : memref<1x16x16x8xf32, #tpu.memory_space<vmem>>, vector<1x16x16x8xf32>
    tpu.vector_store %arg7[%c0_31, %c0_32, %c0_33, %c0_34], %95 {strides = array<i32>} : memref<1x16x16x8xf32, #tpu.memory_space<vmem>>, vector<1x16x16x8xf32>,
    return
  }
  func.func @transform_0(%arg0: i32, %arg1: i32) -> (i32, i32, i32, i32) {
    %c0_i32 = arith.constant 0 : i32
    %c0_i32_0 = arith.constant 0 : i32
    %c0_i32_1 = arith.constant 0 : i32
    %c0_i32_2 = arith.constant 0 : i32
    return %arg0, %c0_i32, %c0_i32_0, %c0_i32_1 : i32, i32, i32, i32
  }
  func.func @transform_1(%arg0: i32, %arg1: i32) -> (i32, i32) {
    %c0_i32 = arith.constant 0 : i32
    %c0_i32_0 = arith.constant 0 : i32
    return %c0_i32, %arg1 : i32, i32
  }
  func.func @transform_2(%arg0: i32, %arg1: i32) -> (i32, i32) {
    %c0_i32 = arith.constant 0 : i32
    %c0_i32_0 = arith.constant 0 : i32
    return %c0_i32, %arg1 : i32, i32
  }
  func.func @transform_3(%arg0: i32, %arg1: i32) -> (i32, i32) {
    %c0_i32 = arith.constant 0 : i32
    %c0_i32_0 = arith.constant 0 : i32
    return %c0_i32, %arg1 : i32, i32
  }
  func.func @transform_4(%arg0: i32, %arg1: i32) -> (i32, i32) {
    %c0_i32 = arith.constant 0 : i32
    %c0_i32_0 = arith.constant 0 : i32
    return %c0_i32, %arg1 : i32, i32
  }
  func.func @transform_5(%arg0: i32, %arg1: i32) -> (i32, i32, i32, i32) {
    %c0_i32 = arith.constant 0 : i32
    %c0_i32_0 = arith.constant 0 : i32
    %c0_i32_1 = arith.constant 0 : i32
    return %arg0, %c0_i32, %c0_i32_0, %arg1 : i32, i32, i32, i32
  }
}

</mosaic_0001>

<llo_original>
// kernel: light_conv.1
$region0: #{light_conv.1}
  #allocation0 [shape = 'u32[]', space=smem, size = 0x4, offset = 0x4, fixed_abs, tag = 'smem constant byte address 0x4 - core index']
  #allocation1 [shape = 'u32[144,128]{1,0:T(1,128)}', space=vmem, size = 0x12000, scoped, tag = 'internal scratch']
  #allocation2 [shape = 'f32[18,18,8]{2,1,0:T(8,128)}', space=vmem, size = 0x36000, scoped, tag = 'scratch operand']
  %s0 = inlined_call_operand.vmem [shape: f32[2,16,16,4], index: 0, kind: input, shape index: {}]
  %s1 = inlined_call_operand.vmem [shape: f32[4,8], index: 1, kind: input, shape index: {}]
  %s2 = inlined_call_operand.vmem [shape: f32[1,8], index: 2, kind: input, shape index: {}]
  %s3 = inlined_call_operand.vmem [shape: f32[9,8], index: 3, kind: input, shape index: {}]
  %s4 = inlined_call_operand.vmem [shape: f32[1,8], index: 4, kind: input, shape index: {}]
  %s5 = inlined_call_operand.vmem [shape: f32[2,16,16,8], index: 5, kind: output, shape index: {}]
  %s6 = sld [smem:[#allocation0]]
  $region53: #{light_conv.1} parent=0
    _
  %s8 = ssub.s32 1, %s6
  %s9 = scalar_select 0, %s8, %s6
  loop: start=0, step=1, limit=4
  $region2: #{light_conv.1} parent=0 // loop_pre_header
    _
  $region3: #{light_conv.1} parent=0 // loop_header
    %s11 = sphi 0, %s15
    %p12 = scmp.ge.s32.totalorder %s11, 4
    %s18 = sphi 0, %s30
    %s19 = sphi 0, %s26
    %s20 = sphi 0, %s18
    %s21 = sphi 0, %s19
    %s22 = sphi 0, %s20
    %s23 = sphi 0, %s21
    %s33 = sphi 0, %s35
    %s36 = sphi 0, %s33
    %s37 = sphi 0, %s36
    %s53 = sphi 0, %s37
    %s59 = sphi 0, %s61
    %s62 = sphi 0, %s59
    %s63 = sphi 0, %s62
    %s79 = sphi 0, %s63
    %s85 = sphi 0, %s87
    %s88 = sphi 0, %s85
    %s89 = sphi 0, %s88
    %s105 = sphi 0, %s89
    %s111 = sphi 0, %s113
    %s114 = sphi 0, %s111
    %s115 = sphi 0, %s114
    %s131 = sphi 0, %s115
    %s137 = sphi 0, %s139
    %s140 = sphi 0, %s137
    %s141 = sphi 0, %s140
    %s157 = sphi 0, %s141
    %s165 = sphi 0, %s167
    %s168 = sphi 0, %s165
    %s169 = sphi 0, %s168
    %s185 = sphi 0, %s169
  $region4: #{light_conv.1} parent=0 // loop_header_branch
    %14 = sbr.rel (%p12) target = $region8
  $region5: #{light_conv.1} parent=0 // loop_body
    %s16 = ssub.s32 %s11, 1
    %s17 = ssub.s32 %s11, 2
    %s24 = sadd.s32 1, %s19
    %p25 = scmp.ge.s32.totalorder %s24, 1
    %s26 = scalar_select %p25, 0, %s24
    %s27 = sadd.s32 1, %s18
    %s28 = scalar_select %p25, %s27, %s18
    %p29 = scmp.ge.s32.totalorder %s28, 2
    %s30 = scalar_select %p29, 0, %s28
    %s31 = ssub.s32 %s18, %s30
    %p32 = scmp.eq.s32.totalorder %s31, 0
    %s34 = sadd.s32 %s33, 1
    %s35 = scalar_select %p32, %s33, %s34
    %p38 = pneg %p32
    %p39 = scmp.eq.s32.totalorder %s11, 1
    %p40 = por %p38, %p39
    %p41 = scmp.ne.s32.totalorder %s33, %s36
    %p42 = scmp.eq.s32.totalorder %s11, 0
    %p43 = por %p41, %p42
    %p44 = scmp.ne.s32.totalorder %s33, %s36
    %p45 = scmp.eq.s32.totalorder %s16, 1
    %p46 = por %p44, %p45
    %p47 = scmp.ne.s32.totalorder %s36, %s37
    %p48 = scmp.eq.s32.totalorder %s16, 0
    %p49 = por %p47, %p48
    %p50 = scmp.ne.s32.totalorder %s36, %s37
    %p51 = scmp.eq.s32.totalorder %s17, 1
    %p52 = por %p50, %p51
    %p54 = scmp.ne.s32.totalorder %s37, %s53
    %p55 = scmp.eq.s32.totalorder %s17, 0
    %p56 = por %p54, %p55
    %s57 = ssub.s32 %s19, %s26
    %p58 = scmp.eq.s32.totalorder %s57, 0
    %s60 = sadd.s32 %s59, 1
    %s61 = scalar_select %p58, %s59, %s60
    %p64 = pneg %p58
    %p65 = scmp.eq.s32.totalorder %s11, 1
    %p66 = por %p64, %p65
    %p67 = scmp.ne.s32.totalorder %s59, %s62
    %p68 = scmp.eq.s32.totalorder %s11, 0
    %p69 = por %p67, %p68
    %p70 = scmp.ne.s32.totalorder %s59, %s62
    %p71 = scmp.eq.s32.totalorder %s16, 1
    %p72 = por %p70, %p71
    %p73 = scmp.ne.s32.totalorder %s62, %s63
    %p74 = scmp.eq.s32.totalorder %s16, 0
    %p75 = por %p73, %p74
    %p76 = scmp.ne.s32.totalorder %s62, %s63
    %p77 = scmp.eq.s32.totalorder %s17, 1
    %p78 = por %p76, %p77
    %p80 = scmp.ne.s32.totalorder %s63, %s79
    %p81 = scmp.eq.s32.totalorder %s17, 0
    %p82 = por %p80, %p81
    %s83 = ssub.s32 %s19, %s26
    %p84 = scmp.eq.s32.totalorder %s83, 0
    %s86 = sadd.s32 %s85, 1
    %s87 = scalar_select %p84, %s85, %s86
    %p90 = pneg %p84
    %p91 = scmp.eq.s32.totalorder %s11, 1
    %p92 = por %p90, %p91
    %p93 = scmp.ne.s32.totalorder %s85, %s88
    %p94 = scmp.eq.s32.totalorder %s11, 0
    %p95 = por %p93, %p94
    %p96 = scmp.ne.s32.totalorder %s85, %s88
    %p97 = scmp.eq.s32.totalorder %s16, 1
    %p98 = por %p96, %p97
    %p99 = scmp.ne.s32.totalorder %s88, %s89
    %p100 = scmp.eq.s32.totalorder %s16, 0
    %p101 = por %p99, %p100
    %p102 = scmp.ne.s32.totalorder %s88, %s89
    %p103 = scmp.eq.s32.totalorder %s17, 1
    %p104 = por %p102, %p103
    %p106 = scmp.ne.s32.totalorder %s89, %s105
    %p107 = scmp.eq.s32.totalorder %s17, 0
    %p108 = por %p106, %p107
    %s109 = ssub.s32 %s19, %s26
    %p110 = scmp.eq.s32.totalorder %s109, 0
    %s112 = sadd.s32 %s111, 1
    %s113 = scalar_select %p110, %s111, %s112
    %p116 = pneg %p110
    %p117 = scmp.eq.s32.totalorder %s11, 1
    %p118 = por %p116, %p117
    %p119 = scmp.ne.s32.totalorder %s111, %s114
    %p120 = scmp.eq.s32.totalorder %s11, 0
    %p121 = por %p119, %p120
    %p122 = scmp.ne.s32.totalorder %s111, %s114
    %p123 = scmp.eq.s32.totalorder %s16, 1
    %p124 = por %p122, %p123
    %p125 = scmp.ne.s32.totalorder %s114, %s115
    %p126 = scmp.eq.s32.totalorder %s16, 0
    %p127 = por %p125, %p126
    %p128 = scmp.ne.s32.totalorder %s114, %s115
    %p129 = scmp.eq.s32.totalorder %s17, 1
    %p130 = por %p128, %p129
    %p132 = scmp.ne.s32.totalorder %s115, %s131
    %p133 = scmp.eq.s32.totalorder %s17, 0
    %p134 = por %p132, %p133
    %s135 = ssub.s32 %s19, %s26
    %p136 = scmp.eq.s32.totalorder %s135, 0
    %s138 = sadd.s32 %s137, 1
    %s139 = scalar_select %p136, %s137, %s138
    %p142 = pneg %p136
    %p143 = scmp.eq.s32.totalorder %s11, 1
    %p144 = por %p142, %p143
    %p145 = scmp.ne.s32.totalorder %s137, %s140
    %p146 = scmp.eq.s32.totalorder %s11, 0
    %p147 = por %p145, %p146
    %p148 = scmp.ne.s32.totalorder %s137, %s140
    %p149 = scmp.eq.s32.totalorder %s16, 1
    %p150 = por %p148, %p149
    %p151 = scmp.ne.s32.totalorder %s140, %s141
    %p152 = scmp.eq.s32.totalorder %s16, 0
    %p153 = por %p151, %p152
    %p154 = scmp.ne.s32.totalorder %s140, %s141
    %p155 = scmp.eq.s32.totalorder %s17, 1
    %p156 = por %p154, %p155
    %p158 = scmp.ne.s32.totalorder %s141, %s157
    %p159 = scmp.eq.s32.totalorder %s17, 0
    %p160 = por %p158, %p159
    %s161 = ssub.s32 %s18, %s30
    %s162 = ssub.s32 %s19, %s26
    %s163 = sor.u32 %s161, %s162
    %p164 = scmp.eq.s32.totalorder %s163, 0
    %s166 = sadd.s32 %s165, 1
    %s167 = scalar_select %p164, %s165, %s166
    %p170 = pneg %p164
    %p171 = scmp.eq.s32.totalorder %s11, 1
    %p172 = por %p170, %p171
    %p173 = scmp.ne.s32.totalorder %s165, %s168
    %p174 = scmp.eq.s32.totalorder %s11, 0
    %p175 = por %p173, %p174
    %p176 = scmp.ne.s32.totalorder %s165, %s168
    %p177 = scmp.eq.s32.totalorder %s16, 1
    %p178 = por %p176, %p177
    %p179 = scmp.ne.s32.totalorder %s168, %s169
    %p180 = scmp.eq.s32.totalorder %s16, 0
    %p181 = por %p179, %p180
    %p182 = scmp.ne.s32.totalorder %s168, %s169
    %p183 = scmp.eq.s32.totalorder %s17, 1
    %p184 = por %p182, %p183
    %p186 = scmp.ne.s32.totalorder %s169, %s185
    %p187 = scmp.eq.s32.totalorder %s17, 0
    %p188 = por %p186, %p187
    %p189 = scmp.le.s32.totalorder 1, %s11
    %p190 = scmp.lt.s32.totalorder %s11, 3
    %p191 = pnand %p189, %p190
    %p192 = pneg %p191
    // Predicated region
    $region9: #{light_conv.1} parent=5 // pred_check
      _
    $region10: #{light_conv.1} parent=5 // pred_check_branch
      %194 = sbr.rel (%p191) target = $region12
    $region11: #{light_conv.1} parent=5 // pred_region
      %s195 = ssub.s32 %s11, 1
      // Predicated region
      $region13: #{light_conv.1} parent=11 // pred_check
        %p196 = pneg %p75
      $region14: #{light_conv.1} parent=11 // pred_check_branch
        %198 = sbr.rel (%p196) target = $region16
      $region15: #{light_conv.1} parent=11 // pred_region
        %p199 = scmp.lt.s32.totalorder %s21, 0
        %s200 = scalar_select %p199, %s21, 0
        %s201 = smul.addr %s200, 4
        %s202 = scalar_lea.vmem %s1, %s201
      $region16: #{light_conv.1} parent=11 // pred_fallthru
        _
      // Predicated region
      $region17: #{light_conv.1} parent=11 // pred_check
        %p203 = pneg %p101
      $region18: #{light_conv.1} parent=11 // pred_check_branch
        %205 = sbr.rel (%p203) target = $region20
      $region19: #{light_conv.1} parent=11 // pred_region
        %p206 = scmp.lt.s32.totalorder %s21, 0
        %s207 = scalar_select %p206, %s21, 0
        %s208 = scalar_lea.vmem %s2, %s207
      $region20: #{light_conv.1} parent=11 // pred_fallthru
        _
      // Predicated region
      $region21: #{light_conv.1} parent=11 // pred_check
        %p209 = pneg %p127
      $region22: #{light_conv.1} parent=11 // pred_check_branch
        %211 = sbr.rel (%p209) target = $region24
      $region23: #{light_conv.1} parent=11 // pred_region
        %p212 = scmp.lt.s32.totalorder %s21, 0
        %s213 = scalar_select %p212, %s21, 0
        %s214 = smul.addr %s213, 8
        %s215 = scalar_lea.vmem %s3, %s214
      $region24: #{light_conv.1} parent=11 // pred_fallthru
        _
      // Predicated region
      $region25: #{light_conv.1} parent=11 // pred_check
        %p216 = pneg %p153
      $region26: #{light_conv.1} parent=11 // pred_check_branch
        %218 = sbr.rel (%p216) target = $region28
      $region27: #{light_conv.1} parent=11 // pred_region
        %p219 = scmp.lt.s32.totalorder %s21, 0
        %s220 = scalar_select %p219, %s21, 0
        %s221 = scalar_lea.vmem %s4, %s220
      $region28: #{light_conv.1} parent=11 // pred_fallthru
        _
    $region12: #{light_conv.1} parent=5 // pred_fallthru
      _
    %p222 = scmp.lt.s32.totalorder %s11, 2
    // Predicated region
    $region29: #{light_conv.1} parent=5 // pred_check
      %p223 = pneg %p222
    $region30: #{light_conv.1} parent=5 // pred_check_branch
      %225 = sbr.rel (%p223) target = $region32
    $region31: #{light_conv.1} parent=5 // pred_region
      // Predicated region
      $region33: #{light_conv.1} parent=31 // pred_check
        %p226 = pneg %p43
      $region34: #{light_conv.1} parent=31 // pred_check_branch
        %228 = sbr.rel (%p226) target = $region36
      $region35: #{light_conv.1} parent=31 // pred_region
        %p229 = scmp.lt.s32.totalorder %s18, 1
        %s230 = scalar_select %p229, %s18, 1
        %s231 = smul.addr %s230, 32
        %s232 = smul.addr %s231, 8
        %s233 = scalar_lea.vmem %s0, %s232
      $region36: #{light_conv.1} parent=31 // pred_fallthru
        _
    $region32: #{light_conv.1} parent=5 // pred_fallthru
      _
    %p234 = scmp.le.s32.totalorder 1, %s11
    %p235 = scmp.lt.s32.totalorder %s11, 3
    %p236 = pnand %p234, %p235
    %p237 = pneg %p236
    // Predicated region
    $region37: #{light_conv.1} parent=5 // pred_check
      _
    $region38: #{light_conv.1} parent=5 // pred_check_branch
      %239 = sbr.rel (%p236) target = $region40
    $region39: #{light_conv.1} parent=5 // pred_region
      %s240 = ssub.s32 %s11, 1
      %p241 = scmp.lt.s32.totalorder %s20, 1
      %s242 = scalar_select %p241, %s20, 1
      %s243 = smul.addr %s242, 32
      %s244 = smul.addr %s243, 8
      %s245 = scalar_lea.vmem %s0, %s244
      %p246 = pneg %p49
      %p247 = pneg %p46
      %p248 = scmp.lt.s32.totalorder %s21, 0
      %s249 = scalar_select %p248, %s21, 0
      %s250 = smul.addr %s249, 4
      %s251 = scalar_lea.vmem %s1, %s250
      %p252 = pneg %p75
      %p253 = pneg %p72
      %p254 = scmp.lt.s32.totalorder %s21, 0
      %s255 = scalar_select %p254, %s21, 0
      %s256 = scalar_lea.vmem %s2, %s255
      %p257 = pneg %p101
      %p258 = pneg %p98
      %p259 = scmp.lt.s32.totalorder %s21, 0
      %s260 = scalar_select %p259, %s21, 0
      %s261 = smul.addr %s260, 8
      %s262 = scalar_lea.vmem %s3, %s261
      %p263 = pneg %p127
      %p264 = pneg %p124
      %p265 = scmp.lt.s32.totalorder %s21, 0
      %s266 = scalar_select %p265, %s21, 0
      %s267 = scalar_lea.vmem %s4, %s266
      %p268 = pneg %p153
      %p269 = pneg %p150
      %p270 = pneg %p181
      %p271 = pneg %p178
      %p272 = scmp.lt.s32.totalorder %s20, 1
      %s273 = scalar_select %p272, %s20, 1
      %p274 = scmp.lt.s32.totalorder %s21, 0
      %s275 = scalar_select %p274, %s21, 0
      %s276 = smul.addr %s273, 32
      %s277 = sadd.s32 %s275, %s276
      %s278 = smul.addr %s277, 8
      %s279 = scalar_lea.vmem %s5, %s278
      %p280 = scmp.lt.s32.totalorder %s20, 1
      %s281 = scalar_select %p280, %s20, 1
      %s282 = smul.addr %s281, 32
      %s283 = smul.addr %s282, 8
      %s284 = scalar_lea.vmem %s0, %s283
      %p285 = scmp.lt.s32.totalorder %s21, 0
      %s286 = scalar_select %p285, %s21, 0
      %s287 = smul.addr %s286, 4
      %s288 = scalar_lea.vmem %s1, %s287
      %p289 = scmp.lt.s32.totalorder %s21, 0
      %s290 = scalar_select %p289, %s21, 0
      %s291 = scalar_lea.vmem %s2, %s290
      %p292 = scmp.lt.s32.totalorder %s21, 0
      %s293 = scalar_select %p292, %s21, 0
      %s294 = smul.addr %s293, 8
      %s295 = scalar_lea.vmem %s3, %s294
      %p296 = scmp.lt.s32.totalorder %s21, 0
      %s297 = scalar_select %p296, %s21, 0
      %s298 = scalar_lea.vmem %s4, %s297
      %p299 = scmp.lt.s32.totalorder %s20, 1
      %s300 = scalar_select %p299, %s20, 1
      %p301 = scmp.lt.s32.totalorder %s21, 0
      %s302 = scalar_select %p301, %s21, 0
      %s303 = smul.addr %s300, 32
      %s304 = sadd.s32 %s302, %s303
      %s305 = smul.addr %s304, 8
      %s306 = scalar_lea.vmem %s5, %s305
      %v307 = vld [vmem:[%s284] sm:$0xff]
      %v308 = vld [vmem:[%s284 + $0x8] sm:$0xff]
      %v309 = vld [vmem:[%s284 + $0x10] sm:$0xff]
      %v310 = vld [vmem:[%s284 + $0x18] sm:$0xff]
      %v311 = vld [vmem:[%s284 + $0x20] sm:$0xff]
      %v312 = vld [vmem:[%s284 + $0x28] sm:$0xff]
      %v313 = vld [vmem:[%s284 + $0x30] sm:$0xff]
      %v314 = vld [vmem:[%s284 + $0x38] sm:$0xff]
      %v315 = vld [vmem:[%s284 + $0x40] sm:$0xff]
      %v316 = vld [vmem:[%s284 + $0x48] sm:$0xff]
      %v317 = vld [vmem:[%s284 + $0x50] sm:$0xff]
      %v318 = vld [vmem:[%s284 + $0x58] sm:$0xff]
      %v319 = vld [vmem:[%s284 + $0x60] sm:$0xff]
      %v320 = vld [vmem:[%s284 + $0x68] sm:$0xff]
      %v321 = vld [vmem:[%s284 + $0x70] sm:$0xff]
      %v322 = vld [vmem:[%s284 + $0x78] sm:$0xff]
      %v323 = vld [vmem:[%s284 + $0x80] sm:$0xff]
      %v324 = vld [vmem:[%s284 + $0x88] sm:$0xff]
      %v325 = vld [vmem:[%s284 + $0x90] sm:$0xff]
      %v326 = vld [vmem:[%s284 + $0x98] sm:$0xff]
      %v327 = vld [vmem:[%s284 + $0xa0] sm:$0xff]
      %v328 = vld [vmem:[%s284 + $0xa8] sm:$0xff]
      %v329 = vld [vmem:[%s284 + $0xb0] sm:$0xff]
      %v330 = vld [vmem:[%s284 + $0xb8] sm:$0xff]
      %v331 = vld [vmem:[%s284 + $0xc0] sm:$0xff]
      %v332 = vld [vmem:[%s284 + $0xc8] sm:$0xff]
      %v333 = vld [vmem:[%s284 + $0xd0] sm:$0xff]
      %v334 = vld [vmem:[%s284 + $0xd8] sm:$0xff]
      %v335 = vld [vmem:[%s284 + $0xe0] sm:$0xff]
      %v336 = vld [vmem:[%s284 + $0xe8] sm:$0xff]
      %v337 = vld [vmem:[%s284 + $0xf0] sm:$0xff]
      %v338 = vld [vmem:[%s284 + $0xf8] sm:$0xff]
      %v339 = vld [vmem:[%s288] sm:$0xf]
      %v340 = vld [vmem:[%s291] sm:$0x1]
      %v342 = vlaneseq
      %v343 = vshrl.u32 %v342, 7
      %v344 = vsub.s32 0, %v343
      %v345 = vrot.slane %v340, %v344
      %vm347 = vcmask 31744
      %v349 = vsel %vm347, %v307, 0
      %v352 = vsel %vm347, %v308, 0
      %v355 = vsel %vm347, %v309, 0
      %v358 = vsel %vm347, %v310, 0
      %v361 = vsel %vm347, %v311, 0
      %v364 = vsel %vm347, %v312, 0
      %v367 = vsel %vm347, %v313, 0
      %v370 = vsel %vm347, %v314, 0
      %v373 = vsel %vm347, %v315, 0
      %v376 = vsel %vm347, %v316, 0
      %v379 = vsel %vm347, %v317, 0
      %v382 = vsel %vm347, %v318, 0
      %v385 = vsel %vm347, %v319, 0
      %v388 = vsel %vm347, %v320, 0
      %v391 = vsel %vm347, %v321, 0
      %v394 = vsel %vm347, %v322, 0
      %v397 = vsel %vm347, %v323, 0
      %v400 = vsel %vm347, %v324, 0
      %v403 = vsel %vm347, %v325, 0
      %v406 = vsel %vm347, %v326, 0
      %v409 = vsel %vm347, %v327, 0
      %v412 = vsel %vm347, %v328, 0
      %v415 = vsel %vm347, %v329, 0
      %v418 = vsel %vm347, %v330, 0
      %v421 = vsel %vm347, %v331, 0
      %v424 = vsel %vm347, %v332, 0
      %v427 = vsel %vm347, %v333, 0
      %v430 = vsel %vm347, %v334, 0
      %v433 = vsel %vm347, %v335, 0
      %v436 = vsel %vm347, %v336, 0
      %v439 = vsel %vm347, %v337, 0
      %v442 = vsel %vm347, %v338, 0
      %vm444 = vcmask 1043456
      %v446 = vsel %vm444, %v339, 0
      %448 = vmatprep.subr.mxu0 0.0
      %v449 = vand.u32 %v446, 4294901760
      %450 = vmatpush1.msra.mxu0 %v449
      %451 = vmatprep.subr.mxu0 0.0
      %452 = vmatpush1.msra.mxu0 0.0
      %453 = vmatprep.subr.mxu0 0.0
      %454 = vmatpush1.msra.mxu0 0.0
      %455 = vmatprep.subr.mxu0 0.0
      %456 = vmatpush1.msra.mxu0 0.0
      %457 = vmatprep.subr.mxu0 0.0
      %458 = vmatpush1.msra.mxu0 0.0
      %459 = vmatprep.subr.mxu0 0.0
      %460 = vmatpush1.msra.mxu0 0.0
      %461 = vmatprep.subr.mxu0 0.0
      %462 = vmatpush1.msra.mxu0 0.0
      %463 = vmatprep.subr.mxu0 0.0
      %464 = vmatpush1.msra.mxu0 0.0
      %465 = vmatprep.subr.mxu0 0.0
      %466 = vmatpush1.msra.mxu0 0.0
      %467 = vmatprep.subr.mxu0 0.0
      %468 = vmatpush1.msra.mxu0 0.0
      %469 = vmatprep.subr.mxu0 0.0
      %470 = vmatpush1.msra.mxu0 0.0
      %471 = vmatprep.subr.mxu0 0.0
      %472 = vmatpush1.msra.mxu0 0.0
      %473 = vmatprep.subr.mxu0 0.0
      %474 = vmatpush1.msra.mxu0 0.0
      %475 = vmatprep.subr.mxu0 0.0
      %476 = vmatpush1.msra.mxu0 0.0
      %477 = vmatprep.subr.mxu0 0.0
      %478 = vmatpush1.msra.mxu0 0.0
      %479 = vmatprep.subr.mxu0 0.0
      %480 = vmatpush1.msra.mxu0 0.0
      %481 = vmatprep.subr.mxu0 0.0
      %482 = vmatpush1.msra.mxu0 0.0
      %483 = vmatprep.subr.mxu0 0.0
      %484 = vmatpush1.msra.mxu0 0.0
      %485 = vmatprep.subr.mxu0 0.0
      %486 = vmatpush1.msra.mxu0 0.0
      %487 = vmatprep.subr.mxu0 0.0
      %488 = vmatpush1.msra.mxu0 0.0
      %489 = vmatprep.subr.mxu0 0.0
      %490 = vmatpush1.msra.mxu0 0.0
      %491 = vmatprep.subr.mxu0 0.0
      %492 = vmatpush1.msra.mxu0 0.0
      %493 = vmatprep.subr.mxu0 0.0
      %494 = vmatpush1.msra.mxu0 0.0
      %495 = vmatprep.subr.mxu0 0.0
      %496 = vmatpush1.msra.mxu0 0.0
      %497 = vmatprep.subr.mxu0 0.0
      %498 = vmatpush1.msra.mxu0 0.0
      %499 = vmatprep.subr.mxu0 0.0
      %500 = vmatpush1.msra.mxu0 0.0
      %501 = vmatprep.subr.mxu0 0.0
      %502 = vmatpush1.msra.mxu0 0.0
      %503 = vmatprep.subr.mxu0 0.0
      %504 = vmatpush1.msra.mxu0 0.0
      %505 = vmatprep.subr.mxu0 0.0
      %506 = vmatpush1.msra.mxu0 0.0
      %507 = vmatprep.subr.mxu0 0.0
      %508 = vmatpush1.msra.mxu0 0.0
      %509 = vmatprep.subr.mxu0 0.0
      %510 = vmatpush1.msra.mxu0 0.0
      %511 = vmatprep.subr.mxu0 0.0
      %512 = vmatpush1.msra.mxu0 0.0
      %513 = vmatprep.mubr.f32.mxu0 0.0
      %v514 = vand.u32 %v349, 4294901760
      %v515 = vsub.f32 %v349, %v514
      %v516 = vand.u32 %v515, 4294901760
      %v517 = vsub.f32 %v515, %v516
      %v518 = vand.u32 %v517, 4294901760
      %519 = vmatmul.mubr.f32.gmra.mrb[0].mxu0 %v518
      %v520 = vpop.f32.mrb[0].mxu0
      %v521 = vadd.f32 %v345, %v520
      %v522 = vpop.f32.mrb[0].mxu0
      %523 = vmatprep.mubr.f32.mxu0 0.0
      %v524 = vand.u32 %v352, 4294901760
      %v525 = vsub.f32 %v352, %v524
      %v526 = vand.u32 %v525, 4294901760
      %v527 = vsub.f32 %v525, %v526
      %v528 = vand.u32 %v527, 4294901760
      %529 = vmatmul.mubr.f32.gmra.mrb[0].mxu0 %v528
      %v530 = vpop.f32.mrb[0].mxu0
      %v531 = vadd.f32 %v345, %v530
      %v532 = vpop.f32.mrb[0].mxu0
      %533 = vmatprep.mubr.f32.mxu0 0.0
      %v534 = vand.u32 %v355, 4294901760
      %v535 = vsub.f32 %v355, %v534
      %v536 = vand.u32 %v535, 4294901760
      %v537 = vsub.f32 %v535, %v536
      %v538 = vand.u32 %v537, 4294901760
      %539 = vmatmul.mubr.f32.gmra.mrb[0].mxu0 %v538
      %v540 = vpop.f32.mrb[0].mxu0
      %v541 = vadd.f32 %v345, %v540
      %v542 = vpop.f32.mrb[0].mxu0
      %543 = vmatprep.mubr.f32.mxu0 0.0
      %v544 = vand.u32 %v358, 4294901760
      %v545 = vsub.f32 %v358, %v544
      %v546 = vand.u32 %v545, 4294901760
      %v547 = vsub.f32 %v545, %v546
      %v548 = vand.u32 %v547, 4294901760
      %549 = vmatmul.mubr.f32.gmra.mrb[0].mxu0 %v548
      %v550 = vpop.f32.mrb[0].mxu0
      %v551 = vadd.f32 %v345, %v550
      %v552 = vpop.f32.mrb[0].mxu0
      %553 = vmatprep.mubr.f32.mxu0 0.0
      %v554 = vand.u32 %v361, 4294901760
      %v555 = vsub.f32 %v361, %v554
      %v556 = vand.u32 %v555, 4294901760
      %v557 = vsub.f32 %v555, %v556
      %v558 = vand.u32 %v557, 4294901760
      %559 = vmatmul.mubr.f32.gmra.mrb[0].mxu0 %v558
      %v560 = vpop.f32.mrb[0].mxu0
      %v561 = vadd.f32 %v345, %v560
      %v562 = vpop.f32.mrb[0].mxu0
      %563 = vmatprep.mubr.f32.mxu0 0.0
      %v564 = vand.u32 %v364, 4294901760
      %v565 = vsub.f32 %v364, %v564
      %v566 = vand.u32 %v565, 4294901760
      %v567 = vsub.f32 %v565, %v566
      %v568 = vand.u32 %v567, 4294901760
      %569 = vmatmul.mubr.f32.gmra.mrb[0].mxu0 %v568
      %v570 = vpop.f32.mrb[0].mxu0
      %v571 = vadd.f32 %v345, %v570
      %v572 = vpop.f32.mrb[0].mxu0
      %573 = vmatprep.mubr.f32.mxu0 0.0
      %v574 = vand.u32 %v367, 4294901760
      %v575 = vsub.f32 %v367, %v574
      %v576 = vand.u32 %v575, 4294901760
      %v577 = vsub.f32 %v575, %v576
      %v578 = vand.u32 %v577, 4294901760
      %579 = vmatmul.mubr.f32.gmra.mrb[0].mxu0 %v578
      %v580 = vpop.f32.mrb[0].mxu0
      %v581 = vadd.f32 %v345, %v580
      %v582 = vpop.f32.mrb[0].mxu0
      %583 = vmatprep.mubr.f32.mxu0 0.0
      %v584 = vand.u32 %v370, 4294901760
      %v585 = vsub.f32 %v370, %v584
      %v586 = vand.u32 %v585, 4294901760
      %v587 = vsub.f32 %v585, %v586
      %v588 = vand.u32 %v587, 4294901760
      %589 = vmatmul.mubr.f32.gmra.mrb[0].mxu0 %v588
      %v590 = vpop.f32.mrb[0].mxu0
      %v591 = vadd.f32 %v345, %v590
      %v592 = vpop.f32.mrb[0].mxu0
      %593 = vmatprep.mubr.f32.mxu0 0.0
      %v594 = vand.u32 %v373, 4294901760
      %v595 = vsub.f32 %v373, %v594
      %v596 = vand.u32 %v595, 4294901760
      %v597 = vsub.f32 %v595, %v596
      %v598 = vand.u32 %v597, 4294901760
      %599 = vmatmul.mubr.f32.gmra.mrb[0].mxu0 %v598
      %v600 = vpop.f32.mrb[0].mxu0
      %v601 = vadd.f32 %v345, %v600
      %v602 = vpop.f32.mrb[0].mxu0
      %603 = vmatprep.mubr.f32.mxu0 0.0
      %v604 = vand.u32 %v376, 4294901760
      %v605 = vsub.f32 %v376, %v604
      %v606 = vand.u32 %v605, 4294901760
      %v607 = vsub.f32 %v605, %v606
      %v608 = vand.u32 %v607, 4294901760
      %609 = vmatmul.mubr.f32.gmra.mrb[0].mxu0 %v608
      %v610 = vpop.f32.mrb[0].mxu0
      %v611 = vadd.f32 %v345, %v610
      %v612 = vpop.f32.mrb[0].mxu0
      %613 = vmatprep.mubr.f32.mxu0 0.0
      %v614 = vand.u32 %v379, 4294901760
      %v615 = vsub.f32 %v379, %v614
      %v616 = vand.u32 %v615, 4294901760
      %v617 = vsub.f32 %v615, %v616
      %v618 = vand.u32 %v617, 4294901760
      %619 = vmatmul.mubr.f32.gmra.mrb[0].mxu0 %v618
      %v620 = vpop.f32.mrb[0].mxu0
      %v621 = vadd.f32 %v345, %v620
      %v622 = vpop.f32.mrb[0].mxu0
      %623 = vmatprep.mubr.f32.mxu0 0.0
      %v624 = vand.u32 %v382, 4294901760
      %v625 = vsub.f32 %v382, %v624
      %v626 = vand.u32 %v625, 4294901760
      %v627 = vsub.f32 %v625, %v626
      %v628 = vand.u32 %v627, 4294901760
      %629 = vmatmul.mubr.f32.gmra.mrb[0].mxu0 %v628
      %v630 = vpop.f32.mrb[0].mxu0
      %v631 = vadd.f32 %v345, %v630
      %v632 = vpop.f32.mrb[0].mxu0
      %633 = vmatprep.mubr.f32.mxu0 0.0
      %v634 = vand.u32 %v385, 4294901760
      %v635 = vsub.f32 %v385, %v634
      %v636 = vand.u32 %v635, 4294901760
      %v637 = vsub.f32 %v635, %v636
      %v638 = vand.u32 %v637, 4294901760
      %639 = vmatmul.mubr.f32.gmra.mrb[0].mxu0 %v638
      %v640 = vpop.f32.mrb[0].mxu0
      %v641 = vadd.f32 %v345, %v640
      %v642 = vpop.f32.mrb[0].mxu0
      %643 = vmatprep.mubr.f32.mxu0 0.0
      %v644 = vand.u32 %v388, 4294901760
      %v645 = vsub.f32 %v388, %v644
      %v646 = vand.u32 %v645, 4294901760
      %v647 = vsub.f32 %v645, %v646
      %v648 = vand.u32 %v647, 4294901760
      %649 = vmatmul.mubr.f32.gmra.mrb[0].mxu0 %v648
      %v650 = vpop.f32.mrb[0].mxu0
      %v651 = vadd.f32 %v345, %v650
      %v652 = vpop.f32.mrb[0].mxu0
      %653 = vmatprep.mubr.f32.mxu0 0.0
      %v654 = vand.u32 %v391, 4294901760
      %v655 = vsub.f32 %v391, %v654
      %v656 = vand.u32 %v655, 4294901760
      %v657 = vsub.f32 %v655, %v656
      %v658 = vand.u32 %v657, 4294901760
      %659 = vmatmul.mubr.f32.gmra.mrb[0].mxu0 %v658
      %v660 = vpop.f32.mrb[0].mxu0
      %v661 = vadd.f32 %v345, %v660
      %v662 = vpop.f32.mrb[0].mxu0
      %663 = vmatprep.mubr.f32.mxu0 0.0
      %v664 = vand.u32 %v394, 4294901760
      %v665 = vsub.f32 %v394, %v664
      %v666 = vand.u32 %v665, 4294901760
      %v667 = vsub.f32 %v665, %v666
      %v668 = vand.u32 %v667, 4294901760
      %669 = vmatmul.mubr.f32.gmra.mrb[0].mxu0 %v668
      %v670 = vpop.f32.mrb[0].mxu0
      %v671 = vadd.f32 %v345, %v670
      %v672 = vpop.f32.mrb[0].mxu0
      %673 = vmatprep.mubr.f32.mxu0 0.0
      %v674 = vand.u32 %v397, 4294901760
      %v675 = vsub.f32 %v397, %v674
      %v676 = vand.u32 %v675, 4294901760
      %v677 = vsub.f32 %v675, %v676
      %v678 = vand.u32 %v677, 4294901760
      %679 = vmatmul.mubr.f32.gmra.mrb[0].mxu0 %v678
      %v680 = vpop.f32.mrb[0].mxu0
      %v681 = vadd.f32 %v345, %v680
      %v682 = vpop.f32.mrb[0].mxu0
      %683 = vmatprep.mubr.f32.mxu0 0.0
      %v684 = vand.u32 %v400, 4294901760
      %v685 = vsub.f32 %v400, %v684
      %v686 = vand.u32 %v685, 4294901760
      %v687 = vsub.f32 %v685, %v686
      %v688 = vand.u32 %v687, 4294901760
      %689 = vmatmul.mubr.f32.gmra.mrb[0].mxu0 %v688
      %v690 = vpop.f32.mrb[0].mxu0
      %v691 = vadd.f32 %v345, %v690
      %v692 = vpop.f32.mrb[0].mxu0
      %693 = vmatprep.mubr.f32.mxu0 0.0
      %v694 = vand.u32 %v403, 4294901760
      %v695 = vsub.f32 %v403, %v694
      %v696 = vand.u32 %v695, 4294901760
      %v697 = vsub.f32 %v695, %v696
      %v698 = vand.u32 %v697, 4294901760
      %699 = vmatmul.mubr.f32.gmra.mrb[0].mxu0 %v698
      %v700 = vpop.f32.mrb[0].mxu0
      %v701 = vadd.f32 %v345, %v700
      %v702 = vpop.f32.mrb[0].mxu0
      %703 = vmatprep.mubr.f32.mxu0 0.0
      %v704 = vand.u32 %v406, 4294901760
      %v705 = vsub.f32 %v406, %v704
      %v706 = vand.u32 %v705, 4294901760
      %v707 = vsub.f32 %v705, %v706
      %v708 = vand.u32 %v707, 4294901760
      %709 = vmatmul.mubr.f32.gmra.mrb[0].mxu0 %v708
      %v710 = vpop.f32.mrb[0].mxu0
      %v711 = vadd.f32 %v345, %v710
      %v712 = vpop.f32.mrb[0].mxu0
      %713 = vmatprep.mubr.f32.mxu0 0.0
      %v714 = vand.u32 %v409, 4294901760
      %v715 = vsub.f32 %v409, %v714
      %v716 = vand.u32 %v715, 4294901760
      %v717 = vsub.f32 %v715, %v716
      %v718 = vand.u32 %v717, 4294901760
      %719 = vmatmul.mubr.f32.gmra.mrb[0].mxu0 %v718
      %v720 = vpop.f32.mrb[0].mxu0
      %v721 = vadd.f32 %v345, %v720
      %v722 = vpop.f32.mrb[0].mxu0
      %723 = vmatprep.mubr.f32.mxu0 0.0
      %v724 = vand.u32 %v412, 4294901760
      %v725 = vsub.f32 %v412, %v724
      %v726 = vand.u32 %v725, 4294901760
      %v727 = vsub.f32 %v725, %v726
      %v728 = vand.u32 %v727, 4294901760
      %729 = vmatmul.mubr.f32.gmra.mrb[0].mxu0 %v728
      %v730 = vpop.f32.mrb[0].mxu0
      %v731 = vadd.f32 %v345, %v730
      %v732 = vpop.f32.mrb[0].mxu0
      %733 = vmatprep.mubr.f32.mxu0 0.0
      %v734 = vand.u32 %v415, 4294901760
      %v735 = vsub.f32 %v415, %v734
      %v736 = vand.u32 %v735, 4294901760
      %v737 = vsub.f32 %v735, %v736
      %v738 = vand.u32 %v737, 4294901760
      %739 = vmatmul.mubr.f32.gmra.mrb[0].mxu0 %v738
      %v740 = vpop.f32.mrb[0].mxu0
      %v741 = vadd.f32 %v345, %v740
      %v742 = vpop.f32.mrb[0].mxu0
      %743 = vmatprep.mubr.f32.mxu0 0.0
      %v744 = vand.u32 %v418, 4294901760
      %v745 = vsub.f32 %v418, %v744
      %v746 = vand.u32 %v745, 4294901760
      %v747 = vsub.f32 %v745, %v746
      %v748 = vand.u32 %v747, 4294901760
      %749 = vmatmul.mubr.f32.gmra.mrb[0].mxu0 %v748
      %v750 = vpop.f32.mrb[0].mxu0
      %v751 = vadd.f32 %v345, %v750
      %v752 = vpop.f32.mrb[0].mxu0
      %753 = vmatprep.mubr.f32.mxu0 0.0
      %v754 = vand.u32 %v421, 4294901760
      %v755 = vsub.f32 %v421, %v754
      %v756 = vand.u32 %v755, 4294901760
      %v757 = vsub.f32 %v755, %v756
      %v758 = vand.u32 %v757, 4294901760
      %759 = vmatmul.mubr.f32.gmra.mrb[0].mxu0 %v758
      %v760 = vpop.f32.mrb[0].mxu0
      %v761 = vadd.f32 %v345, %v760
      %v762 = vpop.f32.mrb[0].mxu0
      %763 = vmatprep.mubr.f32.mxu0 0.0
      %v764 = vand.u32 %v424, 4294901760
      %v765 = vsub.f32 %v424, %v764
      %v766 = vand.u32 %v765, 4294901760
      %v767 = vsub.f32 %v765, %v766
      %v768 = vand.u32 %v767, 4294901760
      %769 = vmatmul.mubr.f32.gmra.mrb[0].mxu0 %v768
      %v770 = vpop.f32.mrb[0].mxu0
      %v771 = vadd.f32 %v345, %v770
      %v772 = vpop.f32.mrb[0].mxu0
      %773 = vmatprep.mubr.f32.mxu0 0.0
      %v774 = vand.u32 %v427, 4294901760
      %v775 = vsub.f32 %v427, %v774
      %v776 = vand.u32 %v775, 4294901760
      %v777 = vsub.f32 %v775, %v776
      %v778 = vand.u32 %v777, 4294901760
      %779 = vmatmul.mubr.f32.gmra.mrb[0].mxu0 %v778
      %v780 = vpop.f32.mrb[0].mxu0
      %v781 = vadd.f32 %v345, %v780
      %v782 = vpop.f32.mrb[0].mxu0
      %783 = vmatprep.mubr.f32.mxu0 0.0
      %v784 = vand.u32 %v430, 4294901760
      %v785 = vsub.f32 %v430, %v784
      %v786 = vand.u32 %v785, 4294901760
      %v787 = vsub.f32 %v785, %v786
      %v788 = vand.u32 %v787, 4294901760
      %789 = vmatmul.mubr.f32.gmra.mrb[0].mxu0 %v788
      %v790 = vpop.f32.mrb[0].mxu0
      %v791 = vadd.f32 %v345, %v790
      %v792 = vpop.f32.mrb[0].mxu0
      %793 = vmatprep.mubr.f32.mxu0 0.0
      %v794 = vand.u32 %v433, 4294901760
      %v795 = vsub.f32 %v433, %v794
      %v796 = vand.u32 %v795, 4294901760
      %v797 = vsub.f32 %v795, %v796
      %v798 = vand.u32 %v797, 4294901760
      %799 = vmatmul.mubr.f32.gmra.mrb[0].mxu0 %v798
      %v800 = vpop.f32.mrb[0].mxu0
      %v801 = vadd.f32 %v345, %v800
      %v802 = vpop.f32.mrb[0].mxu0
      %803 = vmatprep.mubr.f32.mxu0 0.0
      %v804 = vand.u32 %v436, 4294901760
      %v805 = vsub.f32 %v436, %v804
      %v806 = vand.u32 %v805, 4294901760
      %v807 = vsub.f32 %v805, %v806
      %v808 = vand.u32 %v807, 4294901760
      %809 = vmatmul.mubr.f32.gmra.mrb[0].mxu0 %v808
      %v810 = vpop.f32.mrb[0].mxu0
      %v811 = vadd.f32 %v345, %v810
      %v812 = vpop.f32.mrb[0].mxu0
      %813 = vmatprep.mubr.f32.mxu0 0.0
      %v814 = vand.u32 %v439, 4294901760
      %v815 = vsub.f32 %v439, %v814
      %v816 = vand.u32 %v815, 4294901760
      %v817 = vsub.f32 %v815, %v816
      %v818 = vand.u32 %v817, 4294901760
      %819 = vmatmul.mubr.f32.gmra.mrb[0].mxu0 %v818
      %v820 = vpop.f32.mrb[0].mxu0
      %v821 = vadd.f32 %v345, %v820
      %v822 = vpop.f32.mrb[0].mxu0
      %823 = vmatprep.mubr.f32.mxu0 0.0
      %v824 = vand.u32 %v442, 4294901760
      %v825 = vsub.f32 %v442, %v824
      %v826 = vand.u32 %v825, 4294901760
      %v827 = vsub.f32 %v825, %v826
      %v828 = vand.u32 %v827, 4294901760
      %829 = vmatmul.mubr.f32.gmra.mrb[0].mxu0 %v828
      %v830 = vpop.f32.mrb[0].mxu0
      %v831 = vadd.f32 %v345, %v830
      %v832 = vpop.f32.mrb[0].mxu0
      %833 = vdwg.mxu0
      %834 = vmatprep.subr.mxu0 0.0
      %v835 = vand.u32 %v446, 4294901760
      %v836 = vsub.f32 %v446, %v835
      %v837 = vand.u32 %v836, 4294901760
      %v838 = vsub.f32 %v836, %v837
      %v839 = vand.u32 %v838, 4294901760
      %840 = vmatpush1.msra.mxu0 %v839
      %841 = vmatprep.subr.mxu0 0.0
      %842 = vmatpush1.msra.mxu0 0.0
      %843 = vmatprep.subr.mxu0 0.0
      %844 = vmatpush1.msra.mxu0 0.0
      %845 = vmatprep.subr.mxu0 0.0
      %846 = vmatpush1.msra.mxu0 0.0
      %847 = vmatprep.subr.mxu0 0.0
      %848 = vmatpush1.msra.mxu0 0.0
      %849 = vmatprep.subr.mxu0 0.0
      %850 = vmatpush1.msra.mxu0 0.0
      %851 = vmatprep.subr.mxu0 0.0
      %852 = vmatpush1.msra.mxu0 0.0
      %853 = vmatprep.subr.mxu0 0.0
      %854 = vmatpush1.msra.mxu0 0.0
      %855 = vmatprep.subr.mxu0 0.0
      %856 = vmatpush1.msra.mxu0 0.0
      %857 = vmatprep.subr.mxu0 0.0
      %858 = vmatpush1.msra.mxu0 0.0
      %859 = vmatprep.subr.mxu0 0.0
      %860 = vmatpush1.msra.mxu0 0.0
      %861 = vmatprep.subr.mxu0 0.0
      %862 = vmatpush1.msra.mxu0 0.0
      %863 = vmatprep.subr.mxu0 0.0
      %864 = vmatpush1.msra.mxu0 0.0
      %865 = vmatprep.subr.mxu0 0.0
      %866 = vmatpush1.msra.mxu0 0.0
      %867 = vmatprep.subr.mxu0 0.0
      %868 = vmatpush1.msra.mxu0 0.0
      %869 = vmatprep.subr.mxu0 0.0
      %870 = vmatpush1.msra.mxu0 0.0
      %871 = vmatprep.subr.mxu0 0.0
      %872 = vmatpush1.msra.mxu0 0.0
      %873 = vmatprep.subr.mxu0 0.0
      %874 = vmatpush1.msra.mxu0 0.0
      %875 = vmatprep.subr.mxu0 0.0
      %876 = vmatpush1.msra.mxu0 0.0
      %877 = vmatprep.subr.mxu0 0.0
      %878 = vmatpush1.msra.mxu0 0.0
      %879 = vmatprep.subr.mxu0 0.0
      %880 = vmatpush1.msra.mxu0 0.0
      %881 = vmatprep.subr.mxu0 0.0
      %882 = vmatpush1.msra.mxu0 0.0
      %883 = vmatprep.subr.mxu0 0.0
      %884 = vmatpush1.msra.mxu0 0.0
      %885 = vmatprep.subr.mxu0 0.0
      %886 = vmatpush1.msra.mxu0 0.0
      %887 = vmatprep.subr.mxu0 0.0
      %888 = vmatpush1.msra.mxu0 0.0
      %889 = vmatprep.subr.mxu0 0.0
      %890 = vmatpush1.msra.mxu0 0.0
      %891 = vmatprep.subr.mxu0 0.0
      %892 = vmatpush1.msra.mxu0 0.0
      %893 = vmatprep.subr.mxu0 0.0
      %894 = vmatpush1.msra.mxu0 0.0
      %895 = vmatprep.subr.mxu0 0.0
      %896 = vmatpush1.msra.mxu0 0.0
      %897 = vmatprep.subr.mxu0 0.0
      %898 = vmatpush1.msra.mxu0 0.0
      %899 = vmatprep.subr.mxu0 0.0
      %900 = vmatpush1.msra.mxu0 0.0
      %901 = vmatprep.subr.mxu0 0.0
      %902 = vmatpush1.msra.mxu0 0.0
      %903 = vmatprep.mubr.f32.mxu0 0.0
      %v904 = vand.u32 %v349, 4294901760
      %905 = vmatmul.mubr.f32.gmra.mrb[0].mxu0 %v904
      %v906 = vpop.f32.mrb[0].mxu0
      %v907 = vadd.f32 %v521, %v906
      %v908 = vpop.f32.mrb[0].mxu0
      %909 = vmatprep.mubr.f32.mxu0 0.0
      %v910 = vand.u32 %v352, 4294901760
      %911 = vmatmul.mubr.f32.gmra.mrb[0].mxu0 %v910
      %v912 = vpop.f32.mrb[0].mxu0
      %v913 = vadd.f32 %v531, %v912
      %v914 = vpop.f32.mrb[0].mxu0
      %915 = vmatprep.mubr.f32.mxu0 0.0
      %v916 = vand.u32 %v355, 4294901760
      %917 = vmatmul.mubr.f32.gmra.mrb[0].mxu0 %v916
      %v918 = vpop.f32.mrb[0].mxu0
      %v919 = vadd.f32 %v541, %v918
      %v920 = vpop.f32.mrb[0].mxu0
      %921 = vmatprep.mubr.f32.mxu0 0.0
      %v922 = vand.u32 %v358, 4294901760
      %923 = vmatmul.mubr.f32.gmra.mrb[0].mxu0 %v922
      %v924 = vpop.f32.mrb[0].mxu0
      %v925 = vadd.f32 %v551, %v924
      %v926 = vpop.f32.mrb[0].mxu0
      %927 = vmatprep.mubr.f32.mxu0 0.0
      %v928 = vand.u32 %v361, 4294901760
      %929 = vmatmul.mubr.f32.gmra.mrb[0].mxu0 %v928
      %v930 = vpop.f32.mrb[0].mxu0
      %v931 = vadd.f32 %v561, %v930
      %v932 = vpop.f32.mrb[0].mxu0
      %933 = vmatprep.mubr.f32.mxu0 0.0
      %v934 = vand.u32 %v364, 4294901760
      %935 = vmatmul.mubr.f32.gmra.mrb[0].mxu0 %v934
      %v936 = vpop.f32.mrb[0].mxu0
      %v937 = vadd.f32 %v571, %v936
      %v938 = vpop.f32.mrb[0].mxu0
      %939 = vmatprep.mubr.f32.mxu0 0.0
      %v940 = vand.u32 %v367, 4294901760
      %941 = vmatmul.mubr.f32.gmra.mrb[0].mxu0 %v940
      %v942 = vpop.f32.mrb[0].mxu0
      %v943 = vadd.f32 %v581, %v942
      %v944 = vpop.f32.mrb[0].mxu0
      %945 = vmatprep.mubr.f32.mxu0 0.0
      %v946 = vand.u32 %v370, 4294901760
      %947 = vmatmul.mubr.f32.gmra.mrb[0].mxu0 %v946
      %v948 = vpop.f32.mrb[0].mxu0
      %v949 = vadd.f32 %v591, %v948
      %v950 = vpop.f32.mrb[0].mxu0
      %951 = vmatprep.mubr.f32.mxu0 0.0
      %v952 = vand.u32 %v373, 4294901760
      %953 = vmatmul.mubr.f32.gmra.mrb[0].mxu0 %v952
      %v954 = vpop.f32.mrb[0].mxu0
      %v955 = vadd.f32 %v601, %v954
      %v956 = vpop.f32.mrb[0].mxu0
      %957 = vmatprep.mubr.f32.mxu0 0.0
      %v958 = vand.u32 %v376, 4294901760
      %959 = vmatmul.mubr.f32.gmra.mrb[0].mxu0 %v958
      %v960 = vpop.f32.mrb[0].mxu0
      %v961 = vadd.f32 %v611, %v960
      %v962 = vpop.f32.mrb[0].mxu0
      %963 = vmatprep.mubr.f32.mxu0 0.0
      %v964 = vand.u32 %v379, 4294901760
      %965 = vmatmul.mubr.f32.gmra.mrb[0].mxu0 %v964
      %v966 = vpop.f32.mrb[0].mxu0
      %v967 = vadd.f32 %v621, %v966
      %v968 = vpop.f32.mrb[0].mxu0
      %969 = vmatprep.mubr.f32.mxu0 0.0
      %v970 = vand.u32 %v382, 4294901760
      %971 = vmatmul.mubr.f32.gmra.mrb[0].mxu0 %v970
      %v972 = vpop.f32.mrb[0].mxu0
      %v973 = vadd.f32 %v631, %v972
      %v974 = vpop.f32.mrb[0].mxu0
      %975 = vmatprep.mubr.f32.mxu0 0.0
      %v976 = vand.u32 %v385, 4294901760
      %977 = vmatmul.mubr.f32.gmra.mrb[0].mxu0 %v976
      %v978 = vpop.f32.mrb[0].mxu0
      %v979 = vadd.f32 %v641, %v978
      %v980 = vpop.f32.mrb[0].mxu0
      %981 = vmatprep.mubr.f32.mxu0 0.0
      %v982 = vand.u32 %v388, 4294901760
      %983 = vmatmul.mubr.f32.gmra.mrb[0].mxu0 %v982
      %v984 = vpop.f32.mrb[0].mxu0
      %v985 = vadd.f32 %v651, %v984
      %v986 = vpop.f32.mrb[0].mxu0
      %987 = vmatprep.mubr.f32.mxu0 0.0
      %v988 = vand.u32 %v391, 4294901760
      %989 = vmatmul.mubr.f32.gmra.mrb[0].mxu0 %v988
      %v990 = vpop.f32.mrb[0].mxu0
      %v991 = vadd.f32 %v661, %v990
      %v992 = vpop.f32.mrb[0].mxu0
      %993 = vmatprep.mubr.f32.mxu0 0.0
      %v994 = vand.u32 %v394, 4294901760
      %995 = vmatmul.mubr.f32.gmra.mrb[0].mxu0 %v994
      %v996 = vpop.f32.mrb[0].mxu0
      %v997 = vadd.f32 %v671, %v996
      %v998 = vpop.f32.mrb[0].mxu0
      %999 = vmatprep.mubr.f32.mxu0 0.0
      %v1000 = vand.u32 %v397, 4294901760
      %1001 = vmatmul.mubr.f32.gmra.mrb[0].mxu0 %v1000
      %v1002 = vpop.f32.mrb[0].mxu0
      %v1003 = vadd.f32 %v681, %v1002
      %v1004 = vpop.f32.mrb[0].mxu0
      %1005 = vmatprep.mubr.f32.mxu0 0.0
      %v1006 = vand.u32 %v400, 4294901760
      %1007 = vmatmul.mubr.f32.gmra.mrb[0].mxu0 %v1006
      %v1008 = vpop.f32.mrb[0].mxu0
      %v1009 = vadd.f32 %v691, %v1008
      %v1010 = vpop.f32.mrb[0].mxu0
      %1011 = vmatprep.mubr.f32.mxu0 0.0
      %v1012 = vand.u32 %v403, 4294901760
      %1013 = vmatmul.mubr.f32.gmra.mrb[0].mxu0 %v1012
      %v1014 = vpop.f32.mrb[0].mxu0
      %v1015 = vadd.f32 %v701, %v1014
      %v1016 = vpop.f32.mrb[0].mxu0
      %1017 = vmatprep.mubr.f32.mxu0 0.0
      %v1018 = vand.u32 %v406, 4294901760
      %1019 = vmatmul.mubr.f32.gmra.mrb[0].mxu0 %v1018
      %v1020 = vpop.f32.mrb[0].mxu0
      %v1021 = vadd.f32 %v711, %v1020
      %v1022 = vpop.f32.mrb[0].mxu0
      %1023 = vmatprep.mubr.f32.mxu0 0.0
      %v1024 = vand.u32 %v409, 4294901760
      %1025 = vmatmul.mubr.f32.gmra.mrb[0].mxu0 %v1024
      %v1026 = vpop.f32.mrb[0].mxu0
      %v1027 = vadd.f32 %v721, %v1026
      %v1028 = vpop.f32.mrb[0].mxu0
      %1029 = vmatprep.mubr.f32.mxu0 0.0
      %v1030 = vand.u32 %v412, 4294901760
      %1031 = vmatmul.mubr.f32.gmra.mrb[0].mxu0 %v1030
      %v1032 = vpop.f32.mrb[0].mxu0
      %v1033 = vadd.f32 %v731, %v1032
      %v1034 = vpop.f32.mrb[0].mxu0
      %1035 = vmatprep.mubr.f32.mxu0 0.0
      %v1036 = vand.u32 %v415, 4294901760
      %1037 = vmatmul.mubr.f32.gmra.mrb[0].mxu0 %v1036
      %v1038 = vpop.f32.mrb[0].mxu0
      %v1039 = vadd.f32 %v741, %v1038
      %v1040 = vpop.f32.mrb[0].mxu0
      %1041 = vmatprep.mubr.f32.mxu0 0.0
      %v1042 = vand.u32 %v418, 4294901760
      %1043 = vmatmul.mubr.f32.gmra.mrb[0].mxu0 %v1042
      %v1044 = vpop.f32.mrb[0].mxu0
      %v1045 = vadd.f32 %v751, %v1044
      %v1046 = vpop.f32.mrb[0].mxu0
      %1047 = vmatprep.mubr.f32.mxu0 0.0
      %v1048 = vand.u32 %v421, 4294901760
      %1049 = vmatmul.mubr.f32.gmra.mrb[0].mxu0 %v1048
      %v1050 = vpop.f32.mrb[0].mxu0
      %v1051 = vadd.f32 %v761, %v1050
      %v1052 = vpop.f32.mrb[0].mxu0
      %1053 = vmatprep.mubr.f32.mxu0 0.0
      %v1054 = vand.u32 %v424, 4294901760
      %1055 = vmatmul.mubr.f32.gmra.mrb[0].mxu0 %v1054
      %v1056 = vpop.f32.mrb[0].mxu0
      %v1057 = vadd.f32 %v771, %v1056
      %v1058 = vpop.f32.mrb[0].mxu0
      %1059 = vmatprep.mubr.f32.mxu0 0.0
      %v1060 = vand.u32 %v427, 4294901760
      %1061 = vmatmul.mubr.f32.gmra.mrb[0].mxu0 %v1060
      %v1062 = vpop.f32.mrb[0].mxu0
      %v1063 = vadd.f32 %v781, %v1062
      %v1064 = vpop.f32.mrb[0].mxu0
      %1065 = vmatprep.mubr.f32.mxu0 0.0
      %v1066 = vand.u32 %v430, 4294901760
      %1067 = vmatmul.mubr.f32.gmra.mrb[0].mxu0 %v1066
      %v1068 = vpop.f32.mrb[0].mxu0
      %v1069 = vadd.f32 %v791, %v1068
      %v1070 = vpop.f32.mrb[0].mxu0
      %1071 = vmatprep.mubr.f32.mxu0 0.0
      %v1072 = vand.u32 %v433, 4294901760
      %1073 = vmatmul.mubr.f32.gmra.mrb[0].mxu0 %v1072
      %v1074 = vpop.f32.mrb[0].mxu0
      %v1075 = vadd.f32 %v801, %v1074
      %v1076 = vpop.f32.mrb[0].mxu0
      %1077 = vmatprep.mubr.f32.mxu0 0.0
      %v1078 = vand.u32 %v436, 4294901760
      %1079 = vmatmul.mubr.f32.gmra.mrb[0].mxu0 %v1078
      %v1080 = vpop.f32.mrb[0].mxu0
      %v1081 = vadd.f32 %v811, %v1080
      %v1082 = vpop.f32.mrb[0].mxu0
      %1083 = vmatprep.mubr.f32.mxu0 0.0
      %v1084 = vand.u32 %v439, 4294901760
      %1085 = vmatmul.mubr.f32.gmra.mrb[0].mxu0 %v1084
      %v1086 = vpop.f32.mrb[0].mxu0
      %v1087 = vadd.f32 %v821, %v1086
      %v1088 = vpop.f32.mrb[0].mxu0
      %1089 = vmatprep.mubr.f32.mxu0 0.0
      %v1090 = vand.u32 %v442, 4294901760
      %1091 = vmatmul.mubr.f32.gmra.mrb[0].mxu0 %v1090
      %v1092 = vpop.f32.mrb[0].mxu0
      %v1093 = vadd.f32 %v831, %v1092
      %v1094 = vpop.f32.mrb[0].mxu0
      %1095 = vdwg.mxu0
      %1096 = vmatprep.subr.mxu0 0.0
      %v1097 = vand.u32 %v446, 4294901760
      %v1098 = vsub.f32 %v446, %v1097
      %1099 = vmatpush1.msra.mxu0 %v1098
      %1100 = vmatprep.subr.mxu0 0.0
      %1101 = vmatpush1.msra.mxu0 0.0
      %1102 = vmatprep.subr.mxu0 0.0
      %1103 = vmatpush1.msra.mxu0 0.0
      %1104 = vmatprep.subr.mxu0 0.0
      %1105 = vmatpush1.msra.mxu0 0.0
      %1106 = vmatprep.subr.mxu0 0.0
      %1107 = vmatpush1.msra.mxu0 0.0
      %1108 = vmatprep.subr.mxu0 0.0
      %1109 = vmatpush1.msra.mxu0 0.0
      %1110 = vmatprep.subr.mxu0 0.0
      %1111 = vmatpush1.msra.mxu0 0.0
      %1112 = vmatprep.subr.mxu0 0.0
      %1113 = vmatpush1.msra.mxu0 0.0
      %1114 = vmatprep.subr.mxu0 0.0
      %1115 = vmatpush1.msra.mxu0 0.0
      %1116 = vmatprep.subr.mxu0 0.0
      %1117 = vmatpush1.msra.mxu0 0.0
      %1118 = vmatprep.subr.mxu0 0.0
      %1119 = vmatpush1.msra.mxu0 0.0
      %1120 = vmatprep.subr.mxu0 0.0
      %1121 = vmatpush1.msra.mxu0 0.0
      %1122 = vmatprep.subr.mxu0 0.0
      %1123 = vmatpush1.msra.mxu0 0.0
      %1124 = vmatprep.subr.mxu0 0.0
      %1125 = vmatpush1.msra.mxu0 0.0
      %1126 = vmatprep.subr.mxu0 0.0
      %1127 = vmatpush1.msra.mxu0 0.0
      %1128 = vmatprep.subr.mxu0 0.0
      %1129 = vmatpush1.msra.mxu0 0.0
      %1130 = vmatprep.subr.mxu0 0.0
      %1131 = vmatpush1.msra.mxu0 0.0
      %1132 = vmatprep.subr.mxu0 0.0
      %1133 = vmatpush1.msra.mxu0 0.0
      %1134 = vmatprep.subr.mxu0 0.0
      %1135 = vmatpush1.msra.mxu0 0.0
      %1136 = vmatprep.subr.mxu0 0.0
      %1137 = vmatpush1.msra.mxu0 0.0
      %1138 = vmatprep.subr.mxu0 0.0
      %1139 = vmatpush1.msra.mxu0 0.0
      %1140 = vmatprep.subr.mxu0 0.0
      %1141 = vmatpush1.msra.mxu0 0.0
      %1142 = vmatprep.subr.mxu0 0.0
      %1143 = vmatpush1.msra.mxu0 0.0
      %1144 = vmatprep.subr.mxu0 0.0
      %1145 = vmatpush1.msra.mxu0 0.0
      %1146 = vmatprep.subr.mxu0 0.0
      %1147 = vmatpush1.msra.mxu0 0.0
      %1148 = vmatprep.subr.mxu0 0.0
      %1149 = vmatpush1.msra.mxu0 0.0
      %1150 = vmatprep.subr.mxu0 0.0
      %1151 = vmatpush1.msra.mxu0 0.0
      %1152 = vmatprep.subr.mxu0 0.0
      %1153 = vmatpush1.msra.mxu0 0.0
      %1154 = vmatprep.subr.mxu0 0.0
      %1155 = vmatpush1.msra.mxu0 0.0
      %1156 = vmatprep.subr.mxu0 0.0
      %1157 = vmatpush1.msra.mxu0 0.0
      %1158 = vmatprep.subr.mxu0 0.0
      %1159 = vmatpush1.msra.mxu0 0.0
      %1160 = vmatprep.subr.mxu0 0.0
      %1161 = vmatpush1.msra.mxu0 0.0
      %1162 = vmatprep.mubr.f32.mxu0 0.0
      %v1163 = vand.u32 %v349, 4294901760
      %v1164 = vsub.f32 %v349, %v1163
      %1165 = vmatmul.mubr.f32.gmra.mrb[0].mxu0 %v1164
      %v1166 = vpop.f32.mrb[0].mxu0
      %v1167 = vadd.f32 %v907, %v1166
      %v1168 = vpop.f32.mrb[0].mxu0
      %1169 = vmatprep.mubr.f32.mxu0 0.0
      %v1170 = vand.u32 %v352, 4294901760
      %v1171 = vsub.f32 %v352, %v1170
      %1172 = vmatmul.mubr.f32.gmra.mrb[0].mxu0 %v1171
      %v1173 = vpop.f32.mrb[0].mxu0
      %v1174 = vadd.f32 %v913, %v1173
      %v1175 = vpop.f32.mrb[0].mxu0
      %1176 = vmatprep.mubr.f32.mxu0 0.0
      %v1177 = vand.u32 %v355, 4294901760
      %v1178 = vsub.f32 %v355, %v1177
      %1179 = vmatmul.mubr.f32.gmra.mrb[0].mxu0 %v1178
      %v1180 = vpop.f32.mrb[0].mxu0
      %v1181 = vadd.f32 %v919, %v1180
      %v1182 = vpop.f32.mrb[0].mxu0
      %1183 = vmatprep.mubr.f32.mxu0 0.0
      %v1184 = vand.u32 %v358, 4294901760
      %v1185 = vsub.f32 %v358, %v1184
      %1186 = vmatmul.mubr.f32.gmra.mrb[0].mxu0 %v1185
      %v1187 = vpop.f32.mrb[0].mxu0
      %v1188 = vadd.f32 %v925, %v1187
      %v1189 = vpop.f32.mrb[0].mxu0
      %1190 = vmatprep.mubr.f32.mxu0 0.0
      %v1191 = vand.u32 %v361, 4294901760
      %v1192 = vsub.f32 %v361, %v1191
      %1193 = vmatmul.mubr.f32.gmra.mrb[0].mxu0 %v1192
      %v1194 = vpop.f32.mrb[0].mxu0
      %v1195 = vadd.f32 %v931, %v1194
      %v1196 = vpop.f32.mrb[0].mxu0
      %1197 = vmatprep.mubr.f32.mxu0 0.0
      %v1198 = vand.u32 %v364, 4294901760
      %v1199 = vsub.f32 %v364, %v1198
      %1200 = vmatmul.mubr.f32.gmra.mrb[0].mxu0 %v1199
      %v1201 = vpop.f32.mrb[0].mxu0
      %v1202 = vadd.f32 %v937, %v1201
      %v1203 = vpop.f32.mrb[0].mxu0
      %1204 = vmatprep.mubr.f32.mxu0 0.0
      %v1205 = vand.u32 %v367, 4294901760
      %v1206 = vsub.f32 %v367, %v1205
      %1207 = vmatmul.mubr.f32.gmra.mrb[0].mxu0 %v1206
      %v1208 = vpop.f32.mrb[0].mxu0
      %v1209 = vadd.f32 %v943, %v1208
      %v1210 = vpop.f32.mrb[0].mxu0
      %1211 = vmatprep.mubr.f32.mxu0 0.0
      %v1212 = vand.u32 %v370, 4294901760
      %v1213 = vsub.f32 %v370, %v1212
      %1214 = vmatmul.mubr.f32.gmra.mrb[0].mxu0 %v1213
      %v1215 = vpop.f32.mrb[0].mxu0
      %v1216 = vadd.f32 %v949, %v1215
      %v1217 = vpop.f32.mrb[0].mxu0
      %1218 = vmatprep.mubr.f32.mxu0 0.0
      %v1219 = vand.u32 %v373, 4294901760
      %v1220 = vsub.f32 %v373, %v1219
      %1221 = vmatmul.mubr.f32.gmra.mrb[0].mxu0 %v1220
      %v1222 = vpop.f32.mrb[0].mxu0
      %v1223 = vadd.f32 %v955, %v1222
      %v1224 = vpop.f32.mrb[0].mxu0
      %1225 = vmatprep.mubr.f32.mxu0 0.0
      %v1226 = vand.u32 %v376, 4294901760
      %v1227 = vsub.f32 %v376, %v1226
      %1228 = vmatmul.mubr.f32.gmra.mrb[0].mxu0 %v1227
      %v1229 = vpop.f32.mrb[0].mxu0
      %v1230 = vadd.f32 %v961, %v1229
      %v1231 = vpop.f32.mrb[0].mxu0
      %1232 = vmatprep.mubr.f32.mxu0 0.0
      %v1233 = vand.u32 %v379, 4294901760
      %v1234 = vsub.f32 %v379, %v1233
      %1235 = vmatmul.mubr.f32.gmra.mrb[0].mxu0 %v1234
      %v1236 = vpop.f32.mrb[0].mxu0
      %v1237 = vadd.f32 %v967, %v1236
      %v1238 = vpop.f32.mrb[0].mxu0
      %1239 = vmatprep.mubr.f32.mxu0 0.0
      %v1240 = vand.u32 %v382, 4294901760
      %v1241 = vsub.f32 %v382, %v1240
      %1242 = vmatmul.mubr.f32.gmra.mrb[0].mxu0 %v1241
      %v1243 = vpop.f32.mrb[0].mxu0
      %v1244 = vadd.f32 %v973, %v1243
      %v1245 = vpop.f32.mrb[0].mxu0
      %1246 = vmatprep.mubr.f32.mxu0 0.0
      %v1247 = vand.u32 %v385, 4294901760
      %v1248 = vsub.f32 %v385, %v1247
      %1249 = vmatmul.mubr.f32.gmra.mrb[0].mxu0 %v1248
      %v1250 = vpop.f32.mrb[0].mxu0
      %v1251 = vadd.f32 %v979, %v1250
      %v1252 = vpop.f32.mrb[0].mxu0
      %1253 = vmatprep.mubr.f32.mxu0 0.0
      %v1254 = vand.u32 %v388, 4294901760
      %v1255 = vsub.f32 %v388, %v1254
      %1256 = vmatmul.mubr.f32.gmra.mrb[0].mxu0 %v1255
      %v1257 = vpop.f32.mrb[0].mxu0
      %v1258 = vadd.f32 %v985, %v1257
      %v1259 = vpop.f32.mrb[0].mxu0
      %1260 = vmatprep.mubr.f32.mxu0 0.0
      %v1261 = vand.u32 %v391, 4294901760
      %v1262 = vsub.f32 %v391, %v1261
      %1263 = vmatmul.mubr.f32.gmra.mrb[0].mxu0 %v1262
      %v1264 = vpop.f32.mrb[0].mxu0
      %v1265 = vadd.f32 %v991, %v1264
      %v1266 = vpop.f32.mrb[0].mxu0
      %1267 = vmatprep.mubr.f32.mxu0 0.0
      %v1268 = vand.u32 %v394, 4294901760
      %v1269 = vsub.f32 %v394, %v1268
      %1270 = vmatmul.mubr.f32.gmra.mrb[0].mxu0 %v1269
      %v1271 = vpop.f32.mrb[0].mxu0
      %v1272 = vadd.f32 %v997, %v1271
      %v1273 = vpop.f32.mrb[0].mxu0
      %1274 = vmatprep.mubr.f32.mxu0 0.0
      %v1275 = vand.u32 %v397, 4294901760
      %v1276 = vsub.f32 %v397, %v1275
      %1277 = vmatmul.mubr.f32.gmra.mrb[0].mxu0 %v1276
      %v1278 = vpop.f32.mrb[0].mxu0
      %v1279 = vadd.f32 %v1003, %v1278
      %v1280 = vpop.f32.mrb[0].mxu0
      %1281 = vmatprep.mubr.f32.mxu0 0.0
      %v1282 = vand.u32 %v400, 4294901760
      %v1283 = vsub.f32 %v400, %v1282
      %1284 = vmatmul.mubr.f32.gmra.mrb[0].mxu0 %v1283
      %v1285 = vpop.f32.mrb[0].mxu0
      %v1286 = vadd.f32 %v1009, %v1285
      %v1287 = vpop.f32.mrb[0].mxu0
      %1288 = vmatprep.mubr.f32.mxu0 0.0
      %v1289 = vand.u32 %v403, 4294901760
      %v1290 = vsub.f32 %v403, %v1289
      %1291 = vmatmul.mubr.f32.gmra.mrb[0].mxu0 %v1290
      %v1292 = vpop.f32.mrb[0].mxu0
      %v1293 = vadd.f32 %v1015, %v1292
      %v1294 = vpop.f32.mrb[0].mxu0
      %1295 = vmatprep.mubr.f32.mxu0 0.0
      %v1296 = vand.u32 %v406, 4294901760
      %v1297 = vsub.f32 %v406, %v1296
      %1298 = vmatmul.mubr.f32.gmra.mrb[0].mxu0 %v1297
      %v1299 = vpop.f32.mrb[0].mxu0
      %v1300 = vadd.f32 %v1021, %v1299
      %v1301 = vpop.f32.mrb[0].mxu0
      %1302 = vmatprep.mubr.f32.mxu0 0.0
      %v1303 = vand.u32 %v409, 4294901760
      %v1304 = vsub.f32 %v409, %v1303
      %1305 = vmatmul.mubr.f32.gmra.mrb[0].mxu0 %v1304
      %v1306 = vpop.f32.mrb[0].mxu0
      %v1307 = vadd.f32 %v1027, %v1306
      %v1308 = vpop.f32.mrb[0].mxu0
      %1309 = vmatprep.mubr.f32.mxu0 0.0
      %v1310 = vand.u32 %v412, 4294901760
      %v1311 = vsub.f32 %v412, %v1310
      %1312 = vmatmul.mubr.f32.gmra.mrb[0].mxu0 %v1311
      %v1313 = vpop.f32.mrb[0].mxu0
      %v1314 = vadd.f32 %v1033, %v1313
      %v1315 = vpop.f32.mrb[0].mxu0
      %1316 = vmatprep.mubr.f32.mxu0 0.0
      %v1317 = vand.u32 %v415, 4294901760
      %v1318 = vsub.f32 %v415, %v1317
      %1319 = vmatmul.mubr.f32.gmra.mrb[0].mxu0 %v1318
      %v1320 = vpop.f32.mrb[0].mxu0
      %v1321 = vadd.f32 %v1039, %v1320
      %v1322 = vpop.f32.mrb[0].mxu0
      %1323 = vmatprep.mubr.f32.mxu0 0.0
      %v1324 = vand.u32 %v418, 4294901760
      %v1325 = vsub.f32 %v418, %v1324
      %1326 = vmatmul.mubr.f32.gmra.mrb[0].mxu0 %v1325
      %v1327 = vpop.f32.mrb[0].mxu0
      %v1328 = vadd.f32 %v1045, %v1327
      %v1329 = vpop.f32.mrb[0].mxu0
      %1330 = vmatprep.mubr.f32.mxu0 0.0
      %v1331 = vand.u32 %v421, 4294901760
      %v1332 = vsub.f32 %v421, %v1331
      %1333 = vmatmul.mubr.f32.gmra.mrb[0].mxu0 %v1332
      %v1334 = vpop.f32.mrb[0].mxu0
      %v1335 = vadd.f32 %v1051, %v1334
      %v1336 = vpop.f32.mrb[0].mxu0
      %1337 = vmatprep.mubr.f32.mxu0 0.0
      %v1338 = vand.u32 %v424, 4294901760
      %v1339 = vsub.f32 %v424, %v1338
      %1340 = vmatmul.mubr.f32.gmra.mrb[0].mxu0 %v1339
      %v1341 = vpop.f32.mrb[0].mxu0
      %v1342 = vadd.f32 %v1057, %v1341
      %v1343 = vpop.f32.mrb[0].mxu0
      %1344 = vmatprep.mubr.f32.mxu0 0.0
      %v1345 = vand.u32 %v427, 4294901760
      %v1346 = vsub.f32 %v427, %v1345
      %1347 = vmatmul.mubr.f32.gmra.mrb[0].mxu0 %v1346
      %v1348 = vpop.f32.mrb[0].mxu0
      %v1349 = vadd.f32 %v1063, %v1348
      %v1350 = vpop.f32.mrb[0].mxu0
      %1351 = vmatprep.mubr.f32.mxu0 0.0
      %v1352 = vand.u32 %v430, 4294901760
      %v1353 = vsub.f32 %v430, %v1352
      %1354 = vmatmul.mubr.f32.gmra.mrb[0].mxu0 %v1353
      %v1355 = vpop.f32.mrb[0].mxu0
      %v1356 = vadd.f32 %v1069, %v1355
      %v1357 = vpop.f32.mrb[0].mxu0
      %1358 = vmatprep.mubr.f32.mxu0 0.0
      %v1359 = vand.u32 %v433, 4294901760
      %v1360 = vsub.f32 %v433, %v1359
      %1361 = vmatmul.mubr.f32.gmra.mrb[0].mxu0 %v1360
      %v1362 = vpop.f32.mrb[0].mxu0
      %v1363 = vadd.f32 %v1075, %v1362
      %v1364 = vpop.f32.mrb[0].mxu0
      %1365 = vmatprep.mubr.f32.mxu0 0.0
      %v1366 = vand.u32 %v436, 4294901760
      %v1367 = vsub.f32 %v436, %v1366
      %1368 = vmatmul.mubr.f32.gmra.mrb[0].mxu0 %v1367
      %v1369 = vpop.f32.mrb[0].mxu0
      %v1370 = vadd.f32 %v1081, %v1369
      %v1371 = vpop.f32.mrb[0].mxu0
      %1372 = vmatprep.mubr.f32.mxu0 0.0
      %v1373 = vand.u32 %v439, 4294901760
      %v1374 = vsub.f32 %v439, %v1373
      %1375 = vmatmul.mubr.f32.gmra.mrb[0].mxu0 %v1374
      %v1376 = vpop.f32.mrb[0].mxu0
      %v1377 = vadd.f32 %v1087, %v1376
      %v1378 = vpop.f32.mrb[0].mxu0
      %1379 = vmatprep.mubr.f32.mxu0 0.0
      %v1380 = vand.u32 %v442, 4294901760
      %v1381 = vsub.f32 %v442, %v1380
      %1382 = vmatmul.mubr.f32.gmra.mrb[0].mxu0 %v1381
      %v1383 = vpop.f32.mrb[0].mxu0
      %v1384 = vadd.f32 %v1093, %v1383
      %v1385 = vpop.f32.mrb[0].mxu0
      %1386 = vdwg.mxu0
      %1387 = vmatprep.subr.mxu0 0.0
      %v1388 = vand.u32 %v446, 4294901760
      %1389 = vmatpush1.msra.mxu0 %v1388
      %1390 = vmatprep.subr.mxu0 0.0
      %1391 = vmatpush1.msra.mxu0 0.0
      %1392 = vmatprep.subr.mxu0 0.0
      %1393 = vmatpush1.msra.mxu0 0.0
      %1394 = vmatprep.subr.mxu0 0.0
      %1395 = vmatpush1.msra.mxu0 0.0
      %1396 = vmatprep.subr.mxu0 0.0
      %1397 = vmatpush1.msra.mxu0 0.0
      %1398 = vmatprep.subr.mxu0 0.0
      %1399 = vmatpush1.msra.mxu0 0.0
      %1400 = vmatprep.subr.mxu0 0.0
      %1401 = vmatpush1.msra.mxu0 0.0
      %1402 = vmatprep.subr.mxu0 0.0
      %1403 = vmatpush1.msra.mxu0 0.0
      %1404 = vmatprep.subr.mxu0 0.0
      %1405 = vmatpush1.msra.mxu0 0.0
      %1406 = vmatprep.subr.mxu0 0.0
      %1407 = vmatpush1.msra.mxu0 0.0
      %1408 = vmatprep.subr.mxu0 0.0
      %1409 = vmatpush1.msra.mxu0 0.0
      %1410 = vmatprep.subr.mxu0 0.0
      %1411 = vmatpush1.msra.mxu0 0.0
      %1412 = vmatprep.subr.mxu0 0.0
      %1413 = vmatpush1.msra.mxu0 0.0
      %1414 = vmatprep.subr.mxu0 0.0
      %1415 = vmatpush1.msra.mxu0 0.0
      %1416 = vmatprep.subr.mxu0 0.0
      %1417 = vmatpush1.msra.mxu0 0.0
      %1418 = vmatprep.subr.mxu0 0.0
      %1419 = vmatpush1.msra.mxu0 0.0
      %1420 = vmatprep.subr.mxu0 0.0
      %1421 = vmatpush1.msra.mxu0 0.0
      %1422 = vmatprep.subr.mxu0 0.0
      %1423 = vmatpush1.msra.mxu0 0.0
      %1424 = vmatprep.subr.mxu0 0.0
      %1425 = vmatpush1.msra.mxu0 0.0
      %1426 = vmatprep.subr.mxu0 0.0
      %1427 = vmatpush1.msra.mxu0 0.0
      %1428 = vmatprep.subr.mxu0 0.0
      %1429 = vmatpush1.msra.mxu0 0.0
      %1430 = vmatprep.subr.mxu0 0.0
      %1431 = vmatpush1.msra.mxu0 0.0
      %1432 = vmatprep.subr.mxu0 0.0
      %1433 = vmatpush1.msra.mxu0 0.0
      %1434 = vmatprep.subr.mxu0 0.0
      %1435 = vmatpush1.msra.mxu0 0.0
      %1436 = vmatprep.subr.mxu0 0.0
      %1437 = vmatpush1.msra.mxu0 0.0
      %1438 = vmatprep.subr.mxu0 0.0
      %1439 = vmatpush1.msra.mxu0 0.0
      %1440 = vmatprep.subr.mxu0 0.0
      %1441 = vmatpush1.msra.mxu0 0.0
      %1442 = vmatprep.subr.mxu0 0.0
      %1443 = vmatpush1.msra.mxu0 0.0
      %1444 = vmatprep.subr.mxu0 0.0
      %1445 = vmatpush1.msra.mxu0 0.0
      %1446 = vmatprep.subr.mxu0 0.0
      %1447 = vmatpush1.msra.mxu0 0.0
      %1448 = vmatprep.subr.mxu0 0.0
      %1449 = vmatpush1.msra.mxu0 0.0
      %1450 = vmatprep.subr.mxu0 0.0
      %1451 = vmatpush1.msra.mxu0 0.0
      %1452 = vmatprep.mubr.f32.mxu0 0.0
      %v1453 = vand.u32 %v349, 4294901760
      %v1454 = vsub.f32 %v349, %v1453
      %v1455 = vand.u32 %v1454, 4294901760
      %1456 = vmatmul.mubr.f32.gmra.mrb[0].mxu0 %v1455
      %v1457 = vpop.f32.mrb[0].mxu0
      %v1458 = vadd.f32 %v1167, %v1457
      %v1459 = vpop.f32.mrb[0].mxu0
      %1460 = vmatprep.mubr.f32.mxu0 0.0
      %v1461 = vand.u32 %v352, 4294901760
      %v1462 = vsub.f32 %v352, %v1461
      %v1463 = vand.u32 %v1462, 4294901760
      %1464 = vmatmul.mubr.f32.gmra.mrb[0].mxu0 %v1463
      %v1465 = vpop.f32.mrb[0].mxu0
      %v1466 = vadd.f32 %v1174, %v1465
      %v1467 = vpop.f32.mrb[0].mxu0
      %1468 = vmatprep.mubr.f32.mxu0 0.0
      %v1469 = vand.u32 %v355, 4294901760
      %v1470 = vsub.f32 %v355, %v1469
      %v1471 = vand.u32 %v1470, 4294901760
      %1472 = vmatmul.mubr.f32.gmra.mrb[0].mxu0 %v1471
      %v1473 = vpop.f32.mrb[0].mxu0
      %v1474 = vadd.f32 %v1181, %v1473
      %v1475 = vpop.f32.mrb[0].mxu0
      %1476 = vmatprep.mubr.f32.mxu0 0.0
      %v1477 = vand.u32 %v358, 4294901760
      %v1478 = vsub.f32 %v358, %v1477
      %v1479 = vand.u32 %v1478, 4294901760
      %1480 = vmatmul.mubr.f32.gmra.mrb[0].mxu0 %v1479
      %v1481 = vpop.f32.mrb[0].mxu0
      %v1482 = vadd.f32 %v1188, %v1481
      %v1483 = vpop.f32.mrb[0].mxu0
      %1484 = vmatprep.mubr.f32.mxu0 0.0
      %v1485 = vand.u32 %v361, 4294901760
      %v1486 = vsub.f32 %v361, %v1485
      %v1487 = vand.u32 %v1486, 4294901760
      %1488 = vmatmul.mubr.f32.gmra.mrb[0].mxu0 %v1487
      %v1489 = vpop.f32.mrb[0].mxu0
      %v1490 = vadd.f32 %v1195, %v1489
      %v1491 = vpop.f32.mrb[0].mxu0
      %1492 = vmatprep.mubr.f32.mxu0 0.0
      %v1493 = vand.u32 %v364, 4294901760
      %v1494 = vsub.f32 %v364, %v1493
      %v1495 = vand.u32 %v1494, 4294901760
      %1496 = vmatmul.mubr.f32.gmra.mrb[0].mxu0 %v1495
      %v1497 = vpop.f32.mrb[0].mxu0
      %v1498 = vadd.f32 %v1202, %v1497
      %v1499 = vpop.f32.mrb[0].mxu0
      %1500 = vmatprep.mubr.f32.mxu0 0.0
      %v1501 = vand.u32 %v367, 4294901760
      %v1502 = vsub.f32 %v367, %v1501
      %v1503 = vand.u32 %v1502, 4294901760
      %1504 = vmatmul.mubr.f32.gmra.mrb[0].mxu0 %v1503
      %v1505 = vpop.f32.mrb[0].mxu0
      %v1506 = vadd.f32 %v1209, %v1505
      %v1507 = vpop.f32.mrb[0].mxu0
      %1508 = vmatprep.mubr.f32.mxu0 0.0
      %v1509 = vand.u32 %v370, 4294901760
      %v1510 = vsub.f32 %v370, %v1509
      %v1511 = vand.u32 %v1510, 4294901760
      %1512 = vmatmul.mubr.f32.gmra.mrb[0].mxu0 %v1511
      %v1513 = vpop.f32.mrb[0].mxu0
      %v1514 = vadd.f32 %v1216, %v1513
      %v1515 = vpop.f32.mrb[0].mxu0
      %1516 = vmatprep.mubr.f32.mxu0 0.0
      %v1517 = vand.u32 %v373, 4294901760
      %v1518 = vsub.f32 %v373, %v1517
      %v1519 = vand.u32 %v1518, 4294901760
      %1520 = vmatmul.mubr.f32.gmra.mrb[0].mxu0 %v1519
      %v1521 = vpop.f32.mrb[0].mxu0
      %v1522 = vadd.f32 %v1223, %v1521
      %v1523 = vpop.f32.mrb[0].mxu0
      %1524 = vmatprep.mubr.f32.mxu0 0.0
      %v1525 = vand.u32 %v376, 4294901760
      %v1526 = vsub.f32 %v376, %v1525
      %v1527 = vand.u32 %v1526, 4294901760
      %1528 = vmatmul.mubr.f32.gmra.mrb[0].mxu0 %v1527
      %v1529 = vpop.f32.mrb[0].mxu0
      %v1530 = vadd.f32 %v1230, %v1529
      %v1531 = vpop.f32.mrb[0].mxu0
      %1532 = vmatprep.mubr.f32.mxu0 0.0
      %v1533 = vand.u32 %v379, 4294901760
      %v1534 = vsub.f32 %v379, %v1533
      %v1535 = vand.u32 %v1534, 4294901760
      %1536 = vmatmul.mubr.f32.gmra.mrb[0].mxu0 %v1535
      %v1537 = vpop.f32.mrb[0].mxu0
      %v1538 = vadd.f32 %v1237, %v1537
      %v1539 = vpop.f32.mrb[0].mxu0
      %1540 = vmatprep.mubr.f32.mxu0 0.0
      %v1541 = vand.u32 %v382, 4294901760
      %v1542 = vsub.f32 %v382, %v1541
      %v1543 = vand.u32 %v1542, 4294901760
      %1544 = vmatmul.mubr.f32.gmra.mrb[0].mxu0 %v1543
      %v1545 = vpop.f32.mrb[0].mxu0
      %v1546 = vadd.f32 %v1244, %v1545
      %v1547 = vpop.f32.mrb[0].mxu0
      %1548 = vmatprep.mubr.f32.mxu0 0.0
      %v1549 = vand.u32 %v385, 4294901760
      %v1550 = vsub.f32 %v385, %v1549
      %v1551 = vand.u32 %v1550, 4294901760
      %1552 = vmatmul.mubr.f32.gmra.mrb[0].mxu0 %v1551
      %v1553 = vpop.f32.mrb[0].mxu0
      %v1554 = vadd.f32 %v1251, %v1553
      %v1555 = vpop.f32.mrb[0].mxu0
      %1556 = vmatprep.mubr.f32.mxu0 0.0
      %v1557 = vand.u32 %v388, 4294901760
      %v1558 = vsub.f32 %v388, %v1557
      %v1559 = vand.u32 %v1558, 4294901760
      %1560 = vmatmul.mubr.f32.gmra.mrb[0].mxu0 %v1559
      %v1561 = vpop.f32.mrb[0].mxu0
      %v1562 = vadd.f32 %v1258, %v1561
      %v1563 = vpop.f32.mrb[0].mxu0
      %1564 = vmatprep.mubr.f32.mxu0 0.0
      %v1565 = vand.u32 %v391, 4294901760
      %v1566 = vsub.f32 %v391, %v1565
      %v1567 = vand.u32 %v1566, 4294901760
      %1568 = vmatmul.mubr.f32.gmra.mrb[0].mxu0 %v1567
      %v1569 = vpop.f32.mrb[0].mxu0
      %v1570 = vadd.f32 %v1265, %v1569
      %v1571 = vpop.f32.mrb[0].mxu0
      %1572 = vmatprep.mubr.f32.mxu0 0.0
      %v1573 = vand.u32 %v394, 4294901760
      %v1574 = vsub.f32 %v394, %v1573
      %v1575 = vand.u32 %v1574, 4294901760
      %1576 = vmatmul.mubr.f32.gmra.mrb[0].mxu0 %v1575
      %v1577 = vpop.f32.mrb[0].mxu0
      %v1578 = vadd.f32 %v1272, %v1577
      %v1579 = vpop.f32.mrb[0].mxu0
      %1580 = vmatprep.mubr.f32.mxu0 0.0
      %v1581 = vand.u32 %v397, 4294901760
      %v1582 = vsub.f32 %v397, %v1581
      %v1583 = vand.u32 %v1582, 4294901760
      %1584 = vmatmul.mubr.f32.gmra.mrb[0].mxu0 %v1583
      %v1585 = vpop.f32.mrb[0].mxu0
      %v1586 = vadd.f32 %v1279, %v1585
      %v1587 = vpop.f32.mrb[0].mxu0
      %1588 = vmatprep.mubr.f32.mxu0 0.0
      %v1589 = vand.u32 %v400, 4294901760
      %v1590 = vsub.f32 %v400, %v1589
      %v1591 = vand.u32 %v1590, 4294901760
      %1592 = vmatmul.mubr.f32.gmra.mrb[0].mxu0 %v1591
      %v1593 = vpop.f32.mrb[0].mxu0
      %v1594 = vadd.f32 %v1286, %v1593
      %v1595 = vpop.f32.mrb[0].mxu0
      %1596 = vmatprep.mubr.f32.mxu0 0.0
      %v1597 = vand.u32 %v403, 4294901760
      %v1598 = vsub.f32 %v403, %v1597
      %v1599 = vand.u32 %v1598, 4294901760
      %1600 = vmatmul.mubr.f32.gmra.mrb[0].mxu0 %v1599
      %v1601 = vpop.f32.mrb[0].mxu0
      %v1602 = vadd.f32 %v1293, %v1601
      %v1603 = vpop.f32.mrb[0].mxu0
      %1604 = vmatprep.mubr.f32.mxu0 0.0
      %v1605 = vand.u32 %v406, 4294901760
      %v1606 = vsub.f32 %v406, %v1605
      %v1607 = vand.u32 %v1606, 4294901760
      %1608 = vmatmul.mubr.f32.gmra.mrb[0].mxu0 %v1607
      %v1609 = vpop.f32.mrb[0].mxu0
      %v1610 = vadd.f32 %v1300, %v1609
      %v1611 = vpop.f32.mrb[0].mxu0
      %1612 = vmatprep.mubr.f32.mxu0 0.0
      %v1613 = vand.u32 %v409, 4294901760
      %v1614 = vsub.f32 %v409, %v1613
      %v1615 = vand.u32 %v1614, 4294901760
      %1616 = vmatmul.mubr.f32.gmra.mrb[0].mxu0 %v1615
      %v1617 = vpop.f32.mrb[0].mxu0
      %v1618 = vadd.f32 %v1307, %v1617
      %v1619 = vpop.f32.mrb[0].mxu0
      %1620 = vmatprep.mubr.f32.mxu0 0.0
      %v1621 = vand.u32 %v412, 4294901760
      %v1622 = vsub.f32 %v412, %v1621
      %v1623 = vand.u32 %v1622, 4294901760
      %1624 = vmatmul.mubr.f32.gmra.mrb[0].mxu0 %v1623
      %v1625 = vpop.f32.mrb[0].mxu0
      %v1626 = vadd.f32 %v1314, %v1625
      %v1627 = vpop.f32.mrb[0].mxu0
      %1628 = vmatprep.mubr.f32.mxu0 0.0
      %v1629 = vand.u32 %v415, 4294901760
      %v1630 = vsub.f32 %v415, %v1629
      %v1631 = vand.u32 %v1630, 4294901760
      %1632 = vmatmul.mubr.f32.gmra.mrb[0].mxu0 %v1631
      %v1633 = vpop.f32.mrb[0].mxu0
      %v1634 = vadd.f32 %v1321, %v1633
      %v1635 = vpop.f32.mrb[0].mxu0
      %1636 = vmatprep.mubr.f32.mxu0 0.0
      %v1637 = vand.u32 %v418, 4294901760
      %v1638 = vsub.f32 %v418, %v1637
      %v1639 = vand.u32 %v1638, 4294901760
      %1640 = vmatmul.mubr.f32.gmra.mrb[0].mxu0 %v1639
      %v1641 = vpop.f32.mrb[0].mxu0
      %v1642 = vadd.f32 %v1328, %v1641
      %v1643 = vpop.f32.mrb[0].mxu0
      %1644 = vmatprep.mubr.f32.mxu0 0.0
      %v1645 = vand.u32 %v421, 4294901760
      %v1646 = vsub.f32 %v421, %v1645
      %v1647 = vand.u32 %v1646, 4294901760
      %1648 = vmatmul.mubr.f32.gmra.mrb[0].mxu0 %v1647
      %v1649 = vpop.f32.mrb[0].mxu0
      %v1650 = vadd.f32 %v1335, %v1649
      %v1651 = vpop.f32.mrb[0].mxu0
      %1652 = vmatprep.mubr.f32.mxu0 0.0
      %v1653 = vand.u32 %v424, 4294901760
      %v1654 = vsub.f32 %v424, %v1653
      %v1655 = vand.u32 %v1654, 4294901760
      %1656 = vmatmul.mubr.f32.gmra.mrb[0].mxu0 %v1655
      %v1657 = vpop.f32.mrb[0].mxu0
      %v1658 = vadd.f32 %v1342, %v1657
      %v1659 = vpop.f32.mrb[0].mxu0
      %1660 = vmatprep.mubr.f32.mxu0 0.0
      %v1661 = vand.u32 %v427, 4294901760
      %v1662 = vsub.f32 %v427, %v1661
      %v1663 = vand.u32 %v1662, 4294901760
      %1664 = vmatmul.mubr.f32.gmra.mrb[0].mxu0 %v1663
      %v1665 = vpop.f32.mrb[0].mxu0
      %v1666 = vadd.f32 %v1349, %v1665
      %v1667 = vpop.f32.mrb[0].mxu0
      %1668 = vmatprep.mubr.f32.mxu0 0.0
      %v1669 = vand.u32 %v430, 4294901760
      %v1670 = vsub.f32 %v430, %v1669
      %v1671 = vand.u32 %v1670, 4294901760
      %1672 = vmatmul.mubr.f32.gmra.mrb[0].mxu0 %v1671
      %v1673 = vpop.f32.mrb[0].mxu0
      %v1674 = vadd.f32 %v1356, %v1673
      %v1675 = vpop.f32.mrb[0].mxu0
      %1676 = vmatprep.mubr.f32.mxu0 0.0
      %v1677 = vand.u32 %v433, 4294901760
      %v1678 = vsub.f32 %v433, %v1677
      %v1679 = vand.u32 %v1678, 4294901760
      %1680 = vmatmul.mubr.f32.gmra.mrb[0].mxu0 %v1679
      %v1681 = vpop.f32.mrb[0].mxu0
      %v1682 = vadd.f32 %v1363, %v1681
      %v1683 = vpop.f32.mrb[0].mxu0
      %1684 = vmatprep.mubr.f32.mxu0 0.0
      %v1685 = vand.u32 %v436, 4294901760
      %v1686 = vsub.f32 %v436, %v1685
      %v1687 = vand.u32 %v1686, 4294901760
      %1688 = vmatmul.mubr.f32.gmra.mrb[0].mxu0 %v1687
      %v1689 = vpop.f32.mrb[0].mxu0
      %v1690 = vadd.f32 %v1370, %v1689
      %v1691 = vpop.f32.mrb[0].mxu0
      %1692 = vmatprep.mubr.f32.mxu0 0.0
      %v1693 = vand.u32 %v439, 4294901760
      %v1694 = vsub.f32 %v439, %v1693
      %v1695 = vand.u32 %v1694, 4294901760
      %1696 = vmatmul.mubr.f32.gmra.mrb[0].mxu0 %v1695
      %v1697 = vpop.f32.mrb[0].mxu0
      %v1698 = vadd.f32 %v1377, %v1697
      %v1699 = vpop.f32.mrb[0].mxu0
      %1700 = vmatprep.mubr.f32.mxu0 0.0
      %v1701 = vand.u32 %v442, 4294901760
      %v1702 = vsub.f32 %v442, %v1701
      %v1703 = vand.u32 %v1702, 4294901760
      %1704 = vmatmul.mubr.f32.gmra.mrb[0].mxu0 %v1703
      %v1705 = vpop.f32.mrb[0].mxu0
      %v1706 = vadd.f32 %v1384, %v1705
      %v1707 = vpop.f32.mrb[0].mxu0
      %1708 = vdwg.mxu0
      %1709 = vmatprep.subr.mxu0 0.0
      %v1710 = vand.u32 %v446, 4294901760
      %v1711 = vsub.f32 %v446, %v1710
      %v1712 = vand.u32 %v1711, 4294901760
      %1713 = vmatpush1.msra.mxu0 %v1712
      %1714 = vmatprep.subr.mxu0 0.0
      %1715 = vmatpush1.msra.mxu0 0.0
      %1716 = vmatprep.subr.mxu0 0.0
      %1717 = vmatpush1.msra.mxu0 0.0
      %1718 = vmatprep.subr.mxu0 0.0
      %1719 = vmatpush1.msra.mxu0 0.0
      %1720 = vmatprep.subr.mxu0 0.0
      %1721 = vmatpush1.msra.mxu0 0.0
      %1722 = vmatprep.subr.mxu0 0.0
      %1723 = vmatpush1.msra.mxu0 0.0
      %1724 = vmatprep.subr.mxu0 0.0
      %1725 = vmatpush1.msra.mxu0 0.0
      %1726 = vmatprep.subr.mxu0 0.0
      %1727 = vmatpush1.msra.mxu0 0.0
      %1728 = vmatprep.subr.mxu0 0.0
      %1729 = vmatpush1.msra.mxu0 0.0
      %1730 = vmatprep.subr.mxu0 0.0
      %1731 = vmatpush1.msra.mxu0 0.0
      %1732 = vmatprep.subr.mxu0 0.0
      %1733 = vmatpush1.msra.mxu0 0.0
      %1734 = vmatprep.subr.mxu0 0.0
      %1735 = vmatpush1.msra.mxu0 0.0
      %1736 = vmatprep.subr.mxu0 0.0
      %1737 = vmatpush1.msra.mxu0 0.0
      %1738 = vmatprep.subr.mxu0 0.0
      %1739 = vmatpush1.msra.mxu0 0.0
      %1740 = vmatprep.subr.mxu0 0.0
      %1741 = vmatpush1.msra.mxu0 0.0
      %1742 = vmatprep.subr.mxu0 0.0
      %1743 = vmatpush1.msra.mxu0 0.0
      %1744 = vmatprep.subr.mxu0 0.0
      %1745 = vmatpush1.msra.mxu0 0.0
      %1746 = vmatprep.subr.mxu0 0.0
      %1747 = vmatpush1.msra.mxu0 0.0
      %1748 = vmatprep.subr.mxu0 0.0
      %1749 = vmatpush1.msra.mxu0 0.0
      %1750 = vmatprep.subr.mxu0 0.0
      %1751 = vmatpush1.msra.mxu0 0.0
      %1752 = vmatprep.subr.mxu0 0.0
      %1753 = vmatpush1.msra.mxu0 0.0
      %1754 = vmatprep.subr.mxu0 0.0
      %1755 = vmatpush1.msra.mxu0 0.0
      %1756 = vmatprep.subr.mxu0 0.0
      %1757 = vmatpush1.msra.mxu0 0.0
      %1758 = vmatprep.subr.mxu0 0.0
      %1759 = vmatpush1.msra.mxu0 0.0
      %1760 = vmatprep.subr.mxu0 0.0
      %1761 = vmatpush1.msra.mxu0 0.0
      %1762 = vmatprep.subr.mxu0 0.0
      %1763 = vmatpush1.msra.mxu0 0.0
      %1764 = vmatprep.subr.mxu0 0.0
      %1765 = vmatpush1.msra.mxu0 0.0
      %1766 = vmatprep.subr.mxu0 0.0
      %1767 = vmatpush1.msra.mxu0 0.0
      %1768 = vmatprep.subr.mxu0 0.0
      %1769 = vmatpush1.msra.mxu0 0.0
      %1770 = vmatprep.subr.mxu0 0.0
      %1771 = vmatpush1.msra.mxu0 0.0
      %1772 = vmatprep.subr.mxu0 0.0
      %1773 = vmatpush1.msra.mxu0 0.0
      %1774 = vmatprep.subr.mxu0 0.0
      %1775 = vmatpush1.msra.mxu0 0.0
      %1776 = vmatprep.mubr.f32.mxu0 0.0
      %v1777 = vand.u32 %v349, 4294901760
      %1778 = vmatmul.mubr.f32.gmra.mrb[0].mxu0 %v1777
      %v1779 = vpop.f32.mrb[0].mxu0
      %v1780 = vadd.f32 %v1458, %v1779
      %v1781 = vpop.f32.mrb[0].mxu0
      %1782 = vmatprep.mubr.f32.mxu0 0.0
      %v1783 = vand.u32 %v352, 4294901760
      %1784 = vmatmul.mubr.f32.gmra.mrb[0].mxu0 %v1783
      %v1785 = vpop.f32.mrb[0].mxu0
      %v1786 = vadd.f32 %v1466, %v1785
      %v1787 = vpop.f32.mrb[0].mxu0
      %1788 = vmatprep.mubr.f32.mxu0 0.0
      %v1789 = vand.u32 %v355, 4294901760
      %1790 = vmatmul.mubr.f32.gmra.mrb[0].mxu0 %v1789
      %v1791 = vpop.f32.mrb[0].mxu0
      %v1792 = vadd.f32 %v1474, %v1791
      %v1793 = vpop.f32.mrb[0].mxu0
      %1794 = vmatprep.mubr.f32.mxu0 0.0
      %v1795 = vand.u32 %v358, 4294901760
      %1796 = vmatmul.mubr.f32.gmra.mrb[0].mxu0 %v1795
      %v1797 = vpop.f32.mrb[0].mxu0
      %v1798 = vadd.f32 %v1482, %v1797
      %v1799 = vpop.f32.mrb[0].mxu0
      %1800 = vmatprep.mubr.f32.mxu0 0.0
      %v1801 = vand.u32 %v361, 4294901760
      %1802 = vmatmul.mubr.f32.gmra.mrb[0].mxu0 %v1801
      %v1803 = vpop.f32.mrb[0].mxu0
      %v1804 = vadd.f32 %v1490, %v1803
      %v1805 = vpop.f32.mrb[0].mxu0
      %1806 = vmatprep.mubr.f32.mxu0 0.0
      %v1807 = vand.u32 %v364, 4294901760
      %1808 = vmatmul.mubr.f32.gmra.mrb[0].mxu0 %v1807
      %v1809 = vpop.f32.mrb[0].mxu0
      %v1810 = vadd.f32 %v1498, %v1809
      %v1811 = vpop.f32.mrb[0].mxu0
      %1812 = vmatprep.mubr.f32.mxu0 0.0
      %v1813 = vand.u32 %v367, 4294901760
      %1814 = vmatmul.mubr.f32.gmra.mrb[0].mxu0 %v1813
      %v1815 = vpop.f32.mrb[0].mxu0
      %v1816 = vadd.f32 %v1506, %v1815
      %v1817 = vpop.f32.mrb[0].mxu0
      %1818 = vmatprep.mubr.f32.mxu0 0.0
      %v1819 = vand.u32 %v370, 4294901760
      %1820 = vmatmul.mubr.f32.gmra.mrb[0].mxu0 %v1819
      %v1821 = vpop.f32.mrb[0].mxu0
      %v1822 = vadd.f32 %v1514, %v1821
      %v1823 = vpop.f32.mrb[0].mxu0
      %1824 = vmatprep.mubr.f32.mxu0 0.0
      %v1825 = vand.u32 %v373, 4294901760
      %1826 = vmatmul.mubr.f32.gmra.mrb[0].mxu0 %v1825
      %v1827 = vpop.f32.mrb[0].mxu0
      %v1828 = vadd.f32 %v1522, %v1827
      %v1829 = vpop.f32.mrb[0].mxu0
      %1830 = vmatprep.mubr.f32.mxu0 0.0
      %v1831 = vand.u32 %v376, 4294901760
      %1832 = vmatmul.mubr.f32.gmra.mrb[0].mxu0 %v1831
      %v1833 = vpop.f32.mrb[0].mxu0
      %v1834 = vadd.f32 %v1530, %v1833
      %v1835 = vpop.f32.mrb[0].mxu0
      %1836 = vmatprep.mubr.f32.mxu0 0.0
      %v1837 = vand.u32 %v379, 4294901760
      %1838 = vmatmul.mubr.f32.gmra.mrb[0].mxu0 %v1837
      %v1839 = vpop.f32.mrb[0].mxu0
      %v1840 = vadd.f32 %v1538, %v1839
      %v1841 = vpop.f32.mrb[0].mxu0
      %1842 = vmatprep.mubr.f32.mxu0 0.0
      %v1843 = vand.u32 %v382, 4294901760
      %1844 = vmatmul.mubr.f32.gmra.mrb[0].mxu0 %v1843
      %v1845 = vpop.f32.mrb[0].mxu0
      %v1846 = vadd.f32 %v1546, %v1845
      %v1847 = vpop.f32.mrb[0].mxu0
      %1848 = vmatprep.mubr.f32.mxu0 0.0
      %v1849 = vand.u32 %v385, 4294901760
      %1850 = vmatmul.mubr.f32.gmra.mrb[0].mxu0 %v1849
      %v1851 = vpop.f32.mrb[0].mxu0
      %v1852 = vadd.f32 %v1554, %v1851
      %v1853 = vpop.f32.mrb[0].mxu0
      %1854 = vmatprep.mubr.f32.mxu0 0.0
      %v1855 = vand.u32 %v388, 4294901760
      %1856 = vmatmul.mubr.f32.gmra.mrb[0].mxu0 %v1855
      %v1857 = vpop.f32.mrb[0].mxu0
      %v1858 = vadd.f32 %v1562, %v1857
      %v1859 = vpop.f32.mrb[0].mxu0
      %1860 = vmatprep.mubr.f32.mxu0 0.0
      %v1861 = vand.u32 %v391, 4294901760
      %1862 = vmatmul.mubr.f32.gmra.mrb[0].mxu0 %v1861
      %v1863 = vpop.f32.mrb[0].mxu0
      %v1864 = vadd.f32 %v1570, %v1863
      %v1865 = vpop.f32.mrb[0].mxu0
      %1866 = vmatprep.mubr.f32.mxu0 0.0
      %v1867 = vand.u32 %v394, 4294901760
      %1868 = vmatmul.mubr.f32.gmra.mrb[0].mxu0 %v1867
      %v1869 = vpop.f32.mrb[0].mxu0
      %v1870 = vadd.f32 %v1578, %v1869
      %v1871 = vpop.f32.mrb[0].mxu0
      %1872 = vmatprep.mubr.f32.mxu0 0.0
      %v1873 = vand.u32 %v397, 4294901760
      %1874 = vmatmul.mubr.f32.gmra.mrb[0].mxu0 %v1873
      %v1875 = vpop.f32.mrb[0].mxu0
      %v1876 = vadd.f32 %v1586, %v1875
      %v1877 = vpop.f32.mrb[0].mxu0
      %1878 = vmatprep.mubr.f32.mxu0 0.0
      %v1879 = vand.u32 %v400, 4294901760
      %1880 = vmatmul.mubr.f32.gmra.mrb[0].mxu0 %v1879
      %v1881 = vpop.f32.mrb[0].mxu0
      %v1882 = vadd.f32 %v1594, %v1881
      %v1883 = vpop.f32.mrb[0].mxu0
      %1884 = vmatprep.mubr.f32.mxu0 0.0
      %v1885 = vand.u32 %v403, 4294901760
      %1886 = vmatmul.mubr.f32.gmra.mrb[0].mxu0 %v1885
      %v1887 = vpop.f32.mrb[0].mxu0
      %v1888 = vadd.f32 %v1602, %v1887
      %v1889 = vpop.f32.mrb[0].mxu0
      %1890 = vmatprep.mubr.f32.mxu0 0.0
      %v1891 = vand.u32 %v406, 4294901760
      %1892 = vmatmul.mubr.f32.gmra.mrb[0].mxu0 %v1891
      %v1893 = vpop.f32.mrb[0].mxu0
      %v1894 = vadd.f32 %v1610, %v1893
      %v1895 = vpop.f32.mrb[0].mxu0
      %1896 = vmatprep.mubr.f32.mxu0 0.0
      %v1897 = vand.u32 %v409, 4294901760
      %1898 = vmatmul.mubr.f32.gmra.mrb[0].mxu0 %v1897
      %v1899 = vpop.f32.mrb[0].mxu0
      %v1900 = vadd.f32 %v1618, %v1899
      %v1901 = vpop.f32.mrb[0].mxu0
      %1902 = vmatprep.mubr.f32.mxu0 0.0
      %v1903 = vand.u32 %v412, 4294901760
      %1904 = vmatmul.mubr.f32.gmra.mrb[0].mxu0 %v1903
      %v1905 = vpop.f32.mrb[0].mxu0
      %v1906 = vadd.f32 %v1626, %v1905
      %v1907 = vpop.f32.mrb[0].mxu0
      %1908 = vmatprep.mubr.f32.mxu0 0.0
      %v1909 = vand.u32 %v415, 4294901760
      %1910 = vmatmul.mubr.f32.gmra.mrb[0].mxu0 %v1909
      %v1911 = vpop.f32.mrb[0].mxu0
      %v1912 = vadd.f32 %v1634, %v1911
      %v1913 = vpop.f32.mrb[0].mxu0
      %1914 = vmatprep.mubr.f32.mxu0 0.0
      %v1915 = vand.u32 %v418, 4294901760
      %1916 = vmatmul.mubr.f32.gmra.mrb[0].mxu0 %v1915
      %v1917 = vpop.f32.mrb[0].mxu0
      %v1918 = vadd.f32 %v1642, %v1917
      %v1919 = vpop.f32.mrb[0].mxu0
      %1920 = vmatprep.mubr.f32.mxu0 0.0
      %v1921 = vand.u32 %v421, 4294901760
      %1922 = vmatmul.mubr.f32.gmra.mrb[0].mxu0 %v1921
      %v1923 = vpop.f32.mrb[0].mxu0
      %v1924 = vadd.f32 %v1650, %v1923
      %v1925 = vpop.f32.mrb[0].mxu0
      %1926 = vmatprep.mubr.f32.mxu0 0.0
      %v1927 = vand.u32 %v424, 4294901760
      %1928 = vmatmul.mubr.f32.gmra.mrb[0].mxu0 %v1927
      %v1929 = vpop.f32.mrb[0].mxu0
      %v1930 = vadd.f32 %v1658, %v1929
      %v1931 = vpop.f32.mrb[0].mxu0
      %1932 = vmatprep.mubr.f32.mxu0 0.0
      %v1933 = vand.u32 %v427, 4294901760
      %1934 = vmatmul.mubr.f32.gmra.mrb[0].mxu0 %v1933
      %v1935 = vpop.f32.mrb[0].mxu0
      %v1936 = vadd.f32 %v1666, %v1935
      %v1937 = vpop.f32.mrb[0].mxu0
      %1938 = vmatprep.mubr.f32.mxu0 0.0
      %v1939 = vand.u32 %v430, 4294901760
      %1940 = vmatmul.mubr.f32.gmra.mrb[0].mxu0 %v1939
      %v1941 = vpop.f32.mrb[0].mxu0
      %v1942 = vadd.f32 %v1674, %v1941
      %v1943 = vpop.f32.mrb[0].mxu0
      %1944 = vmatprep.mubr.f32.mxu0 0.0
      %v1945 = vand.u32 %v433, 4294901760
      %1946 = vmatmul.mubr.f32.gmra.mrb[0].mxu0 %v1945
      %v1947 = vpop.f32.mrb[0].mxu0
      %v1948 = vadd.f32 %v1682, %v1947
      %v1949 = vpop.f32.mrb[0].mxu0
      %1950 = vmatprep.mubr.f32.mxu0 0.0
      %v1951 = vand.u32 %v436, 4294901760
      %1952 = vmatmul.mubr.f32.gmra.mrb[0].mxu0 %v1951
      %v1953 = vpop.f32.mrb[0].mxu0
      %v1954 = vadd.f32 %v1690, %v1953
      %v1955 = vpop.f32.mrb[0].mxu0
      %1956 = vmatprep.mubr.f32.mxu0 0.0
      %v1957 = vand.u32 %v439, 4294901760
      %1958 = vmatmul.mubr.f32.gmra.mrb[0].mxu0 %v1957
      %v1959 = vpop.f32.mrb[0].mxu0
      %v1960 = vadd.f32 %v1698, %v1959
      %v1961 = vpop.f32.mrb[0].mxu0
      %1962 = vmatprep.mubr.f32.mxu0 0.0
      %v1963 = vand.u32 %v442, 4294901760
      %1964 = vmatmul.mubr.f32.gmra.mrb[0].mxu0 %v1963
      %v1965 = vpop.f32.mrb[0].mxu0
      %v1966 = vadd.f32 %v1706, %v1965
      %v1967 = vpop.f32.mrb[0].mxu0
      %1968 = vdwg.mxu0
      %1969 = vmatprep.subr.mxu0 0.0
      %v1970 = vand.u32 %v446, 4294901760
      %1971 = vmatpush1.msra.mxu0 %v1970
      %1972 = vmatprep.subr.mxu0 0.0
      %1973 = vmatpush1.msra.mxu0 0.0
      %1974 = vmatprep.subr.mxu0 0.0
      %1975 = vmatpush1.msra.mxu0 0.0
      %1976 = vmatprep.subr.mxu0 0.0
      %1977 = vmatpush1.msra.mxu0 0.0
      %1978 = vmatprep.subr.mxu0 0.0
      %1979 = vmatpush1.msra.mxu0 0.0
      %1980 = vmatprep.subr.mxu0 0.0
      %1981 = vmatpush1.msra.mxu0 0.0
      %1982 = vmatprep.subr.mxu0 0.0
      %1983 = vmatpush1.msra.mxu0 0.0
      %1984 = vmatprep.subr.mxu0 0.0
      %1985 = vmatpush1.msra.mxu0 0.0
      %1986 = vmatprep.subr.mxu0 0.0
      %1987 = vmatpush1.msra.mxu0 0.0
      %1988 = vmatprep.subr.mxu0 0.0
      %1989 = vmatpush1.msra.mxu0 0.0
      %1990 = vmatprep.subr.mxu0 0.0
      %1991 = vmatpush1.msra.mxu0 0.0
      %1992 = vmatprep.subr.mxu0 0.0
      %1993 = vmatpush1.msra.mxu0 0.0
      %1994 = vmatprep.subr.mxu0 0.0
      %1995 = vmatpush1.msra.mxu0 0.0
      %1996 = vmatprep.subr.mxu0 0.0
      %1997 = vmatpush1.msra.mxu0 0.0
      %1998 = vmatprep.subr.mxu0 0.0
      %1999 = vmatpush1.msra.mxu0 0.0
      %2000 = vmatprep.subr.mxu0 0.0
      %2001 = vmatpush1.msra.mxu0 0.0
      %2002 = vmatprep.subr.mxu0 0.0
      %2003 = vmatpush1.msra.mxu0 0.0
      %2004 = vmatprep.subr.mxu0 0.0
      %2005 = vmatpush1.msra.mxu0 0.0
      %2006 = vmatprep.subr.mxu0 0.0
      %2007 = vmatpush1.msra.mxu0 0.0
      %2008 = vmatprep.subr.mxu0 0.0
      %2009 = vmatpush1.msra.mxu0 0.0
      %2010 = vmatprep.subr.mxu0 0.0
      %2011 = vmatpush1.msra.mxu0 0.0
      %2012 = vmatprep.subr.mxu0 0.0
      %2013 = vmatpush1.msra.mxu0 0.0
      %2014 = vmatprep.subr.mxu0 0.0
      %2015 = vmatpush1.msra.mxu0 0.0
      %2016 = vmatprep.subr.mxu0 0.0
      %2017 = vmatpush1.msra.mxu0 0.0
      %2018 = vmatprep.subr.mxu0 0.0
      %2019 = vmatpush1.msra.mxu0 0.0
      %2020 = vmatprep.subr.mxu0 0.0
      %2021 = vmatpush1.msra.mxu0 0.0
      %2022 = vmatprep.subr.mxu0 0.0
      %2023 = vmatpush1.msra.mxu0 0.0
      %2024 = vmatprep.subr.mxu0 0.0
      %2025 = vmatpush1.msra.mxu0 0.0
      %2026 = vmatprep.subr.mxu0 0.0
      %2027 = vmatpush1.msra.mxu0 0.0
      %2028 = vmatprep.subr.mxu0 0.0
      %2029 = vmatpush1.msra.mxu0 0.0
      %2030 = vmatprep.subr.mxu0 0.0
      %2031 = vmatpush1.msra.mxu0 0.0
      %2032 = vmatprep.subr.mxu0 0.0
      %2033 = vmatpush1.msra.mxu0 0.0
      %2034 = vmatprep.mubr.f32.mxu0 0.0
      %v2035 = vand.u32 %v349, 4294901760
      %2036 = vmatmul.mubr.f32.gmra.mrb[0].mxu0 %v2035
      %v2037 = vpop.f32.mrb[0].mxu0
      %v2038 = vadd.f32 %v1780, %v2037
      %v2039 = vpop.f32.mrb[0].mxu0
      %2040 = vmatprep.mubr.f32.mxu0 0.0
      %v2041 = vand.u32 %v352, 4294901760
      %2042 = vmatmul.mubr.f32.gmra.mrb[0].mxu0 %v2041
      %v2043 = vpop.f32.mrb[0].mxu0
      %v2044 = vadd.f32 %v1786, %v2043
      %v2045 = vpop.f32.mrb[0].mxu0
      %2046 = vmatprep.mubr.f32.mxu0 0.0
      %v2047 = vand.u32 %v355, 4294901760
      %2048 = vmatmul.mubr.f32.gmra.mrb[0].mxu0 %v2047
      %v2049 = vpop.f32.mrb[0].mxu0
      %v2050 = vadd.f32 %v1792, %v2049
      %v2051 = vpop.f32.mrb[0].mxu0
      %2052 = vmatprep.mubr.f32.mxu0 0.0
      %v2053 = vand.u32 %v358, 4294901760
      %2054 = vmatmul.mubr.f32.gmra.mrb[0].mxu0 %v2053
      %v2055 = vpop.f32.mrb[0].mxu0
      %v2056 = vadd.f32 %v1798, %v2055
      %v2057 = vpop.f32.mrb[0].mxu0
      %2058 = vmatprep.mubr.f32.mxu0 0.0
      %v2059 = vand.u32 %v361, 4294901760
      %2060 = vmatmul.mubr.f32.gmra.mrb[0].mxu0 %v2059
      %v2061 = vpop.f32.mrb[0].mxu0
      %v2062 = vadd.f32 %v1804, %v2061
      %v2063 = vpop.f32.mrb[0].mxu0
      %2064 = vmatprep.mubr.f32.mxu0 0.0
      %v2065 = vand.u32 %v364, 4294901760
      %2066 = vmatmul.mubr.f32.gmra.mrb[0].mxu0 %v2065
      %v2067 = vpop.f32.mrb[0].mxu0
      %v2068 = vadd.f32 %v1810, %v2067
      %v2069 = vpop.f32.mrb[0].mxu0
      %2070 = vmatprep.mubr.f32.mxu0 0.0
      %v2071 = vand.u32 %v367, 4294901760
      %2072 = vmatmul.mubr.f32.gmra.mrb[0].mxu0 %v2071
      %v2073 = vpop.f32.mrb[0].mxu0
      %v2074 = vadd.f32 %v1816, %v2073
      %v2075 = vpop.f32.mrb[0].mxu0
      %2076 = vmatprep.mubr.f32.mxu0 0.0
      %v2077 = vand.u32 %v370, 4294901760
      %2078 = vmatmul.mubr.f32.gmra.mrb[0].mxu0 %v2077
      %v2079 = vpop.f32.mrb[0].mxu0
      %v2080 = vadd.f32 %v1822, %v2079
      %v2081 = vpop.f32.mrb[0].mxu0
      %2082 = vmatprep.mubr.f32.mxu0 0.0
      %v2083 = vand.u32 %v373, 4294901760
      %2084 = vmatmul.mubr.f32.gmra.mrb[0].mxu0 %v2083
      %v2085 = vpop.f32.mrb[0].mxu0
      %v2086 = vadd.f32 %v1828, %v2085
      %v2087 = vpop.f32.mrb[0].mxu0
      %2088 = vmatprep.mubr.f32.mxu0 0.0
      %v2089 = vand.u32 %v376, 4294901760
      %2090 = vmatmul.mubr.f32.gmra.mrb[0].mxu0 %v2089
      %v2091 = vpop.f32.mrb[0].mxu0
      %v2092 = vadd.f32 %v1834, %v2091
      %v2093 = vpop.f32.mrb[0].mxu0
      %2094 = vmatprep.mubr.f32.mxu0 0.0
      %v2095 = vand.u32 %v379, 4294901760
      %2096 = vmatmul.mubr.f32.gmra.mrb[0].mxu0 %v2095
      %v2097 = vpop.f32.mrb[0].mxu0
      %v2098 = vadd.f32 %v1840, %v2097
      %v2099 = vpop.f32.mrb[0].mxu0
      %2100 = vmatprep.mubr.f32.mxu0 0.0
      %v2101 = vand.u32 %v382, 4294901760
      %2102 = vmatmul.mubr.f32.gmra.mrb[0].mxu0 %v2101
      %v2103 = vpop.f32.mrb[0].mxu0
      %v2104 = vadd.f32 %v1846, %v2103
      %v2105 = vpop.f32.mrb[0].mxu0
      %2106 = vmatprep.mubr.f32.mxu0 0.0
      %v2107 = vand.u32 %v385, 4294901760
      %2108 = vmatmul.mubr.f32.gmra.mrb[0].mxu0 %v2107
      %v2109 = vpop.f32.mrb[0].mxu0
      %v2110 = vadd.f32 %v1852, %v2109
      %v2111 = vpop.f32.mrb[0].mxu0
      %2112 = vmatprep.mubr.f32.mxu0 0.0
      %v2113 = vand.u32 %v388, 4294901760
      %2114 = vmatmul.mubr.f32.gmra.mrb[0].mxu0 %v2113
      %v2115 = vpop.f32.mrb[0].mxu0
      %v2116 = vadd.f32 %v1858, %v2115
      %v2117 = vpop.f32.mrb[0].mxu0
      %2118 = vmatprep.mubr.f32.mxu0 0.0
      %v2119 = vand.u32 %v391, 4294901760
      %2120 = vmatmul.mubr.f32.gmra.mrb[0].mxu0 %v2119
      %v2121 = vpop.f32.mrb[0].mxu0
      %v2122 = vadd.f32 %v1864, %v2121
      %v2123 = vpop.f32.mrb[0].mxu0
      %2124 = vmatprep.mubr.f32.mxu0 0.0
      %v2125 = vand.u32 %v394, 4294901760
      %2126 = vmatmul.mubr.f32.gmra.mrb[0].mxu0 %v2125
      %v2127 = vpop.f32.mrb[0].mxu0
      %v2128 = vadd.f32 %v1870, %v2127
      %v2129 = vpop.f32.mrb[0].mxu0
      %2130 = vmatprep.mubr.f32.mxu0 0.0
      %v2131 = vand.u32 %v397, 4294901760
      %2132 = vmatmul.mubr.f32.gmra.mrb[0].mxu0 %v2131
      %v2133 = vpop.f32.mrb[0].mxu0
      %v2134 = vadd.f32 %v1876, %v2133
      %v2135 = vpop.f32.mrb[0].mxu0
      %2136 = vmatprep.mubr.f32.mxu0 0.0
      %v2137 = vand.u32 %v400, 4294901760
      %2138 = vmatmul.mubr.f32.gmra.mrb[0].mxu0 %v2137
      %v2139 = vpop.f32.mrb[0].mxu0
      %v2140 = vadd.f32 %v1882, %v2139
      %v2141 = vpop.f32.mrb[0].mxu0
      %2142 = vmatprep.mubr.f32.mxu0 0.0
      %v2143 = vand.u32 %v403, 4294901760
      %2144 = vmatmul.mubr.f32.gmra.mrb[0].mxu0 %v2143
      %v2145 = vpop.f32.mrb[0].mxu0
      %v2146 = vadd.f32 %v1888, %v2145
      %v2147 = vpop.f32.mrb[0].mxu0
      %2148 = vmatprep.mubr.f32.mxu0 0.0
      %v2149 = vand.u32 %v406, 4294901760
      %2150 = vmatmul.mubr.f32.gmra.mrb[0].mxu0 %v2149
      %v2151 = vpop.f32.mrb[0].mxu0
      %v2152 = vadd.f32 %v1894, %v2151
      %v2153 = vpop.f32.mrb[0].mxu0
      %2154 = vmatprep.mubr.f32.mxu0 0.0
      %v2155 = vand.u32 %v409, 4294901760
      %2156 = vmatmul.mubr.f32.gmra.mrb[0].mxu0 %v2155
      %v2157 = vpop.f32.mrb[0].mxu0
      %v2158 = vadd.f32 %v1900, %v2157
      %v2159 = vpop.f32.mrb[0].mxu0
      %2160 = vmatprep.mubr.f32.mxu0 0.0
      %v2161 = vand.u32 %v412, 4294901760
      %2162 = vmatmul.mubr.f32.gmra.mrb[0].mxu0 %v2161
      %v2163 = vpop.f32.mrb[0].mxu0
      %v2164 = vadd.f32 %v1906, %v2163
      %v2165 = vpop.f32.mrb[0].mxu0
      %2166 = vmatprep.mubr.f32.mxu0 0.0
      %v2167 = vand.u32 %v415, 4294901760
      %2168 = vmatmul.mubr.f32.gmra.mrb[0].mxu0 %v2167
      %v2169 = vpop.f32.mrb[0].mxu0
      %v2170 = vadd.f32 %v1912, %v2169
      %v2171 = vpop.f32.mrb[0].mxu0
      %2172 = vmatprep.mubr.f32.mxu0 0.0
      %v2173 = vand.u32 %v418, 4294901760
      %2174 = vmatmul.mubr.f32.gmra.mrb[0].mxu0 %v2173
      %v2175 = vpop.f32.mrb[0].mxu0
      %v2176 = vadd.f32 %v1918, %v2175
      %v2177 = vpop.f32.mrb[0].mxu0
      %2178 = vmatprep.mubr.f32.mxu0 0.0
      %v2179 = vand.u32 %v421, 4294901760
      %2180 = vmatmul.mubr.f32.gmra.mrb[0].mxu0 %v2179
      %v2181 = vpop.f32.mrb[0].mxu0
      %v2182 = vadd.f32 %v1924, %v2181
      %v2183 = vpop.f32.mrb[0].mxu0
      %2184 = vmatprep.mubr.f32.mxu0 0.0
      %v2185 = vand.u32 %v424, 4294901760
      %2186 = vmatmul.mubr.f32.gmra.mrb[0].mxu0 %v2185
      %v2187 = vpop.f32.mrb[0].mxu0
      %v2188 = vadd.f32 %v1930, %v2187
      %v2189 = vpop.f32.mrb[0].mxu0
      %2190 = vmatprep.mubr.f32.mxu0 0.0
      %v2191 = vand.u32 %v427, 4294901760
      %2192 = vmatmul.mubr.f32.gmra.mrb[0].mxu0 %v2191
      %v2193 = vpop.f32.mrb[0].mxu0
      %v2194 = vadd.f32 %v1936, %v2193
      %v2195 = vpop.f32.mrb[0].mxu0
      %2196 = vmatprep.mubr.f32.mxu0 0.0
      %v2197 = vand.u32 %v430, 4294901760
      %2198 = vmatmul.mubr.f32.gmra.mrb[0].mxu0 %v2197
      %v2199 = vpop.f32.mrb[0].mxu0
      %v2200 = vadd.f32 %v1942, %v2199
      %v2201 = vpop.f32.mrb[0].mxu0
      %2202 = vmatprep.mubr.f32.mxu0 0.0
      %v2203 = vand.u32 %v433, 4294901760
      %2204 = vmatmul.mubr.f32.gmra.mrb[0].mxu0 %v2203
      %v2205 = vpop.f32.mrb[0].mxu0
      %v2206 = vadd.f32 %v1948, %v2205
      %v2207 = vpop.f32.mrb[0].mxu0
      %2208 = vmatprep.mubr.f32.mxu0 0.0
      %v2209 = vand.u32 %v436, 4294901760
      %2210 = vmatmul.mubr.f32.gmra.mrb[0].mxu0 %v2209
      %v2211 = vpop.f32.mrb[0].mxu0
      %v2212 = vadd.f32 %v1954, %v2211
      %v2213 = vpop.f32.mrb[0].mxu0
      %2214 = vmatprep.mubr.f32.mxu0 0.0
      %v2215 = vand.u32 %v439, 4294901760
      %2216 = vmatmul.mubr.f32.gmra.mrb[0].mxu0 %v2215
      %v2217 = vpop.f32.mrb[0].mxu0
      %v2218 = vadd.f32 %v1960, %v2217
      %v2219 = vpop.f32.mrb[0].mxu0
      %2220 = vmatprep.mubr.f32.mxu0 0.0
      %v2221 = vand.u32 %v442, 4294901760
      %2222 = vmatmul.mubr.f32.gmra.mrb[0].mxu0 %v2221
      %v2223 = vpop.f32.mrb[0].mxu0
      %v2224 = vadd.f32 %v1966, %v2223
      %v2225 = vpop.f32.mrb[0].mxu0
      %2226 = vdwg.mxu0
      %vm2227 = vcmask 64512
      %2228 = vst.msk [vmem:[#allocation2] sm:$0xff] %vm2227, 0.0
      %2229 = vst.msk [vmem:[#allocation2 + $0x8] sm:$0xff] %vm2227, 0.0
      %vm2230 = vcmask 58368
      %2231 = vst.msk [vmem:[#allocation2 + $0x10] sm:$0x3] %vm2230, 0.0
      %s2232 = scalar_lea.vmem [#allocation2], 408
      %2233 = vst.msk [vmem:[%s2232] sm:$0xff] %vm2227, 0.0
      %2234 = vst.msk [vmem:[%s2232 + $0x8] sm:$0xff] %vm2227, 0.0
      %2235 = vst.msk [vmem:[%s2232 + $0x10] sm:$0x3] %vm2230, 0.0
      %s2236 = scalar_lea.vmem [#allocation2], 24
      %vm2237 = vcmask 57344
      %2238 = vst.msk [vmem:[%s2236] sm:$0x1] %vm2237, 0.0
      %2239 = vst.msk [vmem:[%s2236 + $0x18] sm:$0x1] %vm2237, 0.0
      %2240 = vst.msk [vmem:[%s2236 + $0x30] sm:$0x1] %vm2237, 0.0
      %2241 = vst.msk [vmem:[%s2236 + $0x48] sm:$0x1] %vm2237, 0.0
      %2242 = vst.msk [vmem:[%s2236 + $0x60] sm:$0x1] %vm2237, 0.0
      %2243 = vst.msk [vmem:[%s2236 + $0x78] sm:$0x1] %vm2237, 0.0
      %2244 = vst.msk [vmem:[%s2236 + $0x90] sm:$0x1] %vm2237, 0.0
      %2245 = vst.msk [vmem:[%s2236 + $0xa8] sm:$0x1] %vm2237, 0.0
      %2246 = vst.msk [vmem:[%s2236 + $0xc0] sm:$0x1] %vm2237, 0.0
      %2247 = vst.msk [vmem:[%s2236 + $0xd8] sm:$0x1] %vm2237, 0.0
      %2248 = vst.msk [vmem:[%s2236 + $0xf0] sm:$0x1] %vm2237, 0.0
      %2249 = vst.msk [vmem:[%s2236 + $0x108] sm:$0x1] %vm2237, 0.0
      %2250 = vst.msk [vmem:[%s2236 + $0x120] sm:$0x1] %vm2237, 0.0
      %2251 = vst.msk [vmem:[%s2236 + $0x138] sm:$0x1] %vm2237, 0.0
      %2252 = vst.msk [vmem:[%s2236 + $0x150] sm:$0x1] %vm2237, 0.0
      %2253 = vst.msk [vmem:[%s2236 + $0x168] sm:$0x1] %vm2237, 0.0
      %2254 = vst.msk [vmem:[%s2236 + $0x11] sm:$0x1] %vm2237, 0.0
      %2255 = vst.msk [vmem:[%s2236 + $0x29] sm:$0x1] %vm2237, 0.0
      %2256 = vst.msk [vmem:[%s2236 + $0x41] sm:$0x1] %vm2237, 0.0
      %2257 = vst.msk [vmem:[%s2236 + $0x59] sm:$0x1] %vm2237, 0.0
      %2258 = vst.msk [vmem:[%s2236 + $0x71] sm:$0x1] %vm2237, 0.0
      %2259 = vst.msk [vmem:[%s2236 + $0x89] sm:$0x1] %vm2237, 0.0
      %2260 = vst.msk [vmem:[%s2236 + $0xa1] sm:$0x1] %vm2237, 0.0
      %2261 = vst.msk [vmem:[%s2236 + $0xb9] sm:$0x1] %vm2237, 0.0
      %2262 = vst.msk [vmem:[%s2236 + $0xd1] sm:$0x1] %vm2237, 0.0
      %2263 = vst.msk [vmem:[%s2236 + $0xe9] sm:$0x1] %vm2237, 0.0
      %2264 = vst.msk [vmem:[%s2236 + $0x101] sm:$0x1] %vm2237, 0.0
      %2265 = vst.msk [vmem:[%s2236 + $0x119] sm:$0x1] %vm2237, 0.0
      %2266 = vst.msk [vmem:[%s2236 + $0x131] sm:$0x1] %vm2237, 0.0
      %2267 = vst.msk [vmem:[%s2236 + $0x149] sm:$0x1] %vm2237, 0.0
      %2268 = vst.msk [vmem:[%s2236 + $0x161] sm:$0x1] %vm2237, 0.0
      %2269 = vst.msk [vmem:[%s2236 + $0x179] sm:$0x1] %vm2237, 0.0
      %2270 = vst.msk [vmem:[%s2236 + $0x1] sm:$0xff] %vm2227, %v2038
      %2271 = vst.msk [vmem:[%s2236 + $0x9] sm:$0xff] %vm2227, %v2044
      %2272 = vst.msk [vmem:[%s2236 + $0x19] sm:$0xff] %vm2227, %v2050
      %2273 = vst.msk [vmem:[%s2236 + $0x21] sm:$0xff] %vm2227, %v2056
      %2274 = vst.msk [vmem:[%s2236 + $0x31] sm:$0xff] %vm2227, %v2062
      %2275 = vst.msk [vmem:[%s2236 + $0x39] sm:$0xff] %vm2227, %v2068
      %2276 = vst.msk [vmem:[%s2236 + $0x49] sm:$0xff] %vm2227, %v2074
      %2277 = vst.msk [vmem:[%s2236 + $0x51] sm:$0xff] %vm2227, %v2080
      %2278 = vst.msk [vmem:[%s2236 + $0x61] sm:$0xff] %vm2227, %v2086
      %2279 = vst.msk [vmem:[%s2236 + $0x69] sm:$0xff] %vm2227, %v2092
      %2280 = vst.msk [vmem:[%s2236 + $0x79] sm:$0xff] %vm2227, %v2098
      %2281 = vst.msk [vmem:[%s2236 + $0x81] sm:$0xff] %vm2227, %v2104
      %2282 = vst.msk [vmem:[%s2236 + $0x91] sm:$0xff] %vm2227, %v2110
      %2283 = vst.msk [vmem:[%s2236 + $0x99] sm:$0xff] %vm2227, %v2116
      %2284 = vst.msk [vmem:[%s2236 + $0xa9] sm:$0xff] %vm2227, %v2122
      %2285 = vst.msk [vmem:[%s2236 + $0xb1] sm:$0xff] %vm2227, %v2128
      %2286 = vst.msk [vmem:[%s2236 + $0xc1] sm:$0xff] %vm2227, %v2134
      %2287 = vst.msk [vmem:[%s2236 + $0xc9] sm:$0xff] %vm2227, %v2140
      %2288 = vst.msk [vmem:[%s2236 + $0xd9] sm:$0xff] %vm2227, %v2146
      %2289 = vst.msk [vmem:[%s2236 + $0xe1] sm:$0xff] %vm2227, %v2152
      %2290 = vst.msk [vmem:[%s2236 + $0xf1] sm:$0xff] %vm2227, %v2158
      %2291 = vst.msk [vmem:[%s2236 + $0xf9] sm:$0xff] %vm2227, %v2164
      %2292 = vst.msk [vmem:[%s2236 + $0x109] sm:$0xff] %vm2227, %v2170
      %2293 = vst.msk [vmem:[%s2236 + $0x111] sm:$0xff] %vm2227, %v2176
      %2294 = vst.msk [vmem:[%s2236 + $0x121] sm:$0xff] %vm2227, %v2182
      %2295 = vst.msk [vmem:[%s2236 + $0x129] sm:$0xff] %vm2227, %v2188
      %2296 = vst.msk [vmem:[%s2236 + $0x139] sm:$0xff] %vm2227, %v2194
      %2297 = vst.msk [vmem:[%s2236 + $0x141] sm:$0xff] %vm2227, %v2200
      %2298 = vst.msk [vmem:[%s2236 + $0x151] sm:$0xff] %vm2227, %v2206
      %2299 = vst.msk [vmem:[%s2236 + $0x159] sm:$0xff] %vm2227, %v2212
      %2300 = vst.msk [vmem:[%s2236 + $0x169] sm:$0xff] %vm2227, %v2218
      %2301 = vst.msk [vmem:[%s2236 + $0x171] sm:$0xff] %vm2227, %v2224
      %v2302 = vld [vmem:[#allocation2] sm:$0xff]
      %v2303 = vld [vmem:[#allocation2 + $0x8] sm:$0xff]
      %v2304 = vld [vmem:[#allocation2 + $0x10] sm:$0x3]
      %v2305 = vld [vmem:[#allocation2 + $0x18] sm:$0xff]
      %v2306 = vld [vmem:[#allocation2 + $0x20] sm:$0xff]
      %v2307 = vld [vmem:[#allocation2 + $0x28] sm:$0x3]
      %v2308 = vld [vmem:[#allocation2 + $0x30] sm:$0xff]
      %v2309 = vld [vmem:[#allocation2 + $0x38] sm:$0xff]
      %v2310 = vld [vmem:[#allocation2 + $0x40] sm:$0x3]
      %v2311 = vld [vmem:[#allocation2 + $0x48] sm:$0xff]
      %v2312 = vld [vmem:[#allocation2 + $0x50] sm:$0xff]
      %v2313 = vld [vmem:[#allocation2 + $0x58] sm:$0x3]
      %v2314 = vld [vmem:[#allocation2 + $0x60] sm:$0xff]
      %v2315 = vld [vmem:[#allocation2 + $0x68] sm:$0xff]
      %v2316 = vld [vmem:[#allocation2 + $0x70] sm:$0x3]
      %v2317 = vld [vmem:[#allocation2 + $0x78] sm:$0xff]
      %v2318 = vld [vmem:[#allocation2 + $0x80] sm:$0xff]
      %v2319 = vld [vmem:[#allocation2 + $0x88] sm:$0x3]
      %v2320 = vld [vmem:[#allocation2 + $0x90] sm:$0xff]
      %v2321 = vld [vmem:[#allocation2 + $0x98] sm:$0xff]
      %v2322 = vld [vmem:[#allocation2 + $0xa0] sm:$0x3]
      %v2323 = vld [vmem:[#allocation2 + $0xa8] sm:$0xff]
      %v2324 = vld [vmem:[#allocation2 + $0xb0] sm:$0xff]
      %v2325 = vld [vmem:[#allocation2 + $0xb8] sm:$0x3]
      %v2326 = vld [vmem:[#allocation2 + $0xc0] sm:$0xff]
      %v2327 = vld [vmem:[#allocation2 + $0xc8] sm:$0xff]
      %v2328 = vld [vmem:[#allocation2 + $0xd0] sm:$0x3]
      %v2329 = vld [vmem:[#allocation2 + $0xd8] sm:$0xff]
      %v2330 = vld [vmem:[#allocation2 + $0xe0] sm:$0xff]
      %v2331 = vld [vmem:[#allocation2 + $0xe8] sm:$0x3]
      %v2332 = vld [vmem:[#allocation2 + $0xf0] sm:$0xff]
      %v2333 = vld [vmem:[#allocation2 + $0xf8] sm:$0xff]
      %v2334 = vld [vmem:[#allocation2 + $0x100] sm:$0x3]
      %v2335 = vld [vmem:[#allocation2 + $0x108] sm:$0xff]
      %v2336 = vld [vmem:[#allocation2 + $0x110] sm:$0xff]
      %v2337 = vld [vmem:[#allocation2 + $0x118] sm:$0x3]
      %v2338 = vld [vmem:[#allocation2 + $0x120] sm:$0xff]
      %v2339 = vld [vmem:[#allocation2 + $0x128] sm:$0xff]
      %v2340 = vld [vmem:[#allocation2 + $0x130] sm:$0x3]
      %v2341 = vld [vmem:[#allocation2 + $0x138] sm:$0xff]
      %v2342 = vld [vmem:[#allocation2 + $0x140] sm:$0xff]
      %v2343 = vld [vmem:[#allocation2 + $0x148] sm:$0x3]
      %v2344 = vld [vmem:[#allocation2 + $0x150] sm:$0xff]
      %v2345 = vld [vmem:[#allocation2 + $0x158] sm:$0xff]
      %v2346 = vld [vmem:[#allocation2 + $0x160] sm:$0x3]
      %v2347 = vld [vmem:[#allocation2 + $0x168] sm:$0xff]
      %v2348 = vld [vmem:[#allocation2 + $0x170] sm:$0xff]
      %v2349 = vld [vmem:[#allocation2 + $0x178] sm:$0x3]
      %v2350 = vld [vmem:[#allocation2 + $0x180] sm:$0xff]
      %v2351 = vld [vmem:[#allocation2 + $0x188] sm:$0xff]
      %v2352 = vld [vmem:[#allocation2 + $0x190] sm:$0x3]
      %v2353 = vld [vmem:[#allocation2 + $0x198] sm:$0xff]
      %v2354 = vld [vmem:[#allocation2 + $0x1a0] sm:$0xff]
      %v2355 = vld [vmem:[#allocation2 + $0x1a8] sm:$0x3]
      %v2356 = vld [vmem:[%s295] sm:$0xff]
      %v2357 = vld [vmem:[%s295 + $0x8] sm:$0x1]
      %v2358 = vld [vmem:[%s298] sm:$0x1]
      %v2360 = vlaneseq
      %v2361 = vshrl.u32 %v2360, 7
      %v2362 = vsub.s32 0, %v2361
      %v2363 = vrot.slane %v2358, %v2362
      %v2365 = vadd.f32 %v2363, 0.0
      %v2366 = vlaneseq
      %v2367 = vshrl.u32 %v2366, 7
      %v2368 = vsub.s32 0, %v2367
      %v2369 = vrot.slane %v2356, %v2368
      %v2370 = vmul.f32 %v2302, %v2369
      %v2371 = vmul.f32 %v2303, %v2369
      %v2372 = vmul.f32 %v2305, %v2369
      %v2373 = vmul.f32 %v2306, %v2369
      %v2374 = vmul.f32 %v2308, %v2369
      %v2375 = vmul.f32 %v2309, %v2369
      %v2376 = vmul.f32 %v2311, %v2369
      %v2377 = vmul.f32 %v2312, %v2369
      %v2378 = vmul.f32 %v2314, %v2369
      %v2379 = vmul.f32 %v2315, %v2369
      %v2380 = vmul.f32 %v2317, %v2369
      %v2381 = vmul.f32 %v2318, %v2369
      %v2382 = vmul.f32 %v2320, %v2369
      %v2383 = vmul.f32 %v2321, %v2369
      %v2384 = vmul.f32 %v2323, %v2369
      %v2385 = vmul.f32 %v2324, %v2369
      %v2386 = vmul.f32 %v2326, %v2369
      %v2387 = vmul.f32 %v2327, %v2369
      %v2388 = vmul.f32 %v2329, %v2369
      %v2389 = vmul.f32 %v2330, %v2369
      %v2390 = vmul.f32 %v2332, %v2369
      %v2391 = vmul.f32 %v2333, %v2369
      %v2392 = vmul.f32 %v2335, %v2369
      %v2393 = vmul.f32 %v2336, %v2369
      %v2394 = vmul.f32 %v2338, %v2369
      %v2395 = vmul.f32 %v2339, %v2369
      %v2396 = vmul.f32 %v2341, %v2369
      %v2397 = vmul.f32 %v2342, %v2369
      %v2398 = vmul.f32 %v2344, %v2369
      %v2399 = vmul.f32 %v2345, %v2369
      %v2400 = vmul.f32 %v2347, %v2369
      %v2401 = vmul.f32 %v2348, %v2369
      %v2402 = vadd.f32 %v2365, %v2370
      %v2403 = vadd.f32 %v2365, %v2371
      %v2404 = vadd.f32 %v2365, %v2372
      %v2405 = vadd.f32 %v2365, %v2373
      %v2406 = vadd.f32 %v2365, %v2374
      %v2407 = vadd.f32 %v2365, %v2375
      %v2408 = vadd.f32 %v2365, %v2376
      %v2409 = vadd.f32 %v2365, %v2377
      %v2410 = vadd.f32 %v2365, %v2378
      %v2411 = vadd.f32 %v2365, %v2379
      %v2412 = vadd.f32 %v2365, %v2380
      %v2413 = vadd.f32 %v2365, %v2381
      %v2414 = vadd.f32 %v2365, %v2382
      %v2415 = vadd.f32 %v2365, %v2383
      %v2416 = vadd.f32 %v2365, %v2384
      %v2417 = vadd.f32 %v2365, %v2385
      %v2418 = vadd.f32 %v2365, %v2386
      %v2419 = vadd.f32 %v2365, %v2387
      %v2420 = vadd.f32 %v2365, %v2388
      %v2421 = vadd.f32 %v2365, %v2389
      %v2422 = vadd.f32 %v2365, %v2390
      %v2423 = vadd.f32 %v2365, %v2391
      %v2424 = vadd.f32 %v2365, %v2392
      %v2425 = vadd.f32 %v2365, %v2393
      %v2426 = vadd.f32 %v2365, %v2394
      %v2427 = vadd.f32 %v2365, %v2395
      %v2428 = vadd.f32 %v2365, %v2396
      %v2429 = vadd.f32 %v2365, %v2397
      %v2430 = vadd.f32 %v2365, %v2398
      %v2431 = vadd.f32 %v2365, %v2399
      %v2432 = vadd.f32 %v2365, %v2400
      %v2433 = vadd.f32 %v2365, %v2401
      %v2434 = vlaneseq
      %v2435 = vshrl.u32 %v2434, 7
      %v2436 = vsub.s32 1, %v2435
      %v2437 = vrot.slane %v2356, %v2436
      %v2438 = vmul.f32 %v2302, %v2437
      %v2439 = vmul.f32 %v2303, %v2437
      %v2440 = vmul.f32 %v2304, %v2437
      %v2441 = vmul.f32 %v2305, %v2437
      %v2442 = vmul.f32 %v2306, %v2437
      %v2443 = vmul.f32 %v2307, %v2437
      %v2444 = vmul.f32 %v2308, %v2437
      %v2445 = vmul.f32 %v2309, %v2437
      %v2446 = vmul.f32 %v2310, %v2437
      %v2447 = vmul.f32 %v2311, %v2437
      %v2448 = vmul.f32 %v2312, %v2437
      %v2449 = vmul.f32 %v2313, %v2437
      %v2450 = vmul.f32 %v2314, %v2437
      %v2451 = vmul.f32 %v2315, %v2437
      %v2452 = vmul.f32 %v2316, %v2437
      %v2453 = vmul.f32 %v2317, %v2437
      %v2454 = vmul.f32 %v2318, %v2437
      %v2455 = vmul.f32 %v2319, %v2437
      %v2456 = vmul.f32 %v2320, %v2437
      %v2457 = vmul.f32 %v2321, %v2437
      %v2458 = vmul.f32 %v2322, %v2437
      %v2459 = vmul.f32 %v2323, %v2437
      %v2460 = vmul.f32 %v2324, %v2437
      %v2461 = vmul.f32 %v2325, %v2437
      %v2462 = vmul.f32 %v2326, %v2437
      %v2463 = vmul.f32 %v2327, %v2437
      %v2464 = vmul.f32 %v2328, %v2437
      %v2465 = vmul.f32 %v2329, %v2437
      %v2466 = vmul.f32 %v2330, %v2437
      %v2467 = vmul.f32 %v2331, %v2437
      %v2468 = vmul.f32 %v2332, %v2437
      %v2469 = vmul.f32 %v2333, %v2437
      %v2470 = vmul.f32 %v2334, %v2437
      %v2471 = vmul.f32 %v2335, %v2437
      %v2472 = vmul.f32 %v2336, %v2437
      %v2473 = vmul.f32 %v2337, %v2437
      %v2474 = vmul.f32 %v2338, %v2437
      %v2475 = vmul.f32 %v2339, %v2437
      %v2476 = vmul.f32 %v2340, %v2437
      %v2477 = vmul.f32 %v2341, %v2437
      %v2478 = vmul.f32 %v2342, %v2437
      %v2479 = vmul.f32 %v2343, %v2437
      %v2480 = vmul.f32 %v2344, %v2437
      %v2481 = vmul.f32 %v2345, %v2437
      %v2482 = vmul.f32 %v2346, %v2437
      %v2483 = vmul.f32 %v2347, %v2437
      %v2484 = vmul.f32 %v2348, %v2437
      %v2485 = vmul.f32 %v2349, %v2437
      %vm2534 = vcmask 1046528
      %v2535 = vrot.slane %v2438, 1
      %v2536 = vrot.slane %v2439, 1
      %v2537 = vsel %vm2534, %v2535, %v2536
      %v2538 = vrot.slane %v2440, 1
      %v2539 = vsel %vm2534, %v2536, %v2538
      %v2540 = vrot.slane %v2441, 1
      %v2541 = vrot.slane %v2442, 1
      %v2542 = vsel %vm2534, %v2540, %v2541
      %v2543 = vrot.slane %v2443, 1
      %v2544 = vsel %vm2534, %v2541, %v2543
      %v2545 = vrot.slane %v2444, 1
      %v2546 = vrot.slane %v2445, 1
      %v2547 = vsel %vm2534, %v2545, %v2546
      %v2548 = vrot.slane %v2446, 1
      %v2549 = vsel %vm2534, %v2546, %v2548
      %v2550 = vrot.slane %v2447, 1
      %v2551 = vrot.slane %v2448, 1
      %v2552 = vsel %vm2534, %v2550, %v2551
      %v2553 = vrot.slane %v2449, 1
      %v2554 = vsel %vm2534, %v2551, %v2553
      %v2555 = vrot.slane %v2450, 1
      %v2556 = vrot.slane %v2451, 1
      %v2557 = vsel %vm2534, %v2555, %v2556
      %v2558 = vrot.slane %v2452, 1
      %v2559 = vsel %vm2534, %v2556, %v2558
      %v2560 = vrot.slane %v2453, 1
      %v2561 = vrot.slane %v2454, 1
      %v2562 = vsel %vm2534, %v2560, %v2561
      %v2563 = vrot.slane %v2455, 1
      %v2564 = vsel %vm2534, %v2561, %v2563
      %v2565 = vrot.slane %v2456, 1
      %v2566 = vrot.slane %v2457, 1
      %v2567 = vsel %vm2534, %v2565, %v2566
      %v2568 = vrot.slane %v2458, 1
      %v2569 = vsel %vm2534, %v2566, %v2568
      %v2570 = vrot.slane %v2459, 1
      %v2571 = vrot.slane %v2460, 1
      %v2572 = vsel %vm2534, %v2570, %v2571
      %v2573 = vrot.slane %v2461, 1
      %v2574 = vsel %vm2534, %v2571, %v2573
      %v2575 = vrot.slane %v2462, 1
      %v2576 = vrot.slane %v2463, 1
      %v2577 = vsel %vm2534, %v2575, %v2576
      %v2578 = vrot.slane %v2464, 1
      %v2579 = vsel %vm2534, %v2576, %v2578
      %v2580 = vrot.slane %v2465, 1
      %v2581 = vrot.slane %v2466, 1
      %v2582 = vsel %vm2534, %v2580, %v2581
      %v2583 = vrot.slane %v2467, 1
      %v2584 = vsel %vm2534, %v2581, %v2583
      %v2585 = vrot.slane %v2468, 1
      %v2586 = vrot.slane %v2469, 1
      %v2587 = vsel %vm2534, %v2585, %v2586
      %v2588 = vrot.slane %v2470, 1
      %v2589 = vsel %vm2534, %v2586, %v2588
      %v2590 = vrot.slane %v2471, 1
      %v2591 = vrot.slane %v2472, 1
      %v2592 = vsel %vm2534, %v2590, %v2591
      %v2593 = vrot.slane %v2473, 1
      %v2594 = vsel %vm2534, %v2591, %v2593
      %v2595 = vrot.slane %v2474, 1
      %v2596 = vrot.slane %v2475, 1
      %v2597 = vsel %vm2534, %v2595, %v2596
      %v2598 = vrot.slane %v2476, 1
      %v2599 = vsel %vm2534, %v2596, %v2598
      %v2600 = vrot.slane %v2477, 1
      %v2601 = vrot.slane %v2478, 1
      %v2602 = vsel %vm2534, %v2600, %v2601
      %v2603 = vrot.slane %v2479, 1
      %v2604 = vsel %vm2534, %v2601, %v2603
      %v2605 = vrot.slane %v2480, 1
      %v2606 = vrot.slane %v2481, 1
      %v2607 = vsel %vm2534, %v2605, %v2606
      %v2608 = vrot.slane %v2482, 1
      %v2609 = vsel %vm2534, %v2606, %v2608
      %v2610 = vrot.slane %v2483, 1
      %v2611 = vrot.slane %v2484, 1
      %v2612 = vsel %vm2534, %v2610, %v2611
      %v2613 = vrot.slane %v2485, 1
      %v2614 = vsel %vm2534, %v2611, %v2613
      %v2647 = vadd.f32 %v2402, %v2537
      %v2648 = vadd.f32 %v2403, %v2539
      %v2649 = vadd.f32 %v2404, %v2542
      %v2650 = vadd.f32 %v2405, %v2544
      %v2651 = vadd.f32 %v2406, %v2547
      %v2652 = vadd.f32 %v2407, %v2549
      %v2653 = vadd.f32 %v2408, %v2552
      %v2654 = vadd.f32 %v2409, %v2554
      %v2655 = vadd.f32 %v2410, %v2557
      %v2656 = vadd.f32 %v2411, %v2559
      %v2657 = vadd.f32 %v2412, %v2562
      %v2658 = vadd.f32 %v2413, %v2564
      %v2659 = vadd.f32 %v2414, %v2567
      %v2660 = vadd.f32 %v2415, %v2569
      %v2661 = vadd.f32 %v2416, %v2572
      %v2662 = vadd.f32 %v2417, %v2574
      %v2663 = vadd.f32 %v2418, %v2577
      %v2664 = vadd.f32 %v2419, %v2579
      %v2665 = vadd.f32 %v2420, %v2582
      %v2666 = vadd.f32 %v2421, %v2584
      %v2667 = vadd.f32 %v2422, %v2587
      %v2668 = vadd.f32 %v2423, %v2589
      %v2669 = vadd.f32 %v2424, %v2592
      %v2670 = vadd.f32 %v2425, %v2594
      %v2671 = vadd.f32 %v2426, %v2597
      %v2672 = vadd.f32 %v2427, %v2599
      %v2673 = vadd.f32 %v2428, %v2602
      %v2674 = vadd.f32 %v2429, %v2604
      %v2675 = vadd.f32 %v2430, %v2607
      %v2676 = vadd.f32 %v2431, %v2609
      %v2677 = vadd.f32 %v2432, %v2612
      %v2678 = vadd.f32 %v2433, %v2614
      %v2679 = vlaneseq
      %v2680 = vshrl.u32 %v2679, 7
      %v2681 = vsub.s32 2, %v2680
      %v2682 = vrot.slane %v2356, %v2681
      %v2683 = vmul.f32 %v2302, %v2682
      %v2684 = vmul.f32 %v2303, %v2682
      %v2685 = vmul.f32 %v2304, %v2682
      %v2686 = vmul.f32 %v2305, %v2682
      %v2687 = vmul.f32 %v2306, %v2682
      %v2688 = vmul.f32 %v2307, %v2682
      %v2689 = vmul.f32 %v2308, %v2682
      %v2690 = vmul.f32 %v2309, %v2682
      %v2691 = vmul.f32 %v2310, %v2682
      %v2692 = vmul.f32 %v2311, %v2682
      %v2693 = vmul.f32 %v2312, %v2682
      %v2694 = vmul.f32 %v2313, %v2682
      %v2695 = vmul.f32 %v2314, %v2682
      %v2696 = vmul.f32 %v2315, %v2682
      %v2697 = vmul.f32 %v2316, %v2682
      %v2698 = vmul.f32 %v2317, %v2682
      %v2699 = vmul.f32 %v2318, %v2682
      %v2700 = vmul.f32 %v2319, %v2682
      %v2701 = vmul.f32 %v2320, %v2682
      %v2702 = vmul.f32 %v2321, %v2682
      %v2703 = vmul.f32 %v2322, %v2682
      %v2704 = vmul.f32 %v2323, %v2682
      %v2705 = vmul.f32 %v2324, %v2682
      %v2706 = vmul.f32 %v2325, %v2682
      %v2707 = vmul.f32 %v2326, %v2682
      %v2708 = vmul.f32 %v2327, %v2682
      %v2709 = vmul.f32 %v2328, %v2682
      %v2710 = vmul.f32 %v2329, %v2682
      %v2711 = vmul.f32 %v2330, %v2682
      %v2712 = vmul.f32 %v2331, %v2682
      %v2713 = vmul.f32 %v2332, %v2682
      %v2714 = vmul.f32 %v2333, %v2682
      %v2715 = vmul.f32 %v2334, %v2682
      %v2716 = vmul.f32 %v2335, %v2682
      %v2717 = vmul.f32 %v2336, %v2682
      %v2718 = vmul.f32 %v2337, %v2682
      %v2719 = vmul.f32 %v2338, %v2682
      %v2720 = vmul.f32 %v2339, %v2682
      %v2721 = vmul.f32 %v2340, %v2682
      %v2722 = vmul.f32 %v2341, %v2682
      %v2723 = vmul.f32 %v2342, %v2682
      %v2724 = vmul.f32 %v2343, %v2682
      %v2725 = vmul.f32 %v2344, %v2682
      %v2726 = vmul.f32 %v2345, %v2682
      %v2727 = vmul.f32 %v2346, %v2682
      %v2728 = vmul.f32 %v2347, %v2682
      %v2729 = vmul.f32 %v2348, %v2682
      %v2730 = vmul.f32 %v2349, %v2682
      %vm2779 = vcmask 1045504
      %v2780 = vrot.slane %v2683, 2
      %v2781 = vrot.slane %v2684, 2
      %v2782 = vsel %vm2779, %v2780, %v2781
      %v2783 = vrot.slane %v2685, 2
      %v2784 = vsel %vm2779, %v2781, %v2783
      %v2785 = vrot.slane %v2686, 2
      %v2786 = vrot.slane %v2687, 2
      %v2787 = vsel %vm2779, %v2785, %v2786
      %v2788 = vrot.slane %v2688, 2
      %v2789 = vsel %vm2779, %v2786, %v2788
      %v2790 = vrot.slane %v2689, 2
      %v2791 = vrot.slane %v2690, 2
      %v2792 = vsel %vm2779, %v2790, %v2791
      %v2793 = vrot.slane %v2691, 2
      %v2794 = vsel %vm2779, %v2791, %v2793
      %v2795 = vrot.slane %v2692, 2
      %v2796 = vrot.slane %v2693, 2
      %v2797 = vsel %vm2779, %v2795, %v2796
      %v2798 = vrot.slane %v2694, 2
      %v2799 = vsel %vm2779, %v2796, %v2798
      %v2800 = vrot.slane %v2695, 2
      %v2801 = vrot.slane %v2696, 2
      %v2802 = vsel %vm2779, %v2800, %v2801
      %v2803 = vrot.slane %v2697, 2
      %v2804 = vsel %vm2779, %v2801, %v2803
      %v2805 = vrot.slane %v2698, 2
      %v2806 = vrot.slane %v2699, 2
      %v2807 = vsel %vm2779, %v2805, %v2806
      %v2808 = vrot.slane %v2700, 2
      %v2809 = vsel %vm2779, %v2806, %v2808
      %v2810 = vrot.slane %v2701, 2
      %v2811 = vrot.slane %v2702, 2
      %v2812 = vsel %vm2779, %v2810, %v2811
      %v2813 = vrot.slane %v2703, 2
      %v2814 = vsel %vm2779, %v2811, %v2813
      %v2815 = vrot.slane %v2704, 2
      %v2816 = vrot.slane %v2705, 2
      %v2817 = vsel %vm2779, %v2815, %v2816
      %v2818 = vrot.slane %v2706, 2
      %v2819 = vsel %vm2779, %v2816, %v2818
      %v2820 = vrot.slane %v2707, 2
      %v2821 = vrot.slane %v2708, 2
      %v2822 = vsel %vm2779, %v2820, %v2821
      %v2823 = vrot.slane %v2709, 2
      %v2824 = vsel %vm2779, %v2821, %v2823
      %v2825 = vrot.slane %v2710, 2
      %v2826 = vrot.slane %v2711, 2
      %v2827 = vsel %vm2779, %v2825, %v2826
      %v2828 = vrot.slane %v2712, 2
      %v2829 = vsel %vm2779, %v2826, %v2828
      %v2830 = vrot.slane %v2713, 2
      %v2831 = vrot.slane %v2714, 2
      %v2832 = vsel %vm2779, %v2830, %v2831
      %v2833 = vrot.slane %v2715, 2
      %v2834 = vsel %vm2779, %v2831, %v2833
      %v2835 = vrot.slane %v2716, 2
      %v2836 = vrot.slane %v2717, 2
      %v2837 = vsel %vm2779, %v2835, %v2836
      %v2838 = vrot.slane %v2718, 2
      %v2839 = vsel %vm2779, %v2836, %v2838
      %v2840 = vrot.slane %v2719, 2
      %v2841 = vrot.slane %v2720, 2
      %v2842 = vsel %vm2779, %v2840, %v2841
      %v2843 = vrot.slane %v2721, 2
      %v2844 = vsel %vm2779, %v2841, %v2843
      %v2845 = vrot.slane %v2722, 2
      %v2846 = vrot.slane %v2723, 2
      %v2847 = vsel %vm2779, %v2845, %v2846
      %v2848 = vrot.slane %v2724, 2
      %v2849 = vsel %vm2779, %v2846, %v2848
      %v2850 = vrot.slane %v2725, 2
      %v2851 = vrot.slane %v2726, 2
      %v2852 = vsel %vm2779, %v2850, %v2851
      %v2853 = vrot.slane %v2727, 2
      %v2854 = vsel %vm2779, %v2851, %v2853
      %v2855 = vrot.slane %v2728, 2
      %v2856 = vrot.slane %v2729, 2
      %v2857 = vsel %vm2779, %v2855, %v2856
      %v2858 = vrot.slane %v2730, 2
      %v2859 = vsel %vm2779, %v2856, %v2858
      %v2892 = vadd.f32 %v2647, %v2782
      %v2893 = vadd.f32 %v2648, %v2784
      %v2894 = vadd.f32 %v2649, %v2787
      %v2895 = vadd.f32 %v2650, %v2789
      %v2896 = vadd.f32 %v2651, %v2792
      %v2897 = vadd.f32 %v2652, %v2794
      %v2898 = vadd.f32 %v2653, %v2797
      %v2899 = vadd.f32 %v2654, %v2799
      %v2900 = vadd.f32 %v2655, %v2802
      %v2901 = vadd.f32 %v2656, %v2804
      %v2902 = vadd.f32 %v2657, %v2807
      %v2903 = vadd.f32 %v2658, %v2809
      %v2904 = vadd.f32 %v2659, %v2812
      %v2905 = vadd.f32 %v2660, %v2814
      %v2906 = vadd.f32 %v2661, %v2817
      %v2907 = vadd.f32 %v2662, %v2819
      %v2908 = vadd.f32 %v2663, %v2822
      %v2909 = vadd.f32 %v2664, %v2824
      %v2910 = vadd.f32 %v2665, %v2827
      %v2911 = vadd.f32 %v2666, %v2829
      %v2912 = vadd.f32 %v2667, %v2832
      %v2913 = vadd.f32 %v2668, %v2834
      %v2914 = vadd.f32 %v2669, %v2837
      %v2915 = vadd.f32 %v2670, %v2839
      %v2916 = vadd.f32 %v2671, %v2842
      %v2917 = vadd.f32 %v2672, %v2844
      %v2918 = vadd.f32 %v2673, %v2847
      %v2919 = vadd.f32 %v2674, %v2849
      %v2920 = vadd.f32 %v2675, %v2852
      %v2921 = vadd.f32 %v2676, %v2854
      %v2922 = vadd.f32 %v2677, %v2857
      %v2923 = vadd.f32 %v2678, %v2859
      %v2924 = vlaneseq
      %v2925 = vshrl.u32 %v2924, 7
      %v2926 = vsub.s32 3, %v2925
      %v2927 = vrot.slane %v2356, %v2926
      %v2928 = vmul.f32 %v2305, %v2927
      %v2929 = vmul.f32 %v2306, %v2927
      %v2930 = vmul.f32 %v2308, %v2927
      %v2931 = vmul.f32 %v2309, %v2927
      %v2932 = vmul.f32 %v2311, %v2927
      %v2933 = vmul.f32 %v2312, %v2927
      %v2934 = vmul.f32 %v2314, %v2927
      %v2935 = vmul.f32 %v2315, %v2927
      %v2936 = vmul.f32 %v2317, %v2927
      %v2937 = vmul.f32 %v2318, %v2927
      %v2938 = vmul.f32 %v2320, %v2927
      %v2939 = vmul.f32 %v2321, %v2927
      %v2940 = vmul.f32 %v2323, %v2927
      %v2941 = vmul.f32 %v2324, %v2927
      %v2942 = vmul.f32 %v2326, %v2927
      %v2943 = vmul.f32 %v2327, %v2927
      %v2944 = vmul.f32 %v2329, %v2927
      %v2945 = vmul.f32 %v2330, %v2927
      %v2946 = vmul.f32 %v2332, %v2927
      %v2947 = vmul.f32 %v2333, %v2927
      %v2948 = vmul.f32 %v2335, %v2927
      %v2949 = vmul.f32 %v2336, %v2927
      %v2950 = vmul.f32 %v2338, %v2927
      %v2951 = vmul.f32 %v2339, %v2927
      %v2952 = vmul.f32 %v2341, %v2927
      %v2953 = vmul.f32 %v2342, %v2927
      %v2954 = vmul.f32 %v2344, %v2927
      %v2955 = vmul.f32 %v2345, %v2927
      %v2956 = vmul.f32 %v2347, %v2927
      %v2957 = vmul.f32 %v2348, %v2927
      %v2958 = vmul.f32 %v2350, %v2927
      %v2959 = vmul.f32 %v2351, %v2927
      %v2960 = vadd.f32 %v2892, %v2928
      %v2961 = vadd.f32 %v2893, %v2929
      %v2962 = vadd.f32 %v2894, %v2930
      %v2963 = vadd.f32 %v2895, %v2931
      %v2964 = vadd.f32 %v2896, %v2932
      %v2965 = vadd.f32 %v2897, %v2933
      %v2966 = vadd.f32 %v2898, %v2934
      %v2967 = vadd.f32 %v2899, %v2935
      %v2968 = vadd.f32 %v2900, %v2936
      %v2969 = vadd.f32 %v2901, %v2937
      %v2970 = vadd.f32 %v2902, %v2938
      %v2971 = vadd.f32 %v2903, %v2939
      %v2972 = vadd.f32 %v2904, %v2940
      %v2973 = vadd.f32 %v2905, %v2941
      %v2974 = vadd.f32 %v2906, %v2942
      %v2975 = vadd.f32 %v2907, %v2943
      %v2976 = vadd.f32 %v2908, %v2944
      %v2977 = vadd.f32 %v2909, %v2945
      %v2978 = vadd.f32 %v2910, %v2946
      %v2979 = vadd.f32 %v2911, %v2947
      %v2980 = vadd.f32 %v2912, %v2948
      %v2981 = vadd.f32 %v2913, %v2949
      %v2982 = vadd.f32 %v2914, %v2950
      %v2983 = vadd.f32 %v2915, %v2951
      %v2984 = vadd.f32 %v2916, %v2952
      %v2985 = vadd.f32 %v2917, %v2953
      %v2986 = vadd.f32 %v2918, %v2954
      %v2987 = vadd.f32 %v2919, %v2955
      %v2988 = vadd.f32 %v2920, %v2956
      %v2989 = vadd.f32 %v2921, %v2957
      %v2990 = vadd.f32 %v2922, %v2958
      %v2991 = vadd.f32 %v2923, %v2959
      %v2992 = vlaneseq
      %v2993 = vshrl.u32 %v2992, 7
      %v2994 = vsub.s32 4, %v2993
      %v2995 = vrot.slane %v2356, %v2994
      %v2996 = vmul.f32 %v2305, %v2995
      %v2997 = vmul.f32 %v2306, %v2995
      %v2998 = vmul.f32 %v2307, %v2995
      %v2999 = vmul.f32 %v2308, %v2995
      %v3000 = vmul.f32 %v2309, %v2995
      %v3001 = vmul.f32 %v2310, %v2995
      %v3002 = vmul.f32 %v2311, %v2995
      %v3003 = vmul.f32 %v2312, %v2995
      %v3004 = vmul.f32 %v2313, %v2995
      %v3005 = vmul.f32 %v2314, %v2995
      %v3006 = vmul.f32 %v2315, %v2995
      %v3007 = vmul.f32 %v2316, %v2995
      %v3008 = vmul.f32 %v2317, %v2995
      %v3009 = vmul.f32 %v2318, %v2995
      %v3010 = vmul.f32 %v2319, %v2995
      %v3011 = vmul.f32 %v2320, %v2995
      %v3012 = vmul.f32 %v2321, %v2995
      %v3013 = vmul.f32 %v2322, %v2995
      %v3014 = vmul.f32 %v2323, %v2995
      %v3015 = vmul.f32 %v2324, %v2995
      %v3016 = vmul.f32 %v2325, %v2995
      %v3017 = vmul.f32 %v2326, %v2995
      %v3018 = vmul.f32 %v2327, %v2995
      %v3019 = vmul.f32 %v2328, %v2995
      %v3020 = vmul.f32 %v2329, %v2995
      %v3021 = vmul.f32 %v2330, %v2995
      %v3022 = vmul.f32 %v2331, %v2995
      %v3023 = vmul.f32 %v2332, %v2995
      %v3024 = vmul.f32 %v2333, %v2995
      %v3025 = vmul.f32 %v2334, %v2995
      %v3026 = vmul.f32 %v2335, %v2995
      %v3027 = vmul.f32 %v2336, %v2995
      %v3028 = vmul.f32 %v2337, %v2995
      %v3029 = vmul.f32 %v2338, %v2995
      %v3030 = vmul.f32 %v2339, %v2995
      %v3031 = vmul.f32 %v2340, %v2995
      %v3032 = vmul.f32 %v2341, %v2995
      %v3033 = vmul.f32 %v2342, %v2995
      %v3034 = vmul.f32 %v2343, %v2995
      %v3035 = vmul.f32 %v2344, %v2995
      %v3036 = vmul.f32 %v2345, %v2995
      %v3037 = vmul.f32 %v2346, %v2995
      %v3038 = vmul.f32 %v2347, %v2995
      %v3039 = vmul.f32 %v2348, %v2995
      %v3040 = vmul.f32 %v2349, %v2995
      %v3041 = vmul.f32 %v2350, %v2995
      %v3042 = vmul.f32 %v2351, %v2995
      %v3043 = vmul.f32 %v2352, %v2995
      %v3092 = vrot.slane %v2996, 1
      %v3093 = vrot.slane %v2997, 1
      %v3094 = vsel %vm2534, %v3092, %v3093
      %v3095 = vrot.slane %v2998, 1
      %v3096 = vsel %vm2534, %v3093, %v3095
      %v3097 = vrot.slane %v2999, 1
      %v3098 = vrot.slane %v3000, 1
      %v3099 = vsel %vm2534, %v3097, %v3098
      %v3100 = vrot.slane %v3001, 1
      %v3101 = vsel %vm2534, %v3098, %v3100
      %v3102 = vrot.slane %v3002, 1
      %v3103 = vrot.slane %v3003, 1
      %v3104 = vsel %vm2534, %v3102, %v3103
      %v3105 = vrot.slane %v3004, 1
      %v3106 = vsel %vm2534, %v3103, %v3105
      %v3107 = vrot.slane %v3005, 1
      %v3108 = vrot.slane %v3006, 1
      %v3109 = vsel %vm2534, %v3107, %v3108
      %v3110 = vrot.slane %v3007, 1
      %v3111 = vsel %vm2534, %v3108, %v3110
      %v3112 = vrot.slane %v3008, 1
      %v3113 = vrot.slane %v3009, 1
      %v3114 = vsel %vm2534, %v3112, %v3113
      %v3115 = vrot.slane %v3010, 1
      %v3116 = vsel %vm2534, %v3113, %v3115
      %v3117 = vrot.slane %v3011, 1
      %v3118 = vrot.slane %v3012, 1
      %v3119 = vsel %vm2534, %v3117, %v3118
      %v3120 = vrot.slane %v3013, 1
      %v3121 = vsel %vm2534, %v3118, %v3120
      %v3122 = vrot.slane %v3014, 1
      %v3123 = vrot.slane %v3015, 1
      %v3124 = vsel %vm2534, %v3122, %v3123
      %v3125 = vrot.slane %v3016, 1
      %v3126 = vsel %vm2534, %v3123, %v3125
      %v3127 = vrot.slane %v3017, 1
      %v3128 = vrot.slane %v3018, 1
      %v3129 = vsel %vm2534, %v3127, %v3128
      %v3130 = vrot.slane %v3019, 1
      %v3131 = vsel %vm2534, %v3128, %v3130
      %v3132 = vrot.slane %v3020, 1
      %v3133 = vrot.slane %v3021, 1
      %v3134 = vsel %vm2534, %v3132, %v3133
      %v3135 = vrot.slane %v3022, 1
      %v3136 = vsel %vm2534, %v3133, %v3135
      %v3137 = vrot.slane %v3023, 1
      %v3138 = vrot.slane %v3024, 1
      %v3139 = vsel %vm2534, %v3137, %v3138
      %v3140 = vrot.slane %v3025, 1
      %v3141 = vsel %vm2534, %v3138, %v3140
      %v3142 = vrot.slane %v3026, 1
      %v3143 = vrot.slane %v3027, 1
      %v3144 = vsel %vm2534, %v3142, %v3143
      %v3145 = vrot.slane %v3028, 1
      %v3146 = vsel %vm2534, %v3143, %v3145
      %v3147 = vrot.slane %v3029, 1
      %v3148 = vrot.slane %v3030, 1
      %v3149 = vsel %vm2534, %v3147, %v3148
      %v3150 = vrot.slane %v3031, 1
      %v3151 = vsel %vm2534, %v3148, %v3150
      %v3152 = vrot.slane %v3032, 1
      %v3153 = vrot.slane %v3033, 1
      %v3154 = vsel %vm2534, %v3152, %v3153
      %v3155 = vrot.slane %v3034, 1
      %v3156 = vsel %vm2534, %v3153, %v3155
      %v3157 = vrot.slane %v3035, 1
      %v3158 = vrot.slane %v3036, 1
      %v3159 = vsel %vm2534, %v3157, %v3158
      %v3160 = vrot.slane %v3037, 1
      %v3161 = vsel %vm2534, %v3158, %v3160
      %v3162 = vrot.slane %v3038, 1
      %v3163 = vrot.slane %v3039, 1
      %v3164 = vsel %vm2534, %v3162, %v3163
      %v3165 = vrot.slane %v3040, 1
      %v3166 = vsel %vm2534, %v3163, %v3165
      %v3167 = vrot.slane %v3041, 1
      %v3168 = vrot.slane %v3042, 1
      %v3169 = vsel %vm2534, %v3167, %v3168
      %v3170 = vrot.slane %v3043, 1
      %v3171 = vsel %vm2534, %v3168, %v3170
      %v3204 = vadd.f32 %v2960, %v3094
      %v3205 = vadd.f32 %v2961, %v3096
      %v3206 = vadd.f32 %v2962, %v3099
      %v3207 = vadd.f32 %v2963, %v3101
      %v3208 = vadd.f32 %v2964, %v3104
      %v3209 = vadd.f32 %v2965, %v3106
      %v3210 = vadd.f32 %v2966, %v3109
      %v3211 = vadd.f32 %v2967, %v3111
      %v3212 = vadd.f32 %v2968, %v3114
      %v3213 = vadd.f32 %v2969, %v3116
      %v3214 = vadd.f32 %v2970, %v3119
      %v3215 = vadd.f32 %v2971, %v3121
      %v3216 = vadd.f32 %v2972, %v3124
      %v3217 = vadd.f32 %v2973, %v3126
      %v3218 = vadd.f32 %v2974, %v3129
      %v3219 = vadd.f32 %v2975, %v3131
      %v3220 = vadd.f32 %v2976, %v3134
      %v3221 = vadd.f32 %v2977, %v3136
      %v3222 = vadd.f32 %v2978, %v3139
      %v3223 = vadd.f32 %v2979, %v3141
      %v3224 = vadd.f32 %v2980, %v3144
      %v3225 = vadd.f32 %v2981, %v3146
      %v3226 = vadd.f32 %v2982, %v3149
      %v3227 = vadd.f32 %v2983, %v3151
      %v3228 = vadd.f32 %v2984, %v3154
      %v3229 = vadd.f32 %v2985, %v3156
      %v3230 = vadd.f32 %v2986, %v3159
      %v3231 = vadd.f32 %v2987, %v3161
      %v3232 = vadd.f32 %v2988, %v3164
      %v3233 = vadd.f32 %v2989, %v3166
      %v3234 = vadd.f32 %v2990, %v3169
      %v3235 = vadd.f32 %v2991, %v3171
      %v3236 = vlaneseq
      %v3237 = vshrl.u32 %v3236, 7
      %v3238 = vsub.s32 5, %v3237
      %v3239 = vrot.slane %v2356, %v3238
      %v3240 = vmul.f32 %v2305, %v3239
      %v3241 = vmul.f32 %v2306, %v3239
      %v3242 = vmul.f32 %v2307, %v3239
      %v3243 = vmul.f32 %v2308, %v3239
      %v3244 = vmul.f32 %v2309, %v3239
      %v3245 = vmul.f32 %v2310, %v3239
      %v3246 = vmul.f32 %v2311, %v3239
      %v3247 = vmul.f32 %v2312, %v3239
      %v3248 = vmul.f32 %v2313, %v3239
      %v3249 = vmul.f32 %v2314, %v3239
      %v3250 = vmul.f32 %v2315, %v3239
      %v3251 = vmul.f32 %v2316, %v3239
      %v3252 = vmul.f32 %v2317, %v3239
      %v3253 = vmul.f32 %v2318, %v3239
      %v3254 = vmul.f32 %v2319, %v3239
      %v3255 = vmul.f32 %v2320, %v3239
      %v3256 = vmul.f32 %v2321, %v3239
      %v3257 = vmul.f32 %v2322, %v3239
      %v3258 = vmul.f32 %v2323, %v3239
      %v3259 = vmul.f32 %v2324, %v3239
      %v3260 = vmul.f32 %v2325, %v3239
      %v3261 = vmul.f32 %v2326, %v3239
      %v3262 = vmul.f32 %v2327, %v3239
      %v3263 = vmul.f32 %v2328, %v3239
      %v3264 = vmul.f32 %v2329, %v3239
      %v3265 = vmul.f32 %v2330, %v3239
      %v3266 = vmul.f32 %v2331, %v3239
      %v3267 = vmul.f32 %v2332, %v3239
      %v3268 = vmul.f32 %v2333, %v3239
      %v3269 = vmul.f32 %v2334, %v3239
      %v3270 = vmul.f32 %v2335, %v3239
      %v3271 = vmul.f32 %v2336, %v3239
      %v3272 = vmul.f32 %v2337, %v3239
      %v3273 = vmul.f32 %v2338, %v3239
      %v3274 = vmul.f32 %v2339, %v3239
      %v3275 = vmul.f32 %v2340, %v3239
      %v3276 = vmul.f32 %v2341, %v3239
      %v3277 = vmul.f32 %v2342, %v3239
      %v3278 = vmul.f32 %v2343, %v3239
      %v3279 = vmul.f32 %v2344, %v3239
      %v3280 = vmul.f32 %v2345, %v3239
      %v3281 = vmul.f32 %v2346, %v3239
      %v3282 = vmul.f32 %v2347, %v3239
      %v3283 = vmul.f32 %v2348, %v3239
      %v3284 = vmul.f32 %v2349, %v3239
      %v3285 = vmul.f32 %v2350, %v3239
      %v3286 = vmul.f32 %v2351, %v3239
      %v3287 = vmul.f32 %v2352, %v3239
      %v3336 = vrot.slane %v3240, 2
      %v3337 = vrot.slane %v3241, 2
      %v3338 = vsel %vm2779, %v3336, %v3337
      %v3339 = vrot.slane %v3242, 2
      %v3340 = vsel %vm2779, %v3337, %v3339
      %v3341 = vrot.slane %v3243, 2
      %v3342 = vrot.slane %v3244, 2
      %v3343 = vsel %vm2779, %v3341, %v3342
      %v3344 = vrot.slane %v3245, 2
      %v3345 = vsel %vm2779, %v3342, %v3344
      %v3346 = vrot.slane %v3246, 2
      %v3347 = vrot.slane %v3247, 2
      %v3348 = vsel %vm2779, %v3346, %v3347
      %v3349 = vrot.slane %v3248, 2
      %v3350 = vsel %vm2779, %v3347, %v3349
      %v3351 = vrot.slane %v3249, 2
      %v3352 = vrot.slane %v3250, 2
      %v3353 = vsel %vm2779, %v3351, %v3352
      %v3354 = vrot.slane %v3251, 2
      %v3355 = vsel %vm2779, %v3352, %v3354
      %v3356 = vrot.slane %v3252, 2
      %v3357 = vrot.slane %v3253, 2
      %v3358 = vsel %vm2779, %v3356, %v3357
      %v3359 = vrot.slane %v3254, 2
      %v3360 = vsel %vm2779, %v3357, %v3359
      %v3361 = vrot.slane %v3255, 2
      %v3362 = vrot.slane %v3256, 2
      %v3363 = vsel %vm2779, %v3361, %v3362
      %v3364 = vrot.slane %v3257, 2
      %v3365 = vsel %vm2779, %v3362, %v3364
      %v3366 = vrot.slane %v3258, 2
      %v3367 = vrot.slane %v3259, 2
      %v3368 = vsel %vm2779, %v3366, %v3367
      %v3369 = vrot.slane %v3260, 2
      %v3370 = vsel %vm2779, %v3367, %v3369
      %v3371 = vrot.slane %v3261, 2
      %v3372 = vrot.slane %v3262, 2
      %v3373 = vsel %vm2779, %v3371, %v3372
      %v3374 = vrot.slane %v3263, 2
      %v3375 = vsel %vm2779, %v3372, %v3374
      %v3376 = vrot.slane %v3264, 2
      %v3377 = vrot.slane %v3265, 2
      %v3378 = vsel %vm2779, %v3376, %v3377
      %v3379 = vrot.slane %v3266, 2
      %v3380 = vsel %vm2779, %v3377, %v3379
      %v3381 = vrot.slane %v3267, 2
      %v3382 = vrot.slane %v3268, 2
      %v3383 = vsel %vm2779, %v3381, %v3382
      %v3384 = vrot.slane %v3269, 2
      %v3385 = vsel %vm2779, %v3382, %v3384
      %v3386 = vrot.slane %v3270, 2
      %v3387 = vrot.slane %v3271, 2
      %v3388 = vsel %vm2779, %v3386, %v3387
      %v3389 = vrot.slane %v3272, 2
      %v3390 = vsel %vm2779, %v3387, %v3389
      %v3391 = vrot.slane %v3273, 2
      %v3392 = vrot.slane %v3274, 2
      %v3393 = vsel %vm2779, %v3391, %v3392
      %v3394 = vrot.slane %v3275, 2
      %v3395 = vsel %vm2779, %v3392, %v3394
      %v3396 = vrot.slane %v3276, 2
      %v3397 = vrot.slane %v3277, 2
      %v3398 = vsel %vm2779, %v3396, %v3397
      %v3399 = vrot.slane %v3278, 2
      %v3400 = vsel %vm2779, %v3397, %v3399
      %v3401 = vrot.slane %v3279, 2
      %v3402 = vrot.slane %v3280, 2
      %v3403 = vsel %vm2779, %v3401, %v3402
      %v3404 = vrot.slane %v3281, 2
      %v3405 = vsel %vm2779, %v3402, %v3404
      %v3406 = vrot.slane %v3282, 2
      %v3407 = vrot.slane %v3283, 2
      %v3408 = vsel %vm2779, %v3406, %v3407
      %v3409 = vrot.slane %v3284, 2
      %v3410 = vsel %vm2779, %v3407, %v3409
      %v3411 = vrot.slane %v3285, 2
      %v3412 = vrot.slane %v3286, 2
      %v3413 = vsel %vm2779, %v3411, %v3412
      %v3414 = vrot.slane %v3287, 2
      %v3415 = vsel %vm2779, %v3412, %v3414
      %v3448 = vadd.f32 %v3204, %v3338
      %v3449 = vadd.f32 %v3205, %v3340
      %v3450 = vadd.f32 %v3206, %v3343
      %v3451 = vadd.f32 %v3207, %v3345
      %v3452 = vadd.f32 %v3208, %v3348
      %v3453 = vadd.f32 %v3209, %v3350
      %v3454 = vadd.f32 %v3210, %v3353
      %v3455 = vadd.f32 %v3211, %v3355
      %v3456 = vadd.f32 %v3212, %v3358
      %v3457 = vadd.f32 %v3213, %v3360
      %v3458 = vadd.f32 %v3214, %v3363
      %v3459 = vadd.f32 %v3215, %v3365
      %v3460 = vadd.f32 %v3216, %v3368
      %v3461 = vadd.f32 %v3217, %v3370
      %v3462 = vadd.f32 %v3218, %v3373
      %v3463 = vadd.f32 %v3219, %v3375
      %v3464 = vadd.f32 %v3220, %v3378
      %v3465 = vadd.f32 %v3221, %v3380
      %v3466 = vadd.f32 %v3222, %v3383
      %v3467 = vadd.f32 %v3223, %v3385
      %v3468 = vadd.f32 %v3224, %v3388
      %v3469 = vadd.f32 %v3225, %v3390
      %v3470 = vadd.f32 %v3226, %v3393
      %v3471 = vadd.f32 %v3227, %v3395
      %v3472 = vadd.f32 %v3228, %v3398
      %v3473 = vadd.f32 %v3229, %v3400
      %v3474 = vadd.f32 %v3230, %v3403
      %v3475 = vadd.f32 %v3231, %v3405
      %v3476 = vadd.f32 %v3232, %v3408
      %v3477 = vadd.f32 %v3233, %v3410
      %v3478 = vadd.f32 %v3234, %v3413
      %v3479 = vadd.f32 %v3235, %v3415
      %v3480 = vlaneseq
      %v3481 = vshrl.u32 %v3480, 7
      %v3482 = vsub.s32 6, %v3481
      %v3483 = vrot.slane %v2356, %v3482
      %v3484 = vmul.f32 %v2308, %v3483
      %v3485 = vmul.f32 %v2309, %v3483
      %v3486 = vmul.f32 %v2311, %v3483
      %v3487 = vmul.f32 %v2312, %v3483
      %v3488 = vmul.f32 %v2314, %v3483
      %v3489 = vmul.f32 %v2315, %v3483
      %v3490 = vmul.f32 %v2317, %v3483
      %v3491 = vmul.f32 %v2318, %v3483
      %v3492 = vmul.f32 %v2320, %v3483
      %v3493 = vmul.f32 %v2321, %v3483
      %v3494 = vmul.f32 %v2323, %v3483
      %v3495 = vmul.f32 %v2324, %v3483
      %v3496 = vmul.f32 %v2326, %v3483
      %v3497 = vmul.f32 %v2327, %v3483
      %v3498 = vmul.f32 %v2329, %v3483
      %v3499 = vmul.f32 %v2330, %v3483
      %v3500 = vmul.f32 %v2332, %v3483
      %v3501 = vmul.f32 %v2333, %v3483
      %v3502 = vmul.f32 %v2335, %v3483
      %v3503 = vmul.f32 %v2336, %v3483
      %v3504 = vmul.f32 %v2338, %v3483
      %v3505 = vmul.f32 %v2339, %v3483
      %v3506 = vmul.f32 %v2341, %v3483
      %v3507 = vmul.f32 %v2342, %v3483
      %v3508 = vmul.f32 %v2344, %v3483
      %v3509 = vmul.f32 %v2345, %v3483
      %v3510 = vmul.f32 %v2347, %v3483
      %v3511 = vmul.f32 %v2348, %v3483
      %v3512 = vmul.f32 %v2350, %v3483
      %v3513 = vmul.f32 %v2351, %v3483
      %v3514 = vmul.f32 %v2353, %v3483
      %v3515 = vmul.f32 %v2354, %v3483
      %v3516 = vadd.f32 %v3448, %v3484
      %v3517 = vadd.f32 %v3449, %v3485
      %v3518 = vadd.f32 %v3450, %v3486
      %v3519 = vadd.f32 %v3451, %v3487
      %v3520 = vadd.f32 %v3452, %v3488
      %v3521 = vadd.f32 %v3453, %v3489
      %v3522 = vadd.f32 %v3454, %v3490
      %v3523 = vadd.f32 %v3455, %v3491
      %v3524 = vadd.f32 %v3456, %v3492
      %v3525 = vadd.f32 %v3457, %v3493
      %v3526 = vadd.f32 %v3458, %v3494
      %v3527 = vadd.f32 %v3459, %v3495
      %v3528 = vadd.f32 %v3460, %v3496
      %v3529 = vadd.f32 %v3461, %v3497
      %v3530 = vadd.f32 %v3462, %v3498
      %v3531 = vadd.f32 %v3463, %v3499
      %v3532 = vadd.f32 %v3464, %v3500
      %v3533 = vadd.f32 %v3465, %v3501
      %v3534 = vadd.f32 %v3466, %v3502
      %v3535 = vadd.f32 %v3467, %v3503
      %v3536 = vadd.f32 %v3468, %v3504
      %v3537 = vadd.f32 %v3469, %v3505
      %v3538 = vadd.f32 %v3470, %v3506
      %v3539 = vadd.f32 %v3471, %v3507
      %v3540 = vadd.f32 %v3472, %v3508
      %v3541 = vadd.f32 %v3473, %v3509
      %v3542 = vadd.f32 %v3474, %v3510
      %v3543 = vadd.f32 %v3475, %v3511
      %v3544 = vadd.f32 %v3476, %v3512
      %v3545 = vadd.f32 %v3477, %v3513
      %v3546 = vadd.f32 %v3478, %v3514
      %v3547 = vadd.f32 %v3479, %v3515
      %v3548 = vlaneseq
      %v3549 = vshrl.u32 %v3548, 7
      %v3550 = vsub.s32 7, %v3549
      %v3551 = vrot.slane %v2356, %v3550
      %v3552 = vmul.f32 %v2308, %v3551
      %v3553 = vmul.f32 %v2309, %v3551
      %v3554 = vmul.f32 %v2310, %v3551
      %v3555 = vmul.f32 %v2311, %v3551
      %v3556 = vmul.f32 %v2312, %v3551
      %v3557 = vmul.f32 %v2313, %v3551
      %v3558 = vmul.f32 %v2314, %v3551
      %v3559 = vmul.f32 %v2315, %v3551
      %v3560 = vmul.f32 %v2316, %v3551
      %v3561 = vmul.f32 %v2317, %v3551
      %v3562 = vmul.f32 %v2318, %v3551
      %v3563 = vmul.f32 %v2319, %v3551
      %v3564 = vmul.f32 %v2320, %v3551
      %v3565 = vmul.f32 %v2321, %v3551
      %v3566 = vmul.f32 %v2322, %v3551
      %v3567 = vmul.f32 %v2323, %v3551
      %v3568 = vmul.f32 %v2324, %v3551
      %v3569 = vmul.f32 %v2325, %v3551
      %v3570 = vmul.f32 %v2326, %v3551
      %v3571 = vmul.f32 %v2327, %v3551
      %v3572 = vmul.f32 %v2328, %v3551
      %v3573 = vmul.f32 %v2329, %v3551
      %v3574 = vmul.f32 %v2330, %v3551
      %v3575 = vmul.f32 %v2331, %v3551
      %v3576 = vmul.f32 %v2332, %v3551
      %v3577 = vmul.f32 %v2333, %v3551
      %v3578 = vmul.f32 %v2334, %v3551
      %v3579 = vmul.f32 %v2335, %v3551
      %v3580 = vmul.f32 %v2336, %v3551
      %v3581 = vmul.f32 %v2337, %v3551
      %v3582 = vmul.f32 %v2338, %v3551
      %v3583 = vmul.f32 %v2339, %v3551
      %v3584 = vmul.f32 %v2340, %v3551
      %v3585 = vmul.f32 %v2341, %v3551
      %v3586 = vmul.f32 %v2342, %v3551
      %v3587 = vmul.f32 %v2343, %v3551
      %v3588 = vmul.f32 %v2344, %v3551
      %v3589 = vmul.f32 %v2345, %v3551
      %v3590 = vmul.f32 %v2346, %v3551
      %v3591 = vmul.f32 %v2347, %v3551
      %v3592 = vmul.f32 %v2348, %v3551
      %v3593 = vmul.f32 %v2349, %v3551
      %v3594 = vmul.f32 %v2350, %v3551
      %v3595 = vmul.f32 %v2351, %v3551
      %v3596 = vmul.f32 %v2352, %v3551
      %v3597 = vmul.f32 %v2353, %v3551
      %v3598 = vmul.f32 %v2354, %v3551
      %v3599 = vmul.f32 %v2355, %v3551
      %v3648 = vrot.slane %v3552, 1
      %v3649 = vrot.slane %v3553, 1
      %v3650 = vsel %vm2534, %v3648, %v3649
      %v3651 = vrot.slane %v3554, 1
      %v3652 = vsel %vm2534, %v3649, %v3651
      %v3653 = vrot.slane %v3555, 1
      %v3654 = vrot.slane %v3556, 1
      %v3655 = vsel %vm2534, %v3653, %v3654
      %v3656 = vrot.slane %v3557, 1
      %v3657 = vsel %vm2534, %v3654, %v3656
      %v3658 = vrot.slane %v3558, 1
      %v3659 = vrot.slane %v3559, 1
      %v3660 = vsel %vm2534, %v3658, %v3659
      %v3661 = vrot.slane %v3560, 1
      %v3662 = vsel %vm2534, %v3659, %v3661
      %v3663 = vrot.slane %v3561, 1
      %v3664 = vrot.slane %v3562, 1
      %v3665 = vsel %vm2534, %v3663, %v3664
      %v3666 = vrot.slane %v3563, 1
      %v3667 = vsel %vm2534, %v3664, %v3666
      %v3668 = vrot.slane %v3564, 1
      %v3669 = vrot.slane %v3565, 1
      %v3670 = vsel %vm2534, %v3668, %v3669
      %v3671 = vrot.slane %v3566, 1
      %v3672 = vsel %vm2534, %v3669, %v3671
      %v3673 = vrot.slane %v3567, 1
      %v3674 = vrot.slane %v3568, 1
      %v3675 = vsel %vm2534, %v3673, %v3674
      %v3676 = vrot.slane %v3569, 1
      %v3677 = vsel %vm2534, %v3674, %v3676
      %v3678 = vrot.slane %v3570, 1
      %v3679 = vrot.slane %v3571, 1
      %v3680 = vsel %vm2534, %v3678, %v3679
      %v3681 = vrot.slane %v3572, 1
      %v3682 = vsel %vm2534, %v3679, %v3681
      %v3683 = vrot.slane %v3573, 1
      %v3684 = vrot.slane %v3574, 1
      %v3685 = vsel %vm2534, %v3683, %v3684
      %v3686 = vrot.slane %v3575, 1
      %v3687 = vsel %vm2534, %v3684, %v3686
      %v3688 = vrot.slane %v3576, 1
      %v3689 = vrot.slane %v3577, 1
      %v3690 = vsel %vm2534, %v3688, %v3689
      %v3691 = vrot.slane %v3578, 1
      %v3692 = vsel %vm2534, %v3689, %v3691
      %v3693 = vrot.slane %v3579, 1
      %v3694 = vrot.slane %v3580, 1
      %v3695 = vsel %vm2534, %v3693, %v3694
      %v3696 = vrot.slane %v3581, 1
      %v3697 = vsel %vm2534, %v3694, %v3696
      %v3698 = vrot.slane %v3582, 1
      %v3699 = vrot.slane %v3583, 1
      %v3700 = vsel %vm2534, %v3698, %v3699
      %v3701 = vrot.slane %v3584, 1
      %v3702 = vsel %vm2534, %v3699, %v3701
      %v3703 = vrot.slane %v3585, 1
      %v3704 = vrot.slane %v3586, 1
      %v3705 = vsel %vm2534, %v3703, %v3704
      %v3706 = vrot.slane %v3587, 1
      %v3707 = vsel %vm2534, %v3704, %v3706
      %v3708 = vrot.slane %v3588, 1
      %v3709 = vrot.slane %v3589, 1
      %v3710 = vsel %vm2534, %v3708, %v3709
      %v3711 = vrot.slane %v3590, 1
      %v3712 = vsel %vm2534, %v3709, %v3711
      %v3713 = vrot.slane %v3591, 1
      %v3714 = vrot.slane %v3592, 1
      %v3715 = vsel %vm2534, %v3713, %v3714
      %v3716 = vrot.slane %v3593, 1
      %v3717 = vsel %vm2534, %v3714, %v3716
      %v3718 = vrot.slane %v3594, 1
      %v3719 = vrot.slane %v3595, 1
      %v3720 = vsel %vm2534, %v3718, %v3719
      %v3721 = vrot.slane %v3596, 1
      %v3722 = vsel %vm2534, %v3719, %v3721
      %v3723 = vrot.slane %v3597, 1
      %v3724 = vrot.slane %v3598, 1
      %v3725 = vsel %vm2534, %v3723, %v3724
      %v3726 = vrot.slane %v3599, 1
      %v3727 = vsel %vm2534, %v3724, %v3726
      %v3760 = vadd.f32 %v3516, %v3650
      %v3761 = vadd.f32 %v3517, %v3652
      %v3762 = vadd.f32 %v3518, %v3655
      %v3763 = vadd.f32 %v3519, %v3657
      %v3764 = vadd.f32 %v3520, %v3660
      %v3765 = vadd.f32 %v3521, %v3662
      %v3766 = vadd.f32 %v3522, %v3665
      %v3767 = vadd.f32 %v3523, %v3667
      %v3768 = vadd.f32 %v3524, %v3670
      %v3769 = vadd.f32 %v3525, %v3672
      %v3770 = vadd.f32 %v3526, %v3675
      %v3771 = vadd.f32 %v3527, %v3677
      %v3772 = vadd.f32 %v3528, %v3680
      %v3773 = vadd.f32 %v3529, %v3682
      %v3774 = vadd.f32 %v3530, %v3685
      %v3775 = vadd.f32 %v3531, %v3687
      %v3776 = vadd.f32 %v3532, %v3690
      %v3777 = vadd.f32 %v3533, %v3692
      %v3778 = vadd.f32 %v3534, %v3695
      %v3779 = vadd.f32 %v3535, %v3697
      %v3780 = vadd.f32 %v3536, %v3700
      %v3781 = vadd.f32 %v3537, %v3702
      %v3782 = vadd.f32 %v3538, %v3705
      %v3783 = vadd.f32 %v3539, %v3707
      %v3784 = vadd.f32 %v3540, %v3710
      %v3785 = vadd.f32 %v3541, %v3712
      %v3786 = vadd.f32 %v3542, %v3715
      %v3787 = vadd.f32 %v3543, %v3717
      %v3788 = vadd.f32 %v3544, %v3720
      %v3789 = vadd.f32 %v3545, %v3722
      %v3790 = vadd.f32 %v3546, %v3725
      %v3791 = vadd.f32 %v3547, %v3727
      %v3792 = vlaneseq
      %v3793 = vshrl.u32 %v3792, 7
      %v3794 = vsub.s32 0, %v3793
      %v3795 = vrot.slane %v2357, %v3794
      %v3796 = vmul.f32 %v2308, %v3795
      %v3797 = vmul.f32 %v2309, %v3795
      %v3798 = vmul.f32 %v2310, %v3795
      %v3799 = vmul.f32 %v2311, %v3795
      %v3800 = vmul.f32 %v2312, %v3795
      %v3801 = vmul.f32 %v2313, %v3795
      %v3802 = vmul.f32 %v2314, %v3795
      %v3803 = vmul.f32 %v2315, %v3795
      %v3804 = vmul.f32 %v2316, %v3795
      %v3805 = vmul.f32 %v2317, %v3795
      %v3806 = vmul.f32 %v2318, %v3795
      %v3807 = vmul.f32 %v2319, %v3795
      %v3808 = vmul.f32 %v2320, %v3795
      %v3809 = vmul.f32 %v2321, %v3795
      %v3810 = vmul.f32 %v2322, %v3795
      %v3811 = vmul.f32 %v2323, %v3795
      %v3812 = vmul.f32 %v2324, %v3795
      %v3813 = vmul.f32 %v2325, %v3795
      %v3814 = vmul.f32 %v2326, %v3795
      %v3815 = vmul.f32 %v2327, %v3795
      %v3816 = vmul.f32 %v2328, %v3795
      %v3817 = vmul.f32 %v2329, %v3795
      %v3818 = vmul.f32 %v2330, %v3795
      %v3819 = vmul.f32 %v2331, %v3795
      %v3820 = vmul.f32 %v2332, %v3795
      %v3821 = vmul.f32 %v2333, %v3795
      %v3822 = vmul.f32 %v2334, %v3795
      %v3823 = vmul.f32 %v2335, %v3795
      %v3824 = vmul.f32 %v2336, %v3795
      %v3825 = vmul.f32 %v2337, %v3795
      %v3826 = vmul.f32 %v2338, %v3795
      %v3827 = vmul.f32 %v2339, %v3795
      %v3828 = vmul.f32 %v2340, %v3795
      %v3829 = vmul.f32 %v2341, %v3795
      %v3830 = vmul.f32 %v2342, %v3795
      %v3831 = vmul.f32 %v2343, %v3795
      %v3832 = vmul.f32 %v2344, %v3795
      %v3833 = vmul.f32 %v2345, %v3795
      %v3834 = vmul.f32 %v2346, %v3795
      %v3835 = vmul.f32 %v2347, %v3795
      %v3836 = vmul.f32 %v2348, %v3795
      %v3837 = vmul.f32 %v2349, %v3795
      %v3838 = vmul.f32 %v2350, %v3795
      %v3839 = vmul.f32 %v2351, %v3795
      %v3840 = vmul.f32 %v2352, %v3795
      %v3841 = vmul.f32 %v2353, %v3795
      %v3842 = vmul.f32 %v2354, %v3795
      %v3843 = vmul.f32 %v2355, %v3795
      %v3892 = vrot.slane %v3796, 2
      %v3893 = vrot.slane %v3797, 2
      %v3894 = vsel %vm2779, %v3892, %v3893
      %v3895 = vrot.slane %v3798, 2
      %v3896 = vsel %vm2779, %v3893, %v3895
      %v3897 = vrot.slane %v3799, 2
      %v3898 = vrot.slane %v3800, 2
      %v3899 = vsel %vm2779, %v3897, %v3898
      %v3900 = vrot.slane %v3801, 2
      %v3901 = vsel %vm2779, %v3898, %v3900
      %v3902 = vrot.slane %v3802, 2
      %v3903 = vrot.slane %v3803, 2
      %v3904 = vsel %vm2779, %v3902, %v3903
      %v3905 = vrot.slane %v3804, 2
      %v3906 = vsel %vm2779, %v3903, %v3905
      %v3907 = vrot.slane %v3805, 2
      %v3908 = vrot.slane %v3806, 2
      %v3909 = vsel %vm2779, %v3907, %v3908
      %v3910 = vrot.slane %v3807, 2
      %v3911 = vsel %vm2779, %v3908, %v3910
      %v3912 = vrot.slane %v3808, 2
      %v3913 = vrot.slane %v3809, 2
      %v3914 = vsel %vm2779, %v3912, %v3913
      %v3915 = vrot.slane %v3810, 2
      %v3916 = vsel %vm2779, %v3913, %v3915
      %v3917 = vrot.slane %v3811, 2
      %v3918 = vrot.slane %v3812, 2
      %v3919 = vsel %vm2779, %v3917, %v3918
      %v3920 = vrot.slane %v3813, 2
      %v3921 = vsel %vm2779, %v3918, %v3920
      %v3922 = vrot.slane %v3814, 2
      %v3923 = vrot.slane %v3815, 2
      %v3924 = vsel %vm2779, %v3922, %v3923
      %v3925 = vrot.slane %v3816, 2
      %v3926 = vsel %vm2779, %v3923, %v3925
      %v3927 = vrot.slane %v3817, 2
      %v3928 = vrot.slane %v3818, 2
      %v3929 = vsel %vm2779, %v3927, %v3928
      %v3930 = vrot.slane %v3819, 2
      %v3931 = vsel %vm2779, %v3928, %v3930
      %v3932 = vrot.slane %v3820, 2
      %v3933 = vrot.slane %v3821, 2
      %v3934 = vsel %vm2779, %v3932, %v3933
      %v3935 = vrot.slane %v3822, 2
      %v3936 = vsel %vm2779, %v3933, %v3935
      %v3937 = vrot.slane %v3823, 2
      %v3938 = vrot.slane %v3824, 2
      %v3939 = vsel %vm2779, %v3937, %v3938
      %v3940 = vrot.slane %v3825, 2
      %v3941 = vsel %vm2779, %v3938, %v3940
      %v3942 = vrot.slane %v3826, 2
      %v3943 = vrot.slane %v3827, 2
      %v3944 = vsel %vm2779, %v3942, %v3943
      %v3945 = vrot.slane %v3828, 2
      %v3946 = vsel %vm2779, %v3943, %v3945
      %v3947 = vrot.slane %v3829, 2
      %v3948 = vrot.slane %v3830, 2
      %v3949 = vsel %vm2779, %v3947, %v3948
      %v3950 = vrot.slane %v3831, 2
      %v3951 = vsel %vm2779, %v3948, %v3950
      %v3952 = vrot.slane %v3832, 2
      %v3953 = vrot.slane %v3833, 2
      %v3954 = vsel %vm2779, %v3952, %v3953
      %v3955 = vrot.slane %v3834, 2
      %v3956 = vsel %vm2779, %v3953, %v3955
      %v3957 = vrot.slane %v3835, 2
      %v3958 = vrot.slane %v3836, 2
      %v3959 = vsel %vm2779, %v3957, %v3958
      %v3960 = vrot.slane %v3837, 2
      %v3961 = vsel %vm2779, %v3958, %v3960
      %v3962 = vrot.slane %v3838, 2
      %v3963 = vrot.slane %v3839, 2
      %v3964 = vsel %vm2779, %v3962, %v3963
      %v3965 = vrot.slane %v3840, 2
      %v3966 = vsel %vm2779, %v3963, %v3965
      %v3967 = vrot.slane %v3841, 2
      %v3968 = vrot.slane %v3842, 2
      %v3969 = vsel %vm2779, %v3967, %v3968
      %v3970 = vrot.slane %v3843, 2
      %v3971 = vsel %vm2779, %v3968, %v3970
      %v4004 = vadd.f32 %v3760, %v3894
      %v4005 = vadd.f32 %v3761, %v3896
      %v4006 = vadd.f32 %v3762, %v3899
      %v4007 = vadd.f32 %v3763, %v3901
      %v4008 = vadd.f32 %v3764, %v3904
      %v4009 = vadd.f32 %v3765, %v3906
      %v4010 = vadd.f32 %v3766, %v3909
      %v4011 = vadd.f32 %v3767, %v3911
      %v4012 = vadd.f32 %v3768, %v3914
      %v4013 = vadd.f32 %v3769, %v3916
      %v4014 = vadd.f32 %v3770, %v3919
      %v4015 = vadd.f32 %v3771, %v3921
      %v4016 = vadd.f32 %v3772, %v3924
      %v4017 = vadd.f32 %v3773, %v3926
      %v4018 = vadd.f32 %v3774, %v3929
      %v4019 = vadd.f32 %v3775, %v3931
      %v4020 = vadd.f32 %v3776, %v3934
      %v4021 = vadd.f32 %v3777, %v3936
      %v4022 = vadd.f32 %v3778, %v3939
      %v4023 = vadd.f32 %v3779, %v3941
      %v4024 = vadd.f32 %v3780, %v3944
      %v4025 = vadd.f32 %v3781, %v3946
      %v4026 = vadd.f32 %v3782, %v3949
      %v4027 = vadd.f32 %v3783, %v3951
      %v4028 = vadd.f32 %v3784, %v3954
      %v4029 = vadd.f32 %v3785, %v3956
      %v4030 = vadd.f32 %v3786, %v3959
      %v4031 = vadd.f32 %v3787, %v3961
      %v4032 = vadd.f32 %v3788, %v3964
      %v4033 = vadd.f32 %v3789, %v3966
      %v4034 = vadd.f32 %v3790, %v3969
      %v4035 = vadd.f32 %v3791, %v3971
      %v4036 = vmax.f32 %v4004, 0.0
      %v4037 = vmax.f32 %v4005, 0.0
      %v4038 = vmax.f32 %v4006, 0.0
      %v4039 = vmax.f32 %v4007, 0.0
      %v4040 = vmax.f32 %v4008, 0.0
      %v4041 = vmax.f32 %v4009, 0.0
      %v4042 = vmax.f32 %v4010, 0.0
      %v4043 = vmax.f32 %v4011, 0.0
      %v4044 = vmax.f32 %v4012, 0.0
      %v4045 = vmax.f32 %v4013, 0.0
      %v4046 = vmax.f32 %v4014, 0.0
      %v4047 = vmax.f32 %v4015, 0.0
      %v4048 = vmax.f32 %v4016, 0.0
      %v4049 = vmax.f32 %v4017, 0.0
      %v4050 = vmax.f32 %v4018, 0.0
      %v4051 = vmax.f32 %v4019, 0.0
      %v4052 = vmax.f32 %v4020, 0.0
      %v4053 = vmax.f32 %v4021, 0.0
      %v4054 = vmax.f32 %v4022, 0.0
      %v4055 = vmax.f32 %v4023, 0.0
      %v4056 = vmax.f32 %v4024, 0.0
      %v4057 = vmax.f32 %v4025, 0.0
      %v4058 = vmax.f32 %v4026, 0.0
      %v4059 = vmax.f32 %v4027, 0.0
      %v4060 = vmax.f32 %v4028, 0.0
      %v4061 = vmax.f32 %v4029, 0.0
      %v4062 = vmax.f32 %v4030, 0.0
      %v4063 = vmax.f32 %v4031, 0.0
      %v4064 = vmax.f32 %v4032, 0.0
      %v4065 = vmax.f32 %v4033, 0.0
      %v4066 = vmax.f32 %v4034, 0.0
      %v4067 = vmax.f32 %v4035, 0.0
      %4068 = vst.msk [vmem:[%s306] sm:$0xff] %vm2227, %v4036
      %4069 = vst.msk [vmem:[%s306 + $0x8] sm:$0xff] %vm2227, %v4037
      %4070 = vst.msk [vmem:[%s306 + $0x10] sm:$0xff] %vm2227, %v4038
      %4071 = vst.msk [vmem:[%s306 + $0x18] sm:$0xff] %vm2227, %v4039
      %4072 = vst.msk [vmem:[%s306 + $0x20] sm:$0xff] %vm2227, %v4040
      %4073 = vst.msk [vmem:[%s306 + $0x28] sm:$0xff] %vm2227, %v4041
      %4074 = vst.msk [vmem:[%s306 + $0x30] sm:$0xff] %vm2227, %v4042
      %4075 = vst.msk [vmem:[%s306 + $0x38] sm:$0xff] %vm2227, %v4043
      %4076 = vst.msk [vmem:[%s306 + $0x40] sm:$0xff] %vm2227, %v4044
      %4077 = vst.msk [vmem:[%s306 + $0x48] sm:$0xff] %vm2227, %v4045
      %4078 = vst.msk [vmem:[%s306 + $0x50] sm:$0xff] %vm2227, %v4046
      %4079 = vst.msk [vmem:[%s306 + $0x58] sm:$0xff] %vm2227, %v4047
      %4080 = vst.msk [vmem:[%s306 + $0x60] sm:$0xff] %vm2227, %v4048
      %4081 = vst.msk [vmem:[%s306 + $0x68] sm:$0xff] %vm2227, %v4049
      %4082 = vst.msk [vmem:[%s306 + $0x70] sm:$0xff] %vm2227, %v4050
      %4083 = vst.msk [vmem:[%s306 + $0x78] sm:$0xff] %vm2227, %v4051
      %4084 = vst.msk [vmem:[%s306 + $0x80] sm:$0xff] %vm2227, %v4052
      %4085 = vst.msk [vmem:[%s306 + $0x88] sm:$0xff] %vm2227, %v4053
      %4086 = vst.msk [vmem:[%s306 + $0x90] sm:$0xff] %vm2227, %v4054
      %4087 = vst.msk [vmem:[%s306 + $0x98] sm:$0xff] %vm2227, %v4055
      %4088 = vst.msk [vmem:[%s306 + $0xa0] sm:$0xff] %vm2227, %v4056
      %4089 = vst.msk [vmem:[%s306 + $0xa8] sm:$0xff] %vm2227, %v4057
      %4090 = vst.msk [vmem:[%s306 + $0xb0] sm:$0xff] %vm2227, %v4058
      %4091 = vst.msk [vmem:[%s306 + $0xb8] sm:$0xff] %vm2227, %v4059
      %4092 = vst.msk [vmem:[%s306 + $0xc0] sm:$0xff] %vm2227, %v4060
      %4093 = vst.msk [vmem:[%s306 + $0xc8] sm:$0xff] %vm2227, %v4061
      %4094 = vst.msk [vmem:[%s306 + $0xd0] sm:$0xff] %vm2227, %v4062
      %4095 = vst.msk [vmem:[%s306 + $0xd8] sm:$0xff] %vm2227, %v4063
      %4096 = vst.msk [vmem:[%s306 + $0xe0] sm:$0xff] %vm2227, %v4064
      %4097 = vst.msk [vmem:[%s306 + $0xe8] sm:$0xff] %vm2227, %v4065
      %4098 = vst.msk [vmem:[%s306 + $0xf0] sm:$0xff] %vm2227, %v4066
      %4099 = vst.msk [vmem:[%s306 + $0xf8] sm:$0xff] %vm2227, %v4067
      %p4100 = scmp.lt.s32.totalorder %s20, 1
      %s4101 = scalar_select %p4100, %s20, 1
      %p4102 = scmp.lt.s32.totalorder %s21, 0
      %s4103 = scalar_select %p4102, %s21, 0
      %s4104 = smul.addr %s4101, 32
      %s4105 = sadd.s32 %s4103, %s4104
      %s4106 = smul.addr %s4105, 8
      %s4107 = scalar_lea.vmem %s5, %s4106
      // Predicated region
      $region41: #{light_conv.1} parent=39 // pred_check
        %p4108 = pneg %p178
      $region42: #{light_conv.1} parent=39 // pred_check_branch
        %4110 = sbr.rel (%p4108) target = $region44
      $region43: #{light_conv.1} parent=39 // pred_region
        _
      $region44: #{light_conv.1} parent=39 // pred_fallthru
        _
    $region40: #{light_conv.1} parent=5 // pred_fallthru
      _
    %p4111 = scmp.le.s32.totalorder 2, %s11
    // Predicated region
    $region45: #{light_conv.1} parent=5 // pred_check
      %p4112 = pneg %p4111
    $region46: #{light_conv.1} parent=5 // pred_check_branch
      %4114 = sbr.rel (%p4112) target = $region48
    $region47: #{light_conv.1} parent=5 // pred_region
      %s4115 = ssub.s32 %s11, 2
      // Predicated region
      $region49: #{light_conv.1} parent=47 // pred_check
        %p4116 = pneg %p184
      $region50: #{light_conv.1} parent=47 // pred_check_branch
        %4118 = sbr.rel (%p4116) target = $region52
      $region51: #{light_conv.1} parent=47 // pred_region
        %p4119 = scmp.lt.s32.totalorder %s22, 1
        %s4120 = scalar_select %p4119, %s22, 1
        %p4121 = scmp.lt.s32.totalorder %s23, 0
        %s4122 = scalar_select %p4121, %s23, 0
        %s4123 = smul.addr %s4120, 32
        %s4124 = sadd.s32 %s4122, %s4123
        %s4125 = smul.addr %s4124, 8
        %s4126 = scalar_lea.vmem %s5, %s4125
      $region52: #{light_conv.1} parent=47 // pred_fallthru
        _
    $region48: #{light_conv.1} parent=5 // pred_fallthru
      _
  $region6: #{light_conv.1} parent=0 // loop_footer
    %s15 = sadd.s32 1, %s11
  $region7: #{light_conv.1} parent=0 // loop_footer_branch
    %10 = sbr.rel target = $region3
  $region8: #{light_conv.1} parent=0 // loop_exit
    _

</llo_original>
